<compile_context>
chip_gen: v6e
topology: v6e:2x2x1
jax: 0.10.0
libtpu: 0.0.40
codegen_flags: <defaults>
</compile_context>

<pallas_src>
import functools
import math

import jax
import jax.numpy as jnp
from jax import lax
from jax.experimental import pallas as pl
from jax.experimental.pallas import tpu as pltpu


_SQRT_2_OVER_PI = math.sqrt(2.0 / math.pi)


def _layernorm(x, gamma, beta, eps=1e-5):
    # x: [R, E] f32; gamma/beta: [1, E] f32 ; unbiased=False variance
    mean = jnp.mean(x, axis=-1, keepdims=True)
    var = jnp.mean((x - mean) ** 2, axis=-1, keepdims=True)
    return (x - mean) * lax.rsqrt(var + eps) * gamma + beta


def _gelu(x):
    # Exact formula from the PyTorch module: coefficient 0.048 (NOT the usual
    # 0.044715) — intentional, matches the spec.
    x3 = x * x * x
    return 0.5 * x * (1.0 + jnp.tanh(_SQRT_2_OVER_PI * (x + 0.048 * x3)))


def _vmem_limit_bytes():
    # Generation-aware scoped-VMEM limit: stay <= half of physical VMEM
    # (v7x: 64 MiB -> 32 MiB; v5e/v6e: 128 MiB -> 64 MiB for bigger tiles).
    try:
        cap = int(pltpu.get_tpu_info().vmem_capacity_bytes)
    except Exception:
        cap = 0
    if cap <= 0:
        return 32 * 1024 * 1024
    return min(cap // 2, 64 * 1024 * 1024)


def _transformer_block_kernel(
    x_ref,                                   # [R, E] f32, R = batch_block * T
    wqkv_ref,                                # [E, 3E] bf16 (q columns pre-scaled)
    wo_ref, bo_ref,                          # [E, E] bf16, [1, E] f32
    w1_ref, b1_ref, w2_ref, b2_ref,          # [E,4E] bf16, [1,4E] f32, [4E,E] bf16, [1,E] f32
    g1_ref, s1_ref, g2_ref, s2_ref,          # [1, E] f32 LayerNorm params
    out_ref,                                 # [R, E]
    ctx_ref,                                 # VMEM scratch [R, E] bf16
    *, num_heads, seq_len,
):
    x = x_ref[...]                           # [R, E] f32
    R, E = x.shape
    head_dim = E // num_heads
    n_batch = R // seq_len

    # ---- block 1: LN -> causal MHA -> residual ---------------------------
    h = _layernorm(x, g1_ref[...], s1_ref[...])
    hb = h.astype(jnp.bfloat16)              # bf16 MXU operand

    # One fused QKV projection: single MXU issue, single weight DMA stream.
    qkv = jnp.dot(hb, wqkv_ref[...], preferred_element_type=jnp.float32)
    qkv = qkv.astype(jnp.bfloat16)           # [R, 3E]
    q = qkv[:, 0 * E:1 * E]                  # 1/sqrt(head_dim) folded into wq
    k = qkv[:, 1 * E:2 * E]
    v = qkv[:, 2 * E:3 * E]

    # Causal mask; diagonal is always unmasked so -inf is safe here.  (Use a
    # finite large-negative instead if this is ever flash-tiled / padded.)
    row = lax.broadcasted_iota(jnp.int32, (seq_len, seq_len), 0)
    col = lax.broadcasted_iota(jnp.int32, (seq_len, seq_len), 1)
    causal = col > row

    # Per-(batch, head) attention on static tile-aligned row/lane slices;
    # context goes straight into the VMEM scratch slab (no stack/concat
    # relayouts) and feeds a single output-projection matmul.
    for b in range(n_batch):
        r0 = b * seq_len
        for hd in range(num_heads):
            c0 = hd * head_dim
            q_bh = q[r0:r0 + seq_len, c0:c0 + head_dim]   # [T, Dh] bf16
            k_bh = k[r0:r0 + seq_len, c0:c0 + head_dim]
            v_bh = v[r0:r0 + seq_len, c0:c0 + head_dim]

            # NT-form score matmul (contract last dims) -> no K transpose.
            s = lax.dot_general(q_bh, k_bh, (((1,), (1,)), ((), ())),
                                preferred_element_type=jnp.float32)   # [T, T]
            s = jnp.where(causal, -jnp.inf, s)

            m = jnp.max(s, axis=-1, keepdims=True)
            p = jnp.exp(s - m)                                        # f32
            denom = jnp.sum(p, axis=-1, keepdims=True)
            # approx reciprocal on the EUP slot; use approx=False for strict parity.
            p = p * pl.reciprocal(denom, approx=True)

            ctx_bh = jnp.dot(p.astype(jnp.bfloat16), v_bh,
                             preferred_element_type=jnp.float32)      # [T, Dh]
            ctx_ref[r0:r0 + seq_len, c0:c0 + head_dim] = ctx_bh.astype(jnp.bfloat16)

    attn_out = jnp.dot(ctx_ref[...], wo_ref[...],
                       preferred_element_type=jnp.float32) + bo_ref[...]

    # TODO(synk): dropout (drop_rate) treated as identity (inference); no RNG dropout.
    x1 = x + attn_out                        # residual

    # ---- block 2: LN -> FeedForward (GELU) -> residual --------------------
    h2 = _layernorm(x1, g2_ref[...], s2_ref[...])
    ff = jnp.dot(h2.astype(jnp.bfloat16), w1_ref[...],
                 preferred_element_type=jnp.float32) + b1_ref[...]
    ff = _gelu(ff)                           # f32 elementwise
    ff = jnp.dot(ff.astype(jnp.bfloat16), w2_ref[...],
                 preferred_element_type=jnp.float32) + b2_ref[...]

    out_ref[...] = (x1 + ff).astype(out_ref.dtype)


def prepare_params(params, num_heads):
    """One-time host-side parameter prep (call ONCE at init, not per forward):
    fuse wq/wk/wv -> [E, 3E], fold 1/sqrt(head_dim) into the q columns, and
    pre-cast all matmul weights to bf16.  Biases / LN params stay f32."""
    (wq, wk, wv, wo, bo, w1, b1, w2, b2, g1, s1, g2, s2) = params
    e = wq.shape[0]
    head_dim = e // num_heads
    scale = 1.0 / math.sqrt(head_dim)
    wqkv = jnp.concatenate([wq * scale, wk, wv], axis=1).astype(jnp.bfloat16)
    bf16 = lambda w: w.astype(jnp.bfloat16)
    return (wqkv, bf16(wo), bo, bf16(w1), b1, bf16(w2), b2, g1, s1, g2, s2)


def transformer_block(x, kparams, num_heads, *, batch_block=None):
    B, T, E = x.shape
    assert E % num_heads == 0
    if batch_block is None:
        # All batches in one grid step: M = B*T rows for every dense matmul.
        # On v7x, set batch_block = B // 2 for one "parallel" step per core.
        batch_block = B
    assert B % batch_block == 0
    rows = batch_block * T
    num_blocks = B // batch_block

    x2 = x.reshape(B * T, E)                 # layout-preserving (lane dim unchanged)

    def bcast_spec(arr):
        nd = arr.ndim
        # Grid-constant weight blocks.  NOTE(v7x / production E): add
        # pipeline_mode=pl.Buffered(1) to single-buffer them and flash/FFN-tile
        # before scaling T/E (64 MiB VMEM on v7x vs 128 MiB on v5e/v6e).
        return pl.BlockSpec(arr.shape, lambda i, _n=nd: (0,) * _n)

    in_specs = ([pl.BlockSpec((rows, E), lambda i: (i, 0))]
                + [bcast_spec(p) for p in kparams])
    out_spec = pl.BlockSpec((rows, E), lambda i: (i, 0))

    kernel = functools.partial(_transformer_block_kernel,
                               num_heads=num_heads, seq_len=T)

    out = pl.pallas_call(
        kernel,
        out_shape=jax.ShapeDtypeStruct((B * T, E), x.dtype),
        grid_spec=pltpu.PrefetchScalarGridSpec(
            num_scalar_prefetch=0,
            grid=(num_blocks,),
            in_specs=in_specs,
            out_specs=out_spec,
            scratch_shapes=[pltpu.VMEM((rows, E), jnp.bfloat16)],
        ),
        compiler_params=pltpu.CompilerParams(
            dimension_semantics=("parallel",),
            vmem_limit_bytes=_vmem_limit_bytes(),
        ),
    )(x2, *kparams)
    return out.reshape(B, T, E)


def _reference(x, params, num_heads):
    """Pure-JAX f32 reference mirroring the PyTorch forward (dropout = identity)."""
    (wq, wk, wv, wo, bo, w1, b1, w2, b2, g1, s1, g2, s2) = params
    B, T, E = x.shape
    hd = E // num_heads

    def ln(z, g, s):
        m = jnp.mean(z, axis=-1, keepdims=True)
        v = jnp.mean((z - m) ** 2, axis=-1, keepdims=True)
        return (z - m) / jnp.sqrt(v + 1e-5) * g + s

    h = ln(x, g1, s1)
    q = (h @ wq).reshape(B, T, num_heads, hd).transpose(0, 2, 1, 3)
    k = (h @ wk).reshape(B, T, num_heads, hd).transpose(0, 2, 1, 3)
    v = (h @ wv).reshape(B, T, num_heads, hd).transpose(0, 2, 1, 3)
    scores = jnp.einsum("bhqd,bhkd->bhqk", q, k) / jnp.sqrt(jnp.float32(hd))
    mask = jnp.triu(jnp.ones((T, T), bool), k=1)
    scores = jnp.where(mask, -jnp.inf, scores)
    w = jax.nn.softmax(scores, axis=-1)
    ctx = jnp.einsum("bhqk,bhkd->bhqd", w, v).transpose(0, 2, 1, 3).reshape(B, T, E)
    x1 = x + (ctx @ wo + bo)

    h2 = ln(x1, g2, s2)
    c = jnp.sqrt(2.0 / jnp.pi)
    ff = h2 @ w1 + b1
    ff = 0.5 * ff * (1.0 + jnp.tanh(c * (ff + 0.048 * ff ** 3)))
    ff = ff @ w2 + b2
    return x1 + ff


if __name__ == "__main__":
    # context_length=16, emb_dim=256, n_heads=2 -> head_dim=128 (lane-native)
    B, T, E, H = 2, 16, 256, 2

    key = jax.random.PRNGKey(0)
    ks = jax.random.split(key, 8)

    x = jax.random.normal(ks[0], (B, T, E), jnp.float32)

    std = 0.02
    wq = std * jax.random.normal(ks[1], (E, E), jnp.float32)
    wk = std * jax.random.normal(ks[2], (E, E), jnp.float32)
    wv = std * jax.random.normal(ks[3], (E, E), jnp.float32)
    wo = std * jax.random.normal(ks[4], (E, E), jnp.float32)
    bo = jnp.zeros((1, E), jnp.float32)
    w1 = std * jax.random.normal(ks[5], (E, 4 * E), jnp.float32)
    b1 = jnp.zeros((1, 4 * E), jnp.float32)
    w2 = std * jax.random.normal(ks[6], (4 * E, E), jnp.float32)
    b2 = jnp.zeros((1, E), jnp.float32)
    g1 = jnp.ones((1, E), jnp.float32)
    s1 = jnp.zeros((1, E), jnp.float32)
    g2 = jnp.ones((1, E), jnp.float32)
    s2 = jnp.zeros((1, E), jnp.float32)

    params = (wq, wk, wv, wo, bo, w1, b1, w2, b2, g1, s1, g2, s2)

    # One-time parameter prep (bf16 cast / QKV fusion / scale folding).
    kparams = jax.tree_util.tree_map(jax.block_until_ready,
                                     prepare_params(params, num_heads=H))

    out = jax.block_until_ready(transformer_block(x, kparams, num_heads=H))
    ref = _reference(x, params, num_heads=H)

    # bf16 MXU operands (f32 accumulation) -> compare at bf16-level tolerance.
    assert jnp.allclose(out, ref, atol=2e-2, rtol=2e-2), "mismatch vs. reference"

    print("KERNEL_OK")
</pallas_src>

<mosaic_0001>
module attributes {stable_mosaic.version = 11 : i64} {
  func.func @_transformer_block_kernel(%arg0: i32, %arg1: memref<32x256xf32, #tpu.memory_space<vmem>>, %arg2: memref<256x768xbf16, #tpu.memory_space<vmem>>, %arg3: memref<256x256xbf16, #tpu.memory_space<vmem>>, %arg4: memref<1x256xf32, #tpu.memory_space<vmem>>, %arg5: memref<256x1024xbf16, #tpu.memory_space<vmem>>, %arg6: memref<1x1024xf32, #tpu.memory_space<vmem>>, %arg7: memref<1024x256xbf16, #tpu.memory_space<vmem>>, %arg8: memref<1x256xf32, #tpu.memory_space<vmem>>, %arg9: memref<1x256xf32, #tpu.memory_space<vmem>>, %arg10: memref<1x256xf32, #tpu.memory_space<vmem>>, %arg11: memref<1x256xf32, #tpu.memory_space<vmem>>, %arg12: memref<1x256xf32, #tpu.memory_space<vmem>>, %arg13: memref<32x256xf32, #tpu.memory_space<vmem>>, %arg14: memref<32x256xbf16, #tpu.memory_space<vmem>>) attributes {dimension_semantics = [#tpu.dimension_semantics<parallel>], iteration_bounds = array<i64: 1>, scalar_prefetch = 0 : i64, scratch_operands = 1 : i64, tpu.core_type = #tpu.core_type<tc>, window_params = [{transform_indices = @transform_0, window_bounds = array<i64: 32, 256>}, {pipeline_mode = #tpu.pipeline_mode<synchronous>, transform_indices = @transform_1, window_bounds = array<i64: 256, 768>}, {pipeline_mode = #tpu.pipeline_mode<synchronous>, transform_indices = @transform_2, window_bounds = array<i64: 256, 256>}, {pipeline_mode = #tpu.pipeline_mode<synchronous>, transform_indices = @transform_3, window_bounds = array<i64: 1, 256>}, {pipeline_mode = #tpu.pipeline_mode<synchronous>, transform_indices = @transform_4, window_bounds = array<i64: 256, 1024>}, {pipeline_mode = #tpu.pipeline_mode<synchronous>, transform_indices = @transform_5, window_bounds = array<i64: 1, 1024>}, {pipeline_mode = #tpu.pipeline_mode<synchronous>, transform_indices = @transform_6, window_bounds = array<i64: 1024, 256>}, {pipeline_mode = #tpu.pipeline_mode<synchronous>, transform_indices = @transform_7, window_bounds = array<i64: 1, 256>}, {pipeline_mode = #tpu.pipeline_mode<synchronous>, transform_indices = @transform_8, window_bounds = array<i64: 1, 256>}, {pipeline_mode = #tpu.pipeline_mode<synchronous>, transform_indices = @transform_9, window_bounds = array<i64: 1, 256>}, {pipeline_mode = #tpu.pipeline_mode<synchronous>, transform_indices = @transform_10, window_bounds = array<i64: 1, 256>}, {pipeline_mode = #tpu.pipeline_mode<synchronous>, transform_indices = @transform_11, window_bounds = array<i64: 1, 256>}, {transform_indices = @transform_12, window_bounds = array<i64: 32, 256>}]} {
    %c0 = arith.constant 0 : index
    %c0_0 = arith.constant 0 : index
    %0 = vector.load %arg1[%c0, %c0_0] : memref<32x256xf32, #tpu.memory_space<vmem>>, vector<32x256xf32>
    %c0_1 = arith.constant 0 : index
    %c0_2 = arith.constant 0 : index
    %1 = vector.load %arg9[%c0_1, %c0_2] : memref<1x256xf32, #tpu.memory_space<vmem>>, vector<1x256xf32>
    %c0_3 = arith.constant 0 : index
    %c0_4 = arith.constant 0 : index
    %2 = vector.load %arg10[%c0_3, %c0_4] : memref<1x256xf32, #tpu.memory_space<vmem>>, vector<1x256xf32>
    %cst = arith.constant dense<0.000000e+00> : vector<32xf32>
    %3 = vector.multi_reduction <add>, %0, %cst [1] : vector<32x256xf32> to vector<32xf32>
    %4 = vector.shape_cast %3 : vector<32xf32> to vector<32x1xf32>
    %cst_5 = arith.constant 2.560000e+02 : f32
    %5 = vector.broadcast %cst_5 : f32 to vector<32x1xf32>
    %6 = arith.divf %4, %5 : vector<32x1xf32>
    %7 = vector.broadcast %6 : vector<32x1xf32> to vector<32x256xf32>
    %8 = arith.subf %0, %7 : vector<32x256xf32>
    %9 = arith.mulf %8, %8 : vector<32x256xf32>
    %cst_6 = arith.constant dense<0.000000e+00> : vector<32xf32>
    %10 = vector.multi_reduction <add>, %9, %cst_6 [1] : vector<32x256xf32> to vector<32xf32>
    %11 = vector.shape_cast %10 : vector<32xf32> to vector<32x1xf32>
    %cst_7 = arith.constant 2.560000e+02 : f32
    %12 = vector.broadcast %cst_7 : f32 to vector<32x1xf32>
    %13 = arith.divf %11, %12 : vector<32x1xf32>
    %14 = vector.broadcast %6 : vector<32x1xf32> to vector<32x256xf32>
    %15 = arith.subf %0, %14 : vector<32x256xf32>
    %cst_8 = arith.constant 9.99999974E-6 : f32
    %16 = vector.broadcast %cst_8 : f32 to vector<32x1xf32>
    %17 = arith.addf %13, %16 : vector<32x1xf32>
    %18 = math.rsqrt %17 : vector<32x1xf32>
    %19 = vector.broadcast %18 : vector<32x1xf32> to vector<32x256xf32>
    %20 = arith.mulf %15, %19 : vector<32x256xf32>
    %21 = vector.broadcast %1 : vector<1x256xf32> to vector<32x256xf32>
    %22 = arith.mulf %20, %21 : vector<32x256xf32>
    %23 = vector.broadcast %2 : vector<1x256xf32> to vector<32x256xf32>
    %24 = arith.addf %22, %23 : vector<32x256xf32>
    %25 = arith.truncf %24 : vector<32x256xf32> to vector<32x256xbf16>
    %c0_9 = arith.constant 0 : index
    %c0_10 = arith.constant 0 : index
    %26 = vector.load %arg2[%c0_9, %c0_10] : memref<256x768xbf16, #tpu.memory_space<vmem>>, vector<256x768xbf16>
    %cst_11 = arith.constant dense<0.000000e+00> : vector<32x768xf32>
    %27 = tpu.matmul %25, %26, %cst_11 {dimension_numbers = #tpu.dot_dimension_numbers<[1], [0], [0], [1], [0, 0, 1, 1], [], []>} : vector<32x256xbf16>, vector<256x768xbf16>, vector<32x768xf32> -> vector<32x768xf32>
    %28 = arith.truncf %27 : vector<32x768xf32> to vector<32x768xbf16>
    %29 = vector.extract_strided_slice %28 {offsets = [0, 0], sizes = [32, 256], strides = [1, 1]} : vector<32x768xbf16> to vector<32x256xbf16>
    %30 = vector.extract_strided_slice %28 {offsets = [0, 256], sizes = [32, 256], strides = [1, 1]} : vector<32x768xbf16> to vector<32x256xbf16>
    %31 = vector.extract_strided_slice %28 {offsets = [0, 512], sizes = [32, 256], strides = [1, 1]} : vector<32x768xbf16> to vector<32x256xbf16>
    %32 = tpu.iota {dimensions = array<i32: 0>} : vector<16x16xi32>
    %33 = tpu.iota {dimensions = array<i32: 1>} : vector<16x16xi32>
    %34 = arith.cmpi sgt, %33, %32 : vector<16x16xi32>
    %35 = vector.extract_strided_slice %29 {offsets = [0, 0], sizes = [16, 128], strides = [1, 1]} : vector<32x256xbf16> to vector<16x128xbf16>
    %36 = vector.extract_strided_slice %30 {offsets = [0, 0], sizes = [16, 128], strides = [1, 1]} : vector<32x256xbf16> to vector<16x128xbf16>
    %37 = vector.extract_strided_slice %31 {offsets = [0, 0], sizes = [16, 128], strides = [1, 1]} : vector<32x256xbf16> to vector<16x128xbf16>
    %cst_12 = arith.constant dense<0.000000e+00> : vector<16x16xf32>
    %38 = tpu.matmul %35, %36, %cst_12 {dimension_numbers = #tpu.dot_dimension_numbers<[1], [1], [0], [0], [0, 0, 1, 0], [], []>} : vector<16x128xbf16>, vector<16x128xbf16>, vector<16x16xf32> -> vector<16x16xf32>
    %cst_13 = arith.constant 0xFF800000 : f32
    %39 = vector.broadcast %cst_13 : f32 to vector<16x16xf32>
    %40 = arith.select %34, %39, %38 : vector<16x16xi1>, vector<16x16xf32>
    %cst_14 = arith.constant dense<0xFF800000> : vector<16xf32>
    %41 = vector.multi_reduction <maximumf>, %40, %cst_14 [1] : vector<16x16xf32> to vector<16xf32>
    %42 = vector.shape_cast %41 : vector<16xf32> to vector<16x1xf32>
    %43 = vector.broadcast %42 : vector<16x1xf32> to vector<16x16xf32>
    %44 = arith.subf %40, %43 : vector<16x16xf32>
    %45 = math.exp %44 : vector<16x16xf32>
    %cst_15 = arith.constant dense<0.000000e+00> : vector<16xf32>
    %46 = vector.multi_reduction <add>, %45, %cst_15 [1] : vector<16x16xf32> to vector<16xf32>
    %47 = vector.shape_cast %46 : vector<16xf32> to vector<16x1xf32>
    %48 = tpu.reciprocal %47 {approx = true} : vector<16x1xf32> -> vector<16x1xf32>
    %49 = vector.broadcast %48 : vector<16x1xf32> to vector<16x16xf32>
    %50 = arith.mulf %45, %49 : vector<16x16xf32>
    %51 = arith.truncf %50 : vector<16x16xf32> to vector<16x16xbf16>
    %cst_16 = arith.constant dense<0.000000e+00> : vector<16x128xf32>
    %52 = tpu.matmul %51, %37, %cst_16 {dimension_numbers = #tpu.dot_dimension_numbers<[1], [0], [0], [1], [0, 0, 1, 1], [], []>} : vector<16x16xbf16>, vector<16x128xbf16>, vector<16x128xf32> -> vector<16x128xf32>
    %53 = arith.truncf %52 : vector<16x128xf32> to vector<16x128xbf16>
    %c0_17 = arith.constant 0 : index
    %c0_18 = arith.constant 0 : index
    %54 = vector.load %arg14[%c0_17, %c0_18] : memref<32x256xbf16, #tpu.memory_space<vmem>>, vector<16x128xbf16>
    tpu.vector_store %arg14[%c0_17, %c0_18], %53 {strides = array<i32>} : memref<32x256xbf16, #tpu.memory_space<vmem>>, vector<16x128xbf16>,
    %55 = vector.extract_strided_slice %29 {offsets = [0, 128], sizes = [16, 128], strides = [1, 1]} : vector<32x256xbf16> to vector<16x128xbf16>
    %56 = vector.extract_strided_slice %30 {offsets = [0, 128], sizes = [16, 128], strides = [1, 1]} : vector<32x256xbf16> to vector<16x128xbf16>
    %57 = vector.extract_strided_slice %31 {offsets = [0, 128], sizes = [16, 128], strides = [1, 1]} : vector<32x256xbf16> to vector<16x128xbf16>
    %cst_19 = arith.constant dense<0.000000e+00> : vector<16x16xf32>
    %58 = tpu.matmul %55, %56, %cst_19 {dimension_numbers = #tpu.dot_dimension_numbers<[1], [1], [0], [0], [0, 0, 1, 0], [], []>} : vector<16x128xbf16>, vector<16x128xbf16>, vector<16x16xf32> -> vector<16x16xf32>
    %cst_20 = arith.constant 0xFF800000 : f32
    %59 = vector.broadcast %cst_20 : f32 to vector<16x16xf32>
    %60 = arith.select %34, %59, %58 : vector<16x16xi1>, vector<16x16xf32>
    %cst_21 = arith.constant dense<0xFF800000> : vector<16xf32>
    %61 = vector.multi_reduction <maximumf>, %60, %cst_21 [1] : vector<16x16xf32> to vector<16xf32>
    %62 = vector.shape_cast %61 : vector<16xf32> to vector<16x1xf32>
    %63 = vector.broadcast %62 : vector<16x1xf32> to vector<16x16xf32>
    %64 = arith.subf %60, %63 : vector<16x16xf32>
    %65 = math.exp %64 : vector<16x16xf32>
    %cst_22 = arith.constant dense<0.000000e+00> : vector<16xf32>
    %66 = vector.multi_reduction <add>, %65, %cst_22 [1] : vector<16x16xf32> to vector<16xf32>
    %67 = vector.shape_cast %66 : vector<16xf32> to vector<16x1xf32>
    %68 = tpu.reciprocal %67 {approx = true} : vector<16x1xf32> -> vector<16x1xf32>
    %69 = vector.broadcast %68 : vector<16x1xf32> to vector<16x16xf32>
    %70 = arith.mulf %65, %69 : vector<16x16xf32>
    %71 = arith.truncf %70 : vector<16x16xf32> to vector<16x16xbf16>
    %cst_23 = arith.constant dense<0.000000e+00> : vector<16x128xf32>
    %72 = tpu.matmul %71, %57, %cst_23 {dimension_numbers = #tpu.dot_dimension_numbers<[1], [0], [0], [1], [0, 0, 1, 1], [], []>} : vector<16x16xbf16>, vector<16x128xbf16>, vector<16x128xf32> -> vector<16x128xf32>
    %73 = arith.truncf %72 : vector<16x128xf32> to vector<16x128xbf16>
    %c0_24 = arith.constant 0 : index
    %c128 = arith.constant 128 : index
    %74 = vector.load %arg14[%c0_24, %c128] : memref<32x256xbf16, #tpu.memory_space<vmem>>, vector<16x128xbf16>
    tpu.vector_store %arg14[%c0_24, %c128], %73 {strides = array<i32>} : memref<32x256xbf16, #tpu.memory_space<vmem>>, vector<16x128xbf16>,
    %75 = vector.extract_strided_slice %29 {offsets = [16, 0], sizes = [16, 128], strides = [1, 1]} : vector<32x256xbf16> to vector<16x128xbf16>
    %76 = vector.extract_strided_slice %30 {offsets = [16, 0], sizes = [16, 128], strides = [1, 1]} : vector<32x256xbf16> to vector<16x128xbf16>
    %77 = vector.extract_strided_slice %31 {offsets = [16, 0], sizes = [16, 128], strides = [1, 1]} : vector<32x256xbf16> to vector<16x128xbf16>
    %cst_25 = arith.constant dense<0.000000e+00> : vector<16x16xf32>
    %78 = tpu.matmul %75, %76, %cst_25 {dimension_numbers = #tpu.dot_dimension_numbers<[1], [1], [0], [0], [0, 0, 1, 0], [], []>} : vector<16x128xbf16>, vector<16x128xbf16>, vector<16x16xf32> -> vector<16x16xf32>
    %cst_26 = arith.constant 0xFF800000 : f32
    %79 = vector.broadcast %cst_26 : f32 to vector<16x16xf32>
    %80 = arith.select %34, %79, %78 : vector<16x16xi1>, vector<16x16xf32>
    %cst_27 = arith.constant dense<0xFF800000> : vector<16xf32>
    %81 = vector.multi_reduction <maximumf>, %80, %cst_27 [1] : vector<16x16xf32> to vector<16xf32>
    %82 = vector.shape_cast %81 : vector<16xf32> to vector<16x1xf32>
    %83 = vector.broadcast %82 : vector<16x1xf32> to vector<16x16xf32>
    %84 = arith.subf %80, %83 : vector<16x16xf32>
    %85 = math.exp %84 : vector<16x16xf32>
    %cst_28 = arith.constant dense<0.000000e+00> : vector<16xf32>
    %86 = vector.multi_reduction <add>, %85, %cst_28 [1] : vector<16x16xf32> to vector<16xf32>
    %87 = vector.shape_cast %86 : vector<16xf32> to vector<16x1xf32>
    %88 = tpu.reciprocal %87 {approx = true} : vector<16x1xf32> -> vector<16x1xf32>
    %89 = vector.broadcast %88 : vector<16x1xf32> to vector<16x16xf32>
    %90 = arith.mulf %85, %89 : vector<16x16xf32>
    %91 = arith.truncf %90 : vector<16x16xf32> to vector<16x16xbf16>
    %cst_29 = arith.constant dense<0.000000e+00> : vector<16x128xf32>
    %92 = tpu.matmul %91, %77, %cst_29 {dimension_numbers = #tpu.dot_dimension_numbers<[1], [0], [0], [1], [0, 0, 1, 1], [], []>} : vector<16x16xbf16>, vector<16x128xbf16>, vector<16x128xf32> -> vector<16x128xf32>
    %93 = arith.truncf %92 : vector<16x128xf32> to vector<16x128xbf16>
    %c16 = arith.constant 16 : index
    %c0_30 = arith.constant 0 : index
    %94 = vector.load %arg14[%c16, %c0_30] : memref<32x256xbf16, #tpu.memory_space<vmem>>, vector<16x128xbf16>
    tpu.vector_store %arg14[%c16, %c0_30], %93 {strides = array<i32>} : memref<32x256xbf16, #tpu.memory_space<vmem>>, vector<16x128xbf16>,
    %95 = vector.extract_strided_slice %29 {offsets = [16, 128], sizes = [16, 128], strides = [1, 1]} : vector<32x256xbf16> to vector<16x128xbf16>
    %96 = vector.extract_strided_slice %30 {offsets = [16, 128], sizes = [16, 128], strides = [1, 1]} : vector<32x256xbf16> to vector<16x128xbf16>
    %97 = vector.extract_strided_slice %31 {offsets = [16, 128], sizes = [16, 128], strides = [1, 1]} : vector<32x256xbf16> to vector<16x128xbf16>
    %cst_31 = arith.constant dense<0.000000e+00> : vector<16x16xf32>
    %98 = tpu.matmul %95, %96, %cst_31 {dimension_numbers = #tpu.dot_dimension_numbers<[1], [1], [0], [0], [0, 0, 1, 0], [], []>} : vector<16x128xbf16>, vector<16x128xbf16>, vector<16x16xf32> -> vector<16x16xf32>
    %cst_32 = arith.constant 0xFF800000 : f32
    %99 = vector.broadcast %cst_32 : f32 to vector<16x16xf32>
    %100 = arith.select %34, %99, %98 : vector<16x16xi1>, vector<16x16xf32>
    %cst_33 = arith.constant dense<0xFF800000> : vector<16xf32>
    %101 = vector.multi_reduction <maximumf>, %100, %cst_33 [1] : vector<16x16xf32> to vector<16xf32>
    %102 = vector.shape_cast %101 : vector<16xf32> to vector<16x1xf32>
    %103 = vector.broadcast %102 : vector<16x1xf32> to vector<16x16xf32>
    %104 = arith.subf %100, %103 : vector<16x16xf32>
    %105 = math.exp %104 : vector<16x16xf32>
    %cst_34 = arith.constant dense<0.000000e+00> : vector<16xf32>
    %106 = vector.multi_reduction <add>, %105, %cst_34 [1] : vector<16x16xf32> to vector<16xf32>
    %107 = vector.shape_cast %106 : vector<16xf32> to vector<16x1xf32>
    %108 = tpu.reciprocal %107 {approx = true} : vector<16x1xf32> -> vector<16x1xf32>
    %109 = vector.broadcast %108 : vector<16x1xf32> to vector<16x16xf32>
    %110 = arith.mulf %105, %109 : vector<16x16xf32>
    %111 = arith.truncf %110 : vector<16x16xf32> to vector<16x16xbf16>
    %cst_35 = arith.constant dense<0.000000e+00> : vector<16x128xf32>
    %112 = tpu.matmul %111, %97, %cst_35 {dimension_numbers = #tpu.dot_dimension_numbers<[1], [0], [0], [1], [0, 0, 1, 1], [], []>} : vector<16x16xbf16>, vector<16x128xbf16>, vector<16x128xf32> -> vector<16x128xf32>
    %113 = arith.truncf %112 : vector<16x128xf32> to vector<16x128xbf16>
    %c16_36 = arith.constant 16 : index
    %c128_37 = arith.constant 128 : index
    %114 = vector.load %arg14[%c16_36, %c128_37] : memref<32x256xbf16, #tpu.memory_space<vmem>>, vector<16x128xbf16>
    tpu.vector_store %arg14[%c16_36, %c128_37], %113 {strides = array<i32>} : memref<32x256xbf16, #tpu.memory_space<vmem>>, vector<16x128xbf16>,
    %c0_38 = arith.constant 0 : index
    %c0_39 = arith.constant 0 : index
    %115 = vector.load %arg14[%c0_38, %c0_39] : memref<32x256xbf16, #tpu.memory_space<vmem>>, vector<32x256xbf16>
    %c0_40 = arith.constant 0 : index
    %c0_41 = arith.constant 0 : index
    %116 = vector.load %arg3[%c0_40, %c0_41] : memref<256x256xbf16, #tpu.memory_space<vmem>>, vector<256x256xbf16>
    %cst_42 = arith.constant dense<0.000000e+00> : vector<32x256xf32>
    %117 = tpu.matmul %115, %116, %cst_42 {dimension_numbers = #tpu.dot_dimension_numbers<[1], [0], [0], [1], [0, 0, 1, 1], [], []>} : vector<32x256xbf16>, vector<256x256xbf16>, vector<32x256xf32> -> vector<32x256xf32>
    %c0_43 = arith.constant 0 : index
    %c0_44 = arith.constant 0 : index
    %118 = vector.load %arg4[%c0_43, %c0_44] : memref<1x256xf32, #tpu.memory_space<vmem>>, vector<1x256xf32>
    %119 = vector.broadcast %118 : vector<1x256xf32> to vector<32x256xf32>
    %120 = arith.addf %117, %119 : vector<32x256xf32>
    %121 = arith.addf %0, %120 : vector<32x256xf32>
    %c0_45 = arith.constant 0 : index
    %c0_46 = arith.constant 0 : index
    %122 = vector.load %arg11[%c0_45, %c0_46] : memref<1x256xf32, #tpu.memory_space<vmem>>, vector<1x256xf32>
    %c0_47 = arith.constant 0 : index
    %c0_48 = arith.constant 0 : index
    %123 = vector.load %arg12[%c0_47, %c0_48] : memref<1x256xf32, #tpu.memory_space<vmem>>, vector<1x256xf32>
    %cst_49 = arith.constant dense<0.000000e+00> : vector<32xf32>
    %124 = vector.multi_reduction <add>, %121, %cst_49 [1] : vector<32x256xf32> to vector<32xf32>
    %125 = vector.shape_cast %124 : vector<32xf32> to vector<32x1xf32>
    %cst_50 = arith.constant 2.560000e+02 : f32
    %126 = vector.broadcast %cst_50 : f32 to vector<32x1xf32>
    %127 = arith.divf %125, %126 : vector<32x1xf32>
    %128 = vector.broadcast %127 : vector<32x1xf32> to vector<32x256xf32>
    %129 = arith.subf %121, %128 : vector<32x256xf32>
    %130 = arith.mulf %129, %129 : vector<32x256xf32>
    %cst_51 = arith.constant dense<0.000000e+00> : vector<32xf32>
    %131 = vector.multi_reduction <add>, %130, %cst_51 [1] : vector<32x256xf32> to vector<32xf32>
    %132 = vector.shape_cast %131 : vector<32xf32> to vector<32x1xf32>
    %cst_52 = arith.constant 2.560000e+02 : f32
    %133 = vector.broadcast %cst_52 : f32 to vector<32x1xf32>
    %134 = arith.divf %132, %133 : vector<32x1xf32>
    %135 = vector.broadcast %127 : vector<32x1xf32> to vector<32x256xf32>
    %136 = arith.subf %121, %135 : vector<32x256xf32>
    %cst_53 = arith.constant 9.99999974E-6 : f32
    %137 = vector.broadcast %cst_53 : f32 to vector<32x1xf32>
    %138 = arith.addf %134, %137 : vector<32x1xf32>
    %139 = math.rsqrt %138 : vector<32x1xf32>
    %140 = vector.broadcast %139 : vector<32x1xf32> to vector<32x256xf32>
    %141 = arith.mulf %136, %140 : vector<32x256xf32>
    %142 = vector.broadcast %122 : vector<1x256xf32> to vector<32x256xf32>
    %143 = arith.mulf %141, %142 : vector<32x256xf32>
    %144 = vector.broadcast %123 : vector<1x256xf32> to vector<32x256xf32>
    %145 = arith.addf %143, %144 : vector<32x256xf32>
    %146 = arith.truncf %145 : vector<32x256xf32> to vector<32x256xbf16>
    %c0_54 = arith.constant 0 : index
    %c0_55 = arith.constant 0 : index
    %147 = vector.load %arg5[%c0_54, %c0_55] : memref<256x1024xbf16, #tpu.memory_space<vmem>>, vector<256x1024xbf16>
    %cst_56 = arith.constant dense<0.000000e+00> : vector<32x1024xf32>
    %148 = tpu.matmul %146, %147, %cst_56 {dimension_numbers = #tpu.dot_dimension_numbers<[1], [0], [0], [1], [0, 0, 1, 1], [], []>} : vector<32x256xbf16>, vector<256x1024xbf16>, vector<32x1024xf32> -> vector<32x1024xf32>
    %c0_57 = arith.constant 0 : index
    %c0_58 = arith.constant 0 : index
    %149 = vector.load %arg6[%c0_57, %c0_58] : memref<1x1024xf32, #tpu.memory_space<vmem>>, vector<1x1024xf32>
    %150 = vector.broadcast %149 : vector<1x1024xf32> to vector<32x1024xf32>
    %151 = arith.addf %148, %150 : vector<32x1024xf32>
    %152 = arith.mulf %151, %151 : vector<32x1024xf32>
    %153 = arith.mulf %152, %151 : vector<32x1024xf32>
    %cst_59 = arith.constant 5.000000e-01 : f32
    %154 = vector.broadcast %cst_59 : f32 to vector<32x1024xf32>
    %155 = arith.mulf %154, %151 : vector<32x1024xf32>
    %cst_60 = arith.constant 4.800000e-02 : f32
    %156 = vector.broadcast %cst_60 : f32 to vector<32x1024xf32>
    %157 = arith.mulf %156, %153 : vector<32x1024xf32>
    %158 = arith.addf %151, %157 : vector<32x1024xf32>
    %cst_61 = arith.constant 0.797884583 : f32
    %159 = vector.broadcast %cst_61 : f32 to vector<32x1024xf32>
    %160 = arith.mulf %159, %158 : vector<32x1024xf32>
    %161 = math.tanh %160 : vector<32x1024xf32>
    %cst_62 = arith.constant 1.000000e+00 : f32
    %162 = vector.broadcast %cst_62 : f32 to vector<32x1024xf32>
    %163 = arith.addf %162, %161 : vector<32x1024xf32>
    %164 = arith.mulf %155, %163 : vector<32x1024xf32>
    %165 = arith.truncf %164 : vector<32x1024xf32> to vector<32x1024xbf16>
    %c0_63 = arith.constant 0 : index
    %c0_64 = arith.constant 0 : index
    %166 = vector.load %arg7[%c0_63, %c0_64] : memref<1024x256xbf16, #tpu.memory_space<vmem>>, vector<1024x256xbf16>
    %cst_65 = arith.constant dense<0.000000e+00> : vector<32x256xf32>
    %167 = tpu.matmul %165, %166, %cst_65 {dimension_numbers = #tpu.dot_dimension_numbers<[1], [0], [0], [1], [0, 0, 1, 1], [], []>} : vector<32x1024xbf16>, vector<1024x256xbf16>, vector<32x256xf32> -> vector<32x256xf32>
    %c0_66 = arith.constant 0 : index
    %c0_67 = arith.constant 0 : index
    %168 = vector.load %arg8[%c0_66, %c0_67] : memref<1x256xf32, #tpu.memory_space<vmem>>, vector<1x256xf32>
    %169 = vector.broadcast %168 : vector<1x256xf32> to vector<32x256xf32>
    %170 = arith.addf %167, %169 : vector<32x256xf32>
    %171 = arith.addf %121, %170 : vector<32x256xf32>
    %c0_68 = arith.constant 0 : index
    %c0_69 = arith.constant 0 : index
    %172 = vector.load %arg13[%c0_68, %c0_69] : memref<32x256xf32, #tpu.memory_space<vmem>>, vector<32x256xf32>
    tpu.vector_store %arg13[%c0_68, %c0_69], %171 {strides = array<i32>} : memref<32x256xf32, #tpu.memory_space<vmem>>, vector<32x256xf32>,
    return
  }
  func.func @transform_0(%arg0: i32) -> (i32, i32) {
    %c0_i32 = arith.constant 0 : i32
    %c0_i32_0 = arith.constant 0 : i32
    return %arg0, %c0_i32 : i32, i32
  }
  func.func @transform_1(%arg0: i32) -> (i32, i32) {
    %c0_i32 = arith.constant 0 : i32
    %c0_i32_0 = arith.constant 0 : i32
    %c0_i32_1 = arith.constant 0 : i32
    return %c0_i32, %c0_i32_0 : i32, i32
  }
  func.func @transform_2(%arg0: i32) -> (i32, i32) {
    %c0_i32 = arith.constant 0 : i32
    %c0_i32_0 = arith.constant 0 : i32
    %c0_i32_1 = arith.constant 0 : i32
    return %c0_i32, %c0_i32_0 : i32, i32
  }
  func.func @transform_3(%arg0: i32) -> (i32, i32) {
    %c0_i32 = arith.constant 0 : i32
    %c0_i32_0 = arith.constant 0 : i32
    %c0_i32_1 = arith.constant 0 : i32
    return %c0_i32, %c0_i32_0 : i32, i32
  }
  func.func @transform_4(%arg0: i32) -> (i32, i32) {
    %c0_i32 = arith.constant 0 : i32
    %c0_i32_0 = arith.constant 0 : i32
    %c0_i32_1 = arith.constant 0 : i32
    return %c0_i32, %c0_i32_0 : i32, i32
  }
  func.func @transform_5(%arg0: i32) -> (i32, i32) {
    %c0_i32 = arith.constant 0 : i32
    %c0_i32_0 = arith.constant 0 : i32
    %c0_i32_1 = arith.constant 0 : i32
    return %c0_i32, %c0_i32_0 : i32, i32
  }
  func.func @transform_6(%arg0: i32) -> (i32, i32) {
    %c0_i32 = arith.constant 0 : i32
    %c0_i32_0 = arith.constant 0 : i32
    %c0_i32_1 = arith.constant 0 : i32
    return %c0_i32, %c0_i32_0 : i32, i32
  }
  func.func @transform_7(%arg0: i32) -> (i32, i32) {
    %c0_i32 = arith.constant 0 : i32
    %c0_i32_0 = arith.constant 0 : i32
    %c0_i32_1 = arith.constant 0 : i32
    return %c0_i32, %c0_i32_0 : i32, i32
  }
  func.func @transform_8(%arg0: i32) -> (i32, i32) {
    %c0_i32 = arith.constant 0 : i32
    %c0_i32_0 = arith.constant 0 : i32
    %c0_i32_1 = arith.constant 0 : i32
    return %c0_i32, %c0_i32_0 : i32, i32
  }
  func.func @transform_9(%arg0: i32) -> (i32, i32) {
    %c0_i32 = arith.constant 0 : i32
    %c0_i32_0 = arith.constant 0 : i32
    %c0_i32_1 = arith.constant 0 : i32
    return %c0_i32, %c0_i32_0 : i32, i32
  }
  func.func @transform_10(%arg0: i32) -> (i32, i32) {
    %c0_i32 = arith.constant 0 : i32
    %c0_i32_0 = arith.constant 0 : i32
    %c0_i32_1 = arith.constant 0 : i32
    return %c0_i32, %c0_i32_0 : i32, i32
  }
  func.func @transform_11(%arg0: i32) -> (i32, i32) {
    %c0_i32 = arith.constant 0 : i32
    %c0_i32_0 = arith.constant 0 : i32
    %c0_i32_1 = arith.constant 0 : i32
    return %c0_i32, %c0_i32_0 : i32, i32
  }
  func.func @transform_12(%arg0: i32) -> (i32, i32) {
    %c0_i32 = arith.constant 0 : i32
    %c0_i32_0 = arith.constant 0 : i32
    return %arg0, %c0_i32 : i32, i32
  }
}

</mosaic_0001>

<llo_original>
// kernel: tpu_custom_call.1
$region0: #{tpu_custom_call.1}
  #allocation0 [shape = 'u32[]', space=smem, size = 0x4, offset = 0x4, fixed_abs, tag = 'smem constant byte address 0x4 - core index']
  #allocation1 [shape = 'u32[144,128]{1,0:T(1,128)}', space=vmem, size = 0x12000, scoped, tag = 'internal scratch']
  #allocation2 [shape = 'bf16[32,256]{1,0:T(8,128)(2,1)}', space=vmem, size = 0x4000, scoped, tag = 'scratch operand']
  %s0 = inlined_call_operand.hbm [shape: f32[32,256], index: 0, kind: input, shape index: {}]
  %s1 = inlined_call_operand.hbm [shape: bf16[256,768], index: 1, kind: input, shape index: {}]
  %s2 = inlined_call_operand.hbm [shape: bf16[256,256], index: 2, kind: input, shape index: {}]
  %s3 = inlined_call_operand.hbm [shape: f32[1,256], index: 3, kind: input, shape index: {}]
  %s4 = inlined_call_operand.hbm [shape: bf16[256,1024], index: 4, kind: input, shape index: {}]
  %s5 = inlined_call_operand.vmem [shape: f32[1,1024], index: 5, kind: input, shape index: {}]
  %s6 = inlined_call_operand.hbm [shape: bf16[1024,256], index: 6, kind: input, shape index: {}]
  %s7 = inlined_call_operand.vmem [shape: f32[1,256], index: 7, kind: input, shape index: {}]
  %s8 = inlined_call_operand.vmem [shape: f32[1,256], index: 8, kind: input, shape index: {}]
  %s9 = inlined_call_operand.vmem [shape: f32[1,256], index: 9, kind: input, shape index: {}]
  %s10 = inlined_call_operand.vmem [shape: f32[1,256], index: 10, kind: input, shape index: {}]
  %s11 = inlined_call_operand.vmem [shape: f32[1,256], index: 11, kind: input, shape index: {}]
  %s12 = inlined_call_operand.hbm [shape: f32[32,256], index: 12, kind: output, shape index: {}]
  %s13 = sld [smem:[#allocation0]]
  $region82: #{tpu_custom_call.1} parent=0
    _
  %s15 = ssub.s32 1, %s13
  %s16 = scalar_select 0, %s15, %s13
  $region1: #{tpu_custom_call.1} parent=0
    #allocation3 [shape = 'u8[32768]{0}', space=vmem, size = 0x8000, scoped, tag = 'input window, operand 0, single buffered']
    #allocation4 [shape = 's32[1]{0}', space=sflag, size = 0x4, scoped, tag = 'scoped memory for tpu_custom_call.1']
    #allocation5 [shape = 's32[1]{0}', space=sflag, size = 0x4, scoped, tag = 'scoped memory for tpu_custom_call.1']
    #allocation6 [shape = 'u8[393216]{0}', space=vmem, size = 0x60000, scoped, tag = 'input window, operand 1, single buffered']
    #allocation7 [shape = 's32[1]{0}', space=sflag, size = 0x4, scoped, tag = 'scoped memory for tpu_custom_call.1']
    #allocation8 [shape = 'u8[131072]{0}', space=vmem, size = 0x20000, scoped, tag = 'input window, operand 2, single buffered']
    #allocation9 [shape = 'u8[1024]{0}', space=vmem, size = 0x400, scoped, tag = 'input window, operand 3, single buffered']
    #allocation10 [shape = 's32[1]{0}', space=sflag, size = 0x4, scoped, tag = 'scoped memory for tpu_custom_call.1']
    #allocation11 [shape = 'u8[524288]{0}', space=vmem, size = 0x80000, scoped, tag = 'input window, operand 4, single buffered']
    #allocation12 [shape = 'u8[524288]{0}', space=vmem, size = 0x80000, scoped, tag = 'input window, operand 6, single buffered']
    #allocation13 [shape = 's32[1]{0}', space=sflag, size = 0x4, scoped, tag = 'scoped memory for tpu_custom_call.1']
    #allocation14 [shape = 'u8[32768]{0}', space=vmem, size = 0x8000, scoped, tag = 'output window, operand 0, single buffered']
    %17 = vsyncpa [#allocation4], 0
    %18 = vsyncpa [#allocation7], 0
    %19 = vsyncpa [#allocation10], 0
    %20 = vsyncpa [#allocation13], 0
    %21 = vsyncpa [#allocation5], 0
    // Predicated region
    $region2: #{tpu_custom_call.1} parent=1 // pred_check
      _
    $region3: #{tpu_custom_call.1} parent=1 // pred_check_branch
      %23 = sbr.rel (0) target = $region5
    $region4: #{tpu_custom_call.1} parent=1 // pred_region
      %s25 = ssub.s32 1024, 1024
      %26 = vsyncadd [#allocation4], %s25
      %s27 = sshll.u32 [#allocation3], 4
      %s28 = int_to_ptr.vmem [resolvable:$true] %s27
      %33 = dma.hbm_to_vmem [thread:$0]  %s0, 1024, %s28, [#allocation4], 256, 256, 16
    $region5: #{tpu_custom_call.1} parent=1 // pred_fallthru
      _
    // Predicated region
    $region6: #{tpu_custom_call.1} parent=1 // pred_check
      _
    $region7: #{tpu_custom_call.1} parent=1 // pred_check_branch
      %35 = sbr.rel (0) target = $region9
    $region8: #{tpu_custom_call.1} parent=1 // pred_region
      %s37 = ssub.s32 12288, 12288
      %38 = vsyncadd [#allocation7], %s37
      %s39 = sshll.u32 [#allocation6], 4
      %s40 = int_to_ptr.vmem [resolvable:$true] %s39
      %45 = dma.hbm_to_vmem [thread:$0]  %s1, 12288, %s40, [#allocation7], 384, 384, 24
    $region9: #{tpu_custom_call.1} parent=1 // pred_fallthru
      _
    // Predicated region
    $region10: #{tpu_custom_call.1} parent=1 // pred_check
      _
    $region11: #{tpu_custom_call.1} parent=1 // pred_check_branch
      %47 = sbr.rel (0) target = $region13
    $region12: #{tpu_custom_call.1} parent=1 // pred_region
      %s49 = ssub.s32 4096, 4096
      %50 = vsyncadd [#allocation7], %s49
      %s51 = sshll.u32 [#allocation8], 4
      %s52 = int_to_ptr.vmem [resolvable:$true] %s51
      %57 = dma.hbm_to_vmem [thread:$0]  %s2, 4096, %s52, [#allocation7], 128, 128, 8
    $region13: #{tpu_custom_call.1} parent=1 // pred_fallthru
      _
    // Predicated region
    $region14: #{tpu_custom_call.1} parent=1 // pred_check
      _
    $region15: #{tpu_custom_call.1} parent=1 // pred_check_branch
      %59 = sbr.rel (0) target = $region17
    $region16: #{tpu_custom_call.1} parent=1 // pred_region
      %s61 = ssub.s32 32, 32
      %62 = vsyncadd [#allocation10], %s61
      %s64 = sshll.u32 [#allocation9], 4
      %s65 = int_to_ptr.vmem [resolvable:$true] %s64
      %67 = dma.hbm_to_vmem [thread:$0]  %s3, 32, %s65, [#allocation10]
    $region17: #{tpu_custom_call.1} parent=1 // pred_fallthru
      _
    // Predicated region
    $region18: #{tpu_custom_call.1} parent=1 // pred_check
      _
    $region19: #{tpu_custom_call.1} parent=1 // pred_check_branch
      %69 = sbr.rel (0) target = $region21
    $region20: #{tpu_custom_call.1} parent=1 // pred_region
      %s71 = ssub.s32 16384, 16384
      %72 = vsyncadd [#allocation10], %s71
      %s73 = sshll.u32 [#allocation11], 4
      %s74 = int_to_ptr.vmem [resolvable:$true] %s73
      %79 = dma.hbm_to_vmem [thread:$0]  %s4, 16384, %s74, [#allocation10], 512, 512, 32
    $region21: #{tpu_custom_call.1} parent=1 // pred_fallthru
      _
    // Predicated region
    $region22: #{tpu_custom_call.1} parent=1 // pred_check
      _
    $region23: #{tpu_custom_call.1} parent=1 // pred_check_branch
      %81 = sbr.rel (0) target = $region25
    $region24: #{tpu_custom_call.1} parent=1 // pred_region
      _
    $region25: #{tpu_custom_call.1} parent=1 // pred_fallthru
      _
    // Predicated region
    $region26: #{tpu_custom_call.1} parent=1 // pred_check
      _
    $region27: #{tpu_custom_call.1} parent=1 // pred_check_branch
      %83 = sbr.rel (0) target = $region29
    $region28: #{tpu_custom_call.1} parent=1 // pred_region
      %s85 = ssub.s32 16384, 16384
      %86 = vsyncadd [#allocation13], %s85
      %s87 = sshll.u32 [#allocation12], 4
      %s88 = int_to_ptr.vmem [resolvable:$true] %s87
      %93 = dma.hbm_to_vmem [thread:$0]  %s6, 16384, %s88, [#allocation13], 128, 128, 8
    $region29: #{tpu_custom_call.1} parent=1 // pred_fallthru
      _
    // Predicated region
    $region30: #{tpu_custom_call.1} parent=1 // pred_check
      _
    $region31: #{tpu_custom_call.1} parent=1 // pred_check_branch
      %95 = sbr.rel (0) target = $region33
    $region32: #{tpu_custom_call.1} parent=1 // pred_region
      _
    $region33: #{tpu_custom_call.1} parent=1 // pred_fallthru
      _
    // Predicated region
    $region34: #{tpu_custom_call.1} parent=1 // pred_check
      _
    $region35: #{tpu_custom_call.1} parent=1 // pred_check_branch
      %97 = sbr.rel (0) target = $region37
    $region36: #{tpu_custom_call.1} parent=1 // pred_region
      _
    $region37: #{tpu_custom_call.1} parent=1 // pred_fallthru
      _
    // Predicated region
    $region38: #{tpu_custom_call.1} parent=1 // pred_check
      _
    $region39: #{tpu_custom_call.1} parent=1 // pred_check_branch
      %99 = sbr.rel (0) target = $region41
    $region40: #{tpu_custom_call.1} parent=1 // pred_region
      _
    $region41: #{tpu_custom_call.1} parent=1 // pred_fallthru
      _
    // Predicated region
    $region42: #{tpu_custom_call.1} parent=1 // pred_check
      _
    $region43: #{tpu_custom_call.1} parent=1 // pred_check_branch
      %101 = sbr.rel (0) target = $region45
    $region44: #{tpu_custom_call.1} parent=1 // pred_region
      _
    $region45: #{tpu_custom_call.1} parent=1 // pred_fallthru
      _
    // Predicated region
    $region46: #{tpu_custom_call.1} parent=1 // pred_check
      _
    $region47: #{tpu_custom_call.1} parent=1 // pred_check_branch
      %103 = sbr.rel (0) target = $region49
    $region48: #{tpu_custom_call.1} parent=1 // pred_region
      _
    $region49: #{tpu_custom_call.1} parent=1 // pred_fallthru
      _
    // Predicated region
    $region50: #{tpu_custom_call.1} parent=1 // pred_check
      _
    $region51: #{tpu_custom_call.1} parent=1 // pred_check_branch
      %105 = sbr.rel (0) target = $region53
    $region52: #{tpu_custom_call.1} parent=1 // pred_region
      %106 = dma.done [#allocation4], 1024
    $region53: #{tpu_custom_call.1} parent=1 // pred_fallthru
      _
    // Predicated region
    $region54: #{tpu_custom_call.1} parent=1 // pred_check
      _
    $region55: #{tpu_custom_call.1} parent=1 // pred_check_branch
      %108 = sbr.rel (0) target = $region57
    $region56: #{tpu_custom_call.1} parent=1 // pred_region
      %109 = dma.done [#allocation7], 12288
    $region57: #{tpu_custom_call.1} parent=1 // pred_fallthru
      _
    // Predicated region
    $region58: #{tpu_custom_call.1} parent=1 // pred_check
      _
    $region59: #{tpu_custom_call.1} parent=1 // pred_check_branch
      %111 = sbr.rel (0) target = $region61
    $region60: #{tpu_custom_call.1} parent=1 // pred_region
      %112 = dma.done [#allocation7], 4096
    $region61: #{tpu_custom_call.1} parent=1 // pred_fallthru
      _
    // Predicated region
    $region62: #{tpu_custom_call.1} parent=1 // pred_check
      _
    $region63: #{tpu_custom_call.1} parent=1 // pred_check_branch
      %114 = sbr.rel (0) target = $region65
    $region64: #{tpu_custom_call.1} parent=1 // pred_region
      %115 = dma.done [#allocation10], 32
    $region65: #{tpu_custom_call.1} parent=1 // pred_fallthru
      _
    // Predicated region
    $region66: #{tpu_custom_call.1} parent=1 // pred_check
      _
    $region67: #{tpu_custom_call.1} parent=1 // pred_check_branch
      %117 = sbr.rel (0) target = $region69
    $region68: #{tpu_custom_call.1} parent=1 // pred_region
      %118 = dma.done [#allocation10], 16384
    $region69: #{tpu_custom_call.1} parent=1 // pred_fallthru
      _
    // Predicated region
    $region70: #{tpu_custom_call.1} parent=1 // pred_check
      _
    $region71: #{tpu_custom_call.1} parent=1 // pred_check_branch
      %120 = sbr.rel (0) target = $region73
    $region72: #{tpu_custom_call.1} parent=1 // pred_region
      %121 = dma.done [#allocation13], 16384
    $region73: #{tpu_custom_call.1} parent=1 // pred_fallthru
      _
    %v123 = vld [vmem:[#allocation3] sm:$0xff]
    %v124 = vld [vmem:[#allocation3 + $0x8] sm:$0xff]
    %v125 = vld [vmem:[#allocation3 + $0x10] sm:$0xff]
    %v126 = vld [vmem:[#allocation3 + $0x18] sm:$0xff]
    %v127 = vld [vmem:[#allocation3 + $0x20] sm:$0xff]
    %v128 = vld [vmem:[#allocation3 + $0x28] sm:$0xff]
    %v129 = vld [vmem:[#allocation3 + $0x30] sm:$0xff]
    %v130 = vld [vmem:[#allocation3 + $0x38] sm:$0xff]
    %v131 = vld [vmem:[%s8] sm:$0x3]
    %v132 = vld [vmem:[%s9] sm:$0x3]
    %v133 = vadd.f32 %v123, %v124
    %134 = vadd.xlane.f32.xlu0 %v133
    %v135 = vpop.xlane.xlu0 %134
    %v136 = vadd.f32 %v125, %v126
    %137 = vadd.xlane.f32.xlu0 %v136
    %v138 = vpop.xlane.xlu0 %137
    %v139 = vadd.f32 %v127, %v128
    %140 = vadd.xlane.f32.xlu0 %v139
    %v141 = vpop.xlane.xlu0 %140
    %v142 = vadd.f32 %v129, %v130
    %143 = vadd.xlane.f32.xlu0 %v142
    %v144 = vpop.xlane.xlu0 %143
    %v145 = vrcp.pop 256.0
    %v146 = vmul.f32 %v135, %v145
    %v147 = vmul.f32 %v138, %v145
    %v148 = vmul.f32 %v141, %v145
    %v149 = vmul.f32 %v144, %v145
    %v150 = vsub.f32 %v123, %v146
    %v151 = vsub.f32 %v124, %v146
    %v152 = vsub.f32 %v125, %v147
    %v153 = vsub.f32 %v126, %v147
    %v154 = vsub.f32 %v127, %v148
    %v155 = vsub.f32 %v128, %v148
    %v156 = vsub.f32 %v129, %v149
    %v157 = vsub.f32 %v130, %v149
    %v158 = vmul.f32 %v150, %v150
    %v159 = vmul.f32 %v151, %v151
    %v160 = vmul.f32 %v152, %v152
    %v161 = vmul.f32 %v153, %v153
    %v162 = vmul.f32 %v154, %v154
    %v163 = vmul.f32 %v155, %v155
    %v164 = vmul.f32 %v156, %v156
    %v165 = vmul.f32 %v157, %v157
    %v166 = vadd.f32 %v158, %v159
    %167 = vadd.xlane.f32.xlu0 %v166
    %v168 = vpop.xlane.xlu0 %167
    %v169 = vadd.f32 %v160, %v161
    %170 = vadd.xlane.f32.xlu0 %v169
    %v171 = vpop.xlane.xlu0 %170
    %v172 = vadd.f32 %v162, %v163
    %173 = vadd.xlane.f32.xlu0 %v172
    %v174 = vpop.xlane.xlu0 %173
    %v175 = vadd.f32 %v164, %v165
    %176 = vadd.xlane.f32.xlu0 %v175
    %v177 = vpop.xlane.xlu0 %176
    %v178 = vmul.f32 %v168, %v145
    %v179 = vmul.f32 %v171, %v145
    %v180 = vmul.f32 %v174, %v145
    %v181 = vmul.f32 %v177, %v145
    %v182 = vadd.f32 %v178, 1e-05
    %v183 = vadd.f32 %v179, 1e-05
    %v184 = vadd.f32 %v180, 1e-05
    %v185 = vadd.f32 %v181, 1e-05
    %v186 = vrsqrt.pop %v182
    %v187 = vrsqrt.pop %v183
    %v188 = vrsqrt.pop %v184
    %v189 = vrsqrt.pop %v185
    %v190 = vmul.f32 %v150, %v186
    %v191 = vmul.f32 %v151, %v186
    %v192 = vmul.f32 %v152, %v187
    %v193 = vmul.f32 %v153, %v187
    %v194 = vmul.f32 %v154, %v188
    %v195 = vmul.f32 %v155, %v188
    %v196 = vmul.f32 %v156, %v189
    %v197 = vmul.f32 %v157, %v189
    %v199 = vlaneseq
    %v200 = vshrl.u32 %v199, 7
    %v201 = vsub.s32 0, %v200
    %v202 = vrot.slane %v131, %v201
    %v203 = vlaneseq
    %v204 = vshrl.u32 %v203, 7
    %v205 = vsub.s32 1, %v204
    %v206 = vrot.slane %v131, %v205
    %v209 = vmul.f32 %v190, %v202
    %v210 = vmul.f32 %v191, %v206
    %v211 = vmul.f32 %v192, %v202
    %v212 = vmul.f32 %v193, %v206
    %v213 = vmul.f32 %v194, %v202
    %v214 = vmul.f32 %v195, %v206
    %v215 = vmul.f32 %v196, %v202
    %v216 = vmul.f32 %v197, %v206
    %v218 = vlaneseq
    %v219 = vshrl.u32 %v218, 7
    %v220 = vsub.s32 0, %v219
    %v221 = vrot.slane %v132, %v220
    %v222 = vlaneseq
    %v223 = vshrl.u32 %v222, 7
    %v224 = vsub.s32 1, %v223
    %v225 = vrot.slane %v132, %v224
    %v228 = vadd.f32 %v209, %v221
    %v229 = vadd.f32 %v210, %v225
    %v230 = vadd.f32 %v211, %v221
    %v231 = vadd.f32 %v212, %v225
    %v232 = vadd.f32 %v213, %v221
    %v233 = vadd.f32 %v214, %v225
    %v234 = vadd.f32 %v215, %v221
    %v235 = vadd.f32 %v216, %v225
    %v236 = vpack.c.bf16 %v230, %v228
    %v237 = vpack.c.bf16 %v231, %v229
    %v238 = vpack.c.bf16 %v234, %v232
    %v239 = vpack.c.bf16 %v235, %v233
    %v240 = vld [vmem:[#allocation6] sm:$0xff]
    %v241 = vld [vmem:[#allocation6 + $0x8] sm:$0xff]
    %v242 = vld [vmem:[#allocation6 + $0x10] sm:$0xff]
    %v243 = vld [vmem:[#allocation6 + $0x18] sm:$0xff]
    %v244 = vld [vmem:[#allocation6 + $0x20] sm:$0xff]
    %v245 = vld [vmem:[#allocation6 + $0x28] sm:$0xff]
    %v246 = vld [vmem:[#allocation6 + $0x30] sm:$0xff]
    %v247 = vld [vmem:[#allocation6 + $0x38] sm:$0xff]
    %v248 = vld [vmem:[#allocation6 + $0x40] sm:$0xff]
    %v249 = vld [vmem:[#allocation6 + $0x48] sm:$0xff]
    %v250 = vld [vmem:[#allocation6 + $0x50] sm:$0xff]
    %v251 = vld [vmem:[#allocation6 + $0x58] sm:$0xff]
    %v252 = vld [vmem:[#allocation6 + $0x60] sm:$0xff]
    %v253 = vld [vmem:[#allocation6 + $0x68] sm:$0xff]
    %v254 = vld [vmem:[#allocation6 + $0x70] sm:$0xff]
    %v255 = vld [vmem:[#allocation6 + $0x78] sm:$0xff]
    %v256 = vld [vmem:[#allocation6 + $0x80] sm:$0xff]
    %v257 = vld [vmem:[#allocation6 + $0x88] sm:$0xff]
    %v258 = vld [vmem:[#allocation6 + $0x90] sm:$0xff]
    %v259 = vld [vmem:[#allocation6 + $0x98] sm:$0xff]
    %v260 = vld [vmem:[#allocation6 + $0xa0] sm:$0xff]
    %v261 = vld [vmem:[#allocation6 + $0xa8] sm:$0xff]
    %v262 = vld [vmem:[#allocation6 + $0xb0] sm:$0xff]
    %v263 = vld [vmem:[#allocation6 + $0xb8] sm:$0xff]
    %v264 = vld [vmem:[#allocation6 + $0xc0] sm:$0xff]
    %v265 = vld [vmem:[#allocation6 + $0xc8] sm:$0xff]
    %v266 = vld [vmem:[#allocation6 + $0xd0] sm:$0xff]
    %v267 = vld [vmem:[#allocation6 + $0xd8] sm:$0xff]
    %v268 = vld [vmem:[#allocation6 + $0xe0] sm:$0xff]
    %v269 = vld [vmem:[#allocation6 + $0xe8] sm:$0xff]
    %v270 = vld [vmem:[#allocation6 + $0xf0] sm:$0xff]
    %v271 = vld [vmem:[#allocation6 + $0xf8] sm:$0xff]
    %v272 = vld [vmem:[#allocation6 + $0x100] sm:$0xff]
    %v273 = vld [vmem:[#allocation6 + $0x108] sm:$0xff]
    %v274 = vld [vmem:[#allocation6 + $0x110] sm:$0xff]
    %v275 = vld [vmem:[#allocation6 + $0x118] sm:$0xff]
    %v276 = vld [vmem:[#allocation6 + $0x120] sm:$0xff]
    %v277 = vld [vmem:[#allocation6 + $0x128] sm:$0xff]
    %v278 = vld [vmem:[#allocation6 + $0x130] sm:$0xff]
    %v279 = vld [vmem:[#allocation6 + $0x138] sm:$0xff]
    %v280 = vld [vmem:[#allocation6 + $0x140] sm:$0xff]
    %v281 = vld [vmem:[#allocation6 + $0x148] sm:$0xff]
    %v282 = vld [vmem:[#allocation6 + $0x150] sm:$0xff]
    %v283 = vld [vmem:[#allocation6 + $0x158] sm:$0xff]
    %v284 = vld [vmem:[#allocation6 + $0x160] sm:$0xff]
    %v285 = vld [vmem:[#allocation6 + $0x168] sm:$0xff]
    %v286 = vld [vmem:[#allocation6 + $0x170] sm:$0xff]
    %v287 = vld [vmem:[#allocation6 + $0x178] sm:$0xff]
    %v288 = vld [vmem:[#allocation6 + $0x180] sm:$0xff]
    %v289 = vld [vmem:[#allocation6 + $0x188] sm:$0xff]
    %v290 = vld [vmem:[#allocation6 + $0x190] sm:$0xff]
    %v291 = vld [vmem:[#allocation6 + $0x198] sm:$0xff]
    %v292 = vld [vmem:[#allocation6 + $0x1a0] sm:$0xff]
    %v293 = vld [vmem:[#allocation6 + $0x1a8] sm:$0xff]
    %v294 = vld [vmem:[#allocation6 + $0x1b0] sm:$0xff]
    %v295 = vld [vmem:[#allocation6 + $0x1b8] sm:$0xff]
    %v296 = vld [vmem:[#allocation6 + $0x1c0] sm:$0xff]
    %v297 = vld [vmem:[#allocation6 + $0x1c8] sm:$0xff]
    %v298 = vld [vmem:[#allocation6 + $0x1d0] sm:$0xff]
    %v299 = vld [vmem:[#allocation6 + $0x1d8] sm:$0xff]
    %v300 = vld [vmem:[#allocation6 + $0x1e0] sm:$0xff]
    %v301 = vld [vmem:[#allocation6 + $0x1e8] sm:$0xff]
    %v302 = vld [vmem:[#allocation6 + $0x1f0] sm:$0xff]
    %v303 = vld [vmem:[#allocation6 + $0x1f8] sm:$0xff]
    %v304 = vld [vmem:[#allocation6 + $0x200] sm:$0xff]
    %v305 = vld [vmem:[#allocation6 + $0x208] sm:$0xff]
    %v306 = vld [vmem:[#allocation6 + $0x210] sm:$0xff]
    %v307 = vld [vmem:[#allocation6 + $0x218] sm:$0xff]
    %v308 = vld [vmem:[#allocation6 + $0x220] sm:$0xff]
    %v309 = vld [vmem:[#allocation6 + $0x228] sm:$0xff]
    %v310 = vld [vmem:[#allocation6 + $0x230] sm:$0xff]
    %v311 = vld [vmem:[#allocation6 + $0x238] sm:$0xff]
    %v312 = vld [vmem:[#allocation6 + $0x240] sm:$0xff]
    %v313 = vld [vmem:[#allocation6 + $0x248] sm:$0xff]
    %v314 = vld [vmem:[#allocation6 + $0x250] sm:$0xff]
    %v315 = vld [vmem:[#allocation6 + $0x258] sm:$0xff]
    %v316 = vld [vmem:[#allocation6 + $0x260] sm:$0xff]
    %v317 = vld [vmem:[#allocation6 + $0x268] sm:$0xff]
    %v318 = vld [vmem:[#allocation6 + $0x270] sm:$0xff]
    %v319 = vld [vmem:[#allocation6 + $0x278] sm:$0xff]
    %v320 = vld [vmem:[#allocation6 + $0x280] sm:$0xff]
    %v321 = vld [vmem:[#allocation6 + $0x288] sm:$0xff]
    %v322 = vld [vmem:[#allocation6 + $0x290] sm:$0xff]
    %v323 = vld [vmem:[#allocation6 + $0x298] sm:$0xff]
    %v324 = vld [vmem:[#allocation6 + $0x2a0] sm:$0xff]
    %v325 = vld [vmem:[#allocation6 + $0x2a8] sm:$0xff]
    %v326 = vld [vmem:[#allocation6 + $0x2b0] sm:$0xff]
    %v327 = vld [vmem:[#allocation6 + $0x2b8] sm:$0xff]
    %v328 = vld [vmem:[#allocation6 + $0x2c0] sm:$0xff]
    %v329 = vld [vmem:[#allocation6 + $0x2c8] sm:$0xff]
    %v330 = vld [vmem:[#allocation6 + $0x2d0] sm:$0xff]
    %v331 = vld [vmem:[#allocation6 + $0x2d8] sm:$0xff]
    %v332 = vld [vmem:[#allocation6 + $0x2e0] sm:$0xff]
    %v333 = vld [vmem:[#allocation6 + $0x2e8] sm:$0xff]
    %v334 = vld [vmem:[#allocation6 + $0x2f0] sm:$0xff]
    %v335 = vld [vmem:[#allocation6 + $0x2f8] sm:$0xff]
    %v432 = vunpack.c.l.b16 %v240
    %v433 = vunpack.c.h.b16 %v240
    %v434 = vunpack.c.l.b16 %v241
    %v435 = vunpack.c.h.b16 %v241
    %v436 = vunpack.c.l.b16 %v242
    %v437 = vunpack.c.h.b16 %v242
    %v438 = vunpack.c.l.b16 %v243
    %v439 = vunpack.c.h.b16 %v243
    %v440 = vunpack.c.l.b16 %v244
    %v441 = vunpack.c.h.b16 %v244
    %v442 = vunpack.c.l.b16 %v245
    %v443 = vunpack.c.h.b16 %v245
    %v444 = vunpack.c.l.b16 %v246
    %v445 = vunpack.c.h.b16 %v246
    %v446 = vunpack.c.l.b16 %v247
    %v447 = vunpack.c.h.b16 %v247
    %v448 = vunpack.c.l.b16 %v248
    %v449 = vunpack.c.h.b16 %v248
    %v450 = vunpack.c.l.b16 %v249
    %v451 = vunpack.c.h.b16 %v249
    %v452 = vunpack.c.l.b16 %v250
    %v453 = vunpack.c.h.b16 %v250
    %v454 = vunpack.c.l.b16 %v251
    %v455 = vunpack.c.h.b16 %v251
    %v456 = vunpack.c.l.b16 %v252
    %v457 = vunpack.c.h.b16 %v252
    %v458 = vunpack.c.l.b16 %v253
    %v459 = vunpack.c.h.b16 %v253
    %v460 = vunpack.c.l.b16 %v254
    %v461 = vunpack.c.h.b16 %v254
    %v462 = vunpack.c.l.b16 %v255
    %v463 = vunpack.c.h.b16 %v255
    %v464 = vunpack.c.l.b16 %v256
    %v465 = vunpack.c.h.b16 %v256
    %v466 = vunpack.c.l.b16 %v257
    %v467 = vunpack.c.h.b16 %v257
    %v468 = vunpack.c.l.b16 %v258
    %v469 = vunpack.c.h.b16 %v258
    %v470 = vunpack.c.l.b16 %v259
    %v471 = vunpack.c.h.b16 %v259
    %v472 = vunpack.c.l.b16 %v260
    %v473 = vunpack.c.h.b16 %v260
    %v474 = vunpack.c.l.b16 %v261
    %v475 = vunpack.c.h.b16 %v261
    %v476 = vunpack.c.l.b16 %v262
    %v477 = vunpack.c.h.b16 %v262
    %v478 = vunpack.c.l.b16 %v263
    %v479 = vunpack.c.h.b16 %v263
    %v480 = vunpack.c.l.b16 %v264
    %v481 = vunpack.c.h.b16 %v264
    %v482 = vunpack.c.l.b16 %v265
    %v483 = vunpack.c.h.b16 %v265
    %v484 = vunpack.c.l.b16 %v266
    %v485 = vunpack.c.h.b16 %v266
    %v486 = vunpack.c.l.b16 %v267
    %v487 = vunpack.c.h.b16 %v267
    %v488 = vunpack.c.l.b16 %v268
    %v489 = vunpack.c.h.b16 %v268
    %v490 = vunpack.c.l.b16 %v269
    %v491 = vunpack.c.h.b16 %v269
    %v492 = vunpack.c.l.b16 %v270
    %v493 = vunpack.c.h.b16 %v270
    %v494 = vunpack.c.l.b16 %v271
    %v495 = vunpack.c.h.b16 %v271
    %v496 = vunpack.c.l.b16 %v272
    %v497 = vunpack.c.h.b16 %v272
    %v498 = vunpack.c.l.b16 %v273
    %v499 = vunpack.c.h.b16 %v273
    %v500 = vunpack.c.l.b16 %v274
    %v501 = vunpack.c.h.b16 %v274
    %v502 = vunpack.c.l.b16 %v275
    %v503 = vunpack.c.h.b16 %v275
    %v504 = vunpack.c.l.b16 %v276
    %v505 = vunpack.c.h.b16 %v276
    %v506 = vunpack.c.l.b16 %v277
    %v507 = vunpack.c.h.b16 %v277
    %v508 = vunpack.c.l.b16 %v278
    %v509 = vunpack.c.h.b16 %v278
    %v510 = vunpack.c.l.b16 %v279
    %v511 = vunpack.c.h.b16 %v279
    %v512 = vunpack.c.l.b16 %v280
    %v513 = vunpack.c.h.b16 %v280
    %v514 = vunpack.c.l.b16 %v281
    %v515 = vunpack.c.h.b16 %v281
    %v516 = vunpack.c.l.b16 %v282
    %v517 = vunpack.c.h.b16 %v282
    %v518 = vunpack.c.l.b16 %v283
    %v519 = vunpack.c.h.b16 %v283
    %v520 = vunpack.c.l.b16 %v284
    %v521 = vunpack.c.h.b16 %v284
    %v522 = vunpack.c.l.b16 %v285
    %v523 = vunpack.c.h.b16 %v285
    %v524 = vunpack.c.l.b16 %v286
    %v525 = vunpack.c.h.b16 %v286
    %v526 = vunpack.c.l.b16 %v287
    %v527 = vunpack.c.h.b16 %v287
    %v528 = vunpack.c.l.b16 %v288
    %v529 = vunpack.c.h.b16 %v288
    %v530 = vunpack.c.l.b16 %v289
    %v531 = vunpack.c.h.b16 %v289
    %v532 = vunpack.c.l.b16 %v290
    %v533 = vunpack.c.h.b16 %v290
    %v534 = vunpack.c.l.b16 %v291
    %v535 = vunpack.c.h.b16 %v291
    %v536 = vunpack.c.l.b16 %v292
    %v537 = vunpack.c.h.b16 %v292
    %v538 = vunpack.c.l.b16 %v293
    %v539 = vunpack.c.h.b16 %v293
    %v540 = vunpack.c.l.b16 %v294
    %v541 = vunpack.c.h.b16 %v294
    %v542 = vunpack.c.l.b16 %v295
    %v543 = vunpack.c.h.b16 %v295
    %v544 = vunpack.c.l.b16 %v296
    %v545 = vunpack.c.h.b16 %v296
    %v546 = vunpack.c.l.b16 %v297
    %v547 = vunpack.c.h.b16 %v297
    %v548 = vunpack.c.l.b16 %v298
    %v549 = vunpack.c.h.b16 %v298
    %v550 = vunpack.c.l.b16 %v299
    %v551 = vunpack.c.h.b16 %v299
    %v552 = vunpack.c.l.b16 %v300
    %v553 = vunpack.c.h.b16 %v300
    %v554 = vunpack.c.l.b16 %v301
    %v555 = vunpack.c.h.b16 %v301
    %v556 = vunpack.c.l.b16 %v302
    %v557 = vunpack.c.h.b16 %v302
    %v558 = vunpack.c.l.b16 %v303
    %v559 = vunpack.c.h.b16 %v303
    %v560 = vunpack.c.l.b16 %v304
    %v561 = vunpack.c.h.b16 %v304
    %v562 = vunpack.c.l.b16 %v305
    %v563 = vunpack.c.h.b16 %v305
    %v564 = vunpack.c.l.b16 %v306
    %v565 = vunpack.c.h.b16 %v306
    %v566 = vunpack.c.l.b16 %v307
    %v567 = vunpack.c.h.b16 %v307
    %v568 = vunpack.c.l.b16 %v308
    %v569 = vunpack.c.h.b16 %v308
    %v570 = vunpack.c.l.b16 %v309
    %v571 = vunpack.c.h.b16 %v309
    %v572 = vunpack.c.l.b16 %v310
    %v573 = vunpack.c.h.b16 %v310
    %v574 = vunpack.c.l.b16 %v311
    %v575 = vunpack.c.h.b16 %v311
    %v576 = vunpack.c.l.b16 %v312
    %v577 = vunpack.c.h.b16 %v312
    %v578 = vunpack.c.l.b16 %v313
    %v579 = vunpack.c.h.b16 %v313
    %v580 = vunpack.c.l.b16 %v314
    %v581 = vunpack.c.h.b16 %v314
    %v582 = vunpack.c.l.b16 %v315
    %v583 = vunpack.c.h.b16 %v315
    %v584 = vunpack.c.l.b16 %v316
    %v585 = vunpack.c.h.b16 %v316
    %v586 = vunpack.c.l.b16 %v317
    %v587 = vunpack.c.h.b16 %v317
    %v588 = vunpack.c.l.b16 %v318
    %v589 = vunpack.c.h.b16 %v318
    %v590 = vunpack.c.l.b16 %v319
    %v591 = vunpack.c.h.b16 %v319
    %v592 = vunpack.c.l.b16 %v320
    %v593 = vunpack.c.h.b16 %v320
    %v594 = vunpack.c.l.b16 %v321
    %v595 = vunpack.c.h.b16 %v321
    %v596 = vunpack.c.l.b16 %v322
    %v597 = vunpack.c.h.b16 %v322
    %v598 = vunpack.c.l.b16 %v323
    %v599 = vunpack.c.h.b16 %v323
    %v600 = vunpack.c.l.b16 %v324
    %v601 = vunpack.c.h.b16 %v324
    %v602 = vunpack.c.l.b16 %v325
    %v603 = vunpack.c.h.b16 %v325
    %v604 = vunpack.c.l.b16 %v326
    %v605 = vunpack.c.h.b16 %v326
    %v606 = vunpack.c.l.b16 %v327
    %v607 = vunpack.c.h.b16 %v327
    %v608 = vunpack.c.l.b16 %v328
    %v609 = vunpack.c.h.b16 %v328
    %v610 = vunpack.c.l.b16 %v329
    %v611 = vunpack.c.h.b16 %v329
    %v612 = vunpack.c.l.b16 %v330
    %v613 = vunpack.c.h.b16 %v330
    %v614 = vunpack.c.l.b16 %v331
    %v615 = vunpack.c.h.b16 %v331
    %v616 = vunpack.c.l.b16 %v332
    %v617 = vunpack.c.h.b16 %v332
    %v618 = vunpack.c.l.b16 %v333
    %v619 = vunpack.c.h.b16 %v333
    %v620 = vunpack.c.l.b16 %v334
    %v621 = vunpack.c.h.b16 %v334
    %v622 = vunpack.c.l.b16 %v335
    %v623 = vunpack.c.h.b16 %v335
    %v624 = vpack.c.b16 %v438, %v432
    %v625 = vpack.c.b16 %v439, %v433
    %v626 = vpack.c.b16 %v440, %v434
    %v627 = vpack.c.b16 %v441, %v435
    %v628 = vpack.c.b16 %v442, %v436
    %v629 = vpack.c.b16 %v443, %v437
    %v630 = vpack.c.b16 %v450, %v444
    %v631 = vpack.c.b16 %v451, %v445
    %v632 = vpack.c.b16 %v452, %v446
    %v633 = vpack.c.b16 %v453, %v447
    %v634 = vpack.c.b16 %v454, %v448
    %v635 = vpack.c.b16 %v455, %v449
    %v636 = vpack.c.b16 %v462, %v456
    %v637 = vpack.c.b16 %v463, %v457
    %v638 = vpack.c.b16 %v464, %v458
    %v639 = vpack.c.b16 %v465, %v459
    %v640 = vpack.c.b16 %v466, %v460
    %v641 = vpack.c.b16 %v467, %v461
    %v642 = vpack.c.b16 %v474, %v468
    %v643 = vpack.c.b16 %v475, %v469
    %v644 = vpack.c.b16 %v476, %v470
    %v645 = vpack.c.b16 %v477, %v471
    %v646 = vpack.c.b16 %v478, %v472
    %v647 = vpack.c.b16 %v479, %v473
    %v648 = vpack.c.b16 %v486, %v480
    %v649 = vpack.c.b16 %v487, %v481
    %v650 = vpack.c.b16 %v488, %v482
    %v651 = vpack.c.b16 %v489, %v483
    %v652 = vpack.c.b16 %v490, %v484
    %v653 = vpack.c.b16 %v491, %v485
    %v654 = vpack.c.b16 %v498, %v492
    %v655 = vpack.c.b16 %v499, %v493
    %v656 = vpack.c.b16 %v500, %v494
    %v657 = vpack.c.b16 %v501, %v495
    %v658 = vpack.c.b16 %v502, %v496
    %v659 = vpack.c.b16 %v503, %v497
    %v660 = vpack.c.b16 %v510, %v504
    %v661 = vpack.c.b16 %v511, %v505
    %v662 = vpack.c.b16 %v512, %v506
    %v663 = vpack.c.b16 %v513, %v507
    %v664 = vpack.c.b16 %v514, %v508
    %v665 = vpack.c.b16 %v515, %v509
    %v666 = vpack.c.b16 %v522, %v516
    %v667 = vpack.c.b16 %v523, %v517
    %v668 = vpack.c.b16 %v524, %v518
    %v669 = vpack.c.b16 %v525, %v519
    %v670 = vpack.c.b16 %v526, %v520
    %v671 = vpack.c.b16 %v527, %v521
    %v672 = vpack.c.b16 %v534, %v528
    %v673 = vpack.c.b16 %v535, %v529
    %v674 = vpack.c.b16 %v536, %v530
    %v675 = vpack.c.b16 %v537, %v531
    %v676 = vpack.c.b16 %v538, %v532
    %v677 = vpack.c.b16 %v539, %v533
    %v678 = vpack.c.b16 %v546, %v540
    %v679 = vpack.c.b16 %v547, %v541
    %v680 = vpack.c.b16 %v548, %v542
    %v681 = vpack.c.b16 %v549, %v543
    %v682 = vpack.c.b16 %v550, %v544
    %v683 = vpack.c.b16 %v551, %v545
    %v684 = vpack.c.b16 %v558, %v552
    %v685 = vpack.c.b16 %v559, %v553
    %v686 = vpack.c.b16 %v560, %v554
    %v687 = vpack.c.b16 %v561, %v555
    %v688 = vpack.c.b16 %v562, %v556
    %v689 = vpack.c.b16 %v563, %v557
    %v690 = vpack.c.b16 %v570, %v564
    %v691 = vpack.c.b16 %v571, %v565
    %v692 = vpack.c.b16 %v572, %v566
    %v693 = vpack.c.b16 %v573, %v567
    %v694 = vpack.c.b16 %v574, %v568
    %v695 = vpack.c.b16 %v575, %v569
    %v696 = vpack.c.b16 %v582, %v576
    %v697 = vpack.c.b16 %v583, %v577
    %v698 = vpack.c.b16 %v584, %v578
    %v699 = vpack.c.b16 %v585, %v579
    %v700 = vpack.c.b16 %v586, %v580
    %v701 = vpack.c.b16 %v587, %v581
    %v702 = vpack.c.b16 %v594, %v588
    %v703 = vpack.c.b16 %v595, %v589
    %v704 = vpack.c.b16 %v596, %v590
    %v705 = vpack.c.b16 %v597, %v591
    %v706 = vpack.c.b16 %v598, %v592
    %v707 = vpack.c.b16 %v599, %v593
    %v708 = vpack.c.b16 %v606, %v600
    %v709 = vpack.c.b16 %v607, %v601
    %v710 = vpack.c.b16 %v608, %v602
    %v711 = vpack.c.b16 %v609, %v603
    %v712 = vpack.c.b16 %v610, %v604
    %v713 = vpack.c.b16 %v611, %v605
    %v714 = vpack.c.b16 %v618, %v612
    %v715 = vpack.c.b16 %v619, %v613
    %v716 = vpack.c.b16 %v620, %v614
    %v717 = vpack.c.b16 %v621, %v615
    %v718 = vpack.c.b16 %v622, %v616
    %v719 = vpack.c.b16 %v623, %v617
    %816 = vmatprep.subr.bf16.mxu0 %v667
    %817 = vmatpush1.bf16.msra.mxu0 %v666
    %818 = vmatprep.subr.bf16.mxu0 %v661
    %819 = vmatpush1.bf16.msra.mxu0 %v660
    %820 = vmatprep.subr.bf16.mxu0 %v655
    %821 = vmatpush1.bf16.msra.mxu0 %v654
    %822 = vmatprep.subr.bf16.mxu0 %v649
    %823 = vmatpush1.bf16.msra.mxu0 %v648
    %824 = vmatprep.subr.bf16.mxu0 %v643
    %825 = vmatpush1.bf16.msra.mxu0 %v642
    %826 = vmatprep.subr.bf16.mxu0 %v637
    %827 = vmatpush1.bf16.msra.mxu0 %v636
    %828 = vmatprep.subr.bf16.mxu0 %v631
    %829 = vmatpush1.bf16.msra.mxu0 %v630
    %830 = vmatprep.subr.bf16.mxu0 %v625
    %831 = vmatpush1.bf16.msra.mxu0 %v624
    %832 = vmatprep.subr.bf16.mxu0 %v715
    %833 = vmatpush2.bf16.msra.mxu0 %v714
    %834 = vmatprep.subr.bf16.mxu0 %v709
    %835 = vmatpush2.bf16.msra.mxu0 %v708
    %836 = vmatprep.subr.bf16.mxu0 %v703
    %837 = vmatpush2.bf16.msra.mxu0 %v702
    %838 = vmatprep.subr.bf16.mxu0 %v697
    %839 = vmatpush2.bf16.msra.mxu0 %v696
    %840 = vmatprep.subr.bf16.mxu0 %v691
    %841 = vmatpush2.bf16.msra.mxu0 %v690
    %842 = vmatprep.subr.bf16.mxu0 %v685
    %843 = vmatpush2.bf16.msra.mxu0 %v684
    %844 = vmatprep.subr.bf16.mxu0 %v679
    %845 = vmatpush2.bf16.msra.mxu0 %v678
    %846 = vmatprep.subr.bf16.mxu0 %v673
    %847 = vmatpush2.bf16.msra.mxu0 %v672
    %848 = vmatprep.mubr.bf16.mxu0 %v237
    %849 = vmatmul.mubr.bf16.gmra.mxu0 %v236
    %v850 = vpop.f32.mrf.mxu0
    %v851 = vadd.f32 0.0, %v850
    %v852 = vpop.f32.mrf.mxu0
    %v853 = vadd.f32 0.0, %v852
    %v854 = vpop.f32.mrf.mxu0
    %v855 = vadd.f32 0.0, %v854
    %v856 = vpop.f32.mrf.mxu0
    %v857 = vadd.f32 0.0, %v856
    %858 = vmatprep.mubr.bf16.mxu0 %v239
    %859 = vmatmul.mubr.bf16.gmra.mxu0 %v238
    %v860 = vpop.f32.mrf.mxu0
    %v861 = vadd.f32 0.0, %v860
    %v862 = vpop.f32.mrf.mxu0
    %v863 = vadd.f32 0.0, %v862
    %v864 = vpop.f32.mrf.mxu0
    %v865 = vadd.f32 0.0, %v864
    %v866 = vpop.f32.mrf.mxu0
    %v867 = vadd.f32 0.0, %v866
    %868 = vdwg.mxu0
    %869 = vmatprep.subr.bf16.mxu0 %v669
    %870 = vmatpush1.bf16.msra.mxu0 %v668
    %871 = vmatprep.subr.bf16.mxu0 %v663
    %872 = vmatpush1.bf16.msra.mxu0 %v662
    %873 = vmatprep.subr.bf16.mxu0 %v657
    %874 = vmatpush1.bf16.msra.mxu0 %v656
    %875 = vmatprep.subr.bf16.mxu0 %v651
    %876 = vmatpush1.bf16.msra.mxu0 %v650
    %877 = vmatprep.subr.bf16.mxu0 %v645
    %878 = vmatpush1.bf16.msra.mxu0 %v644
    %879 = vmatprep.subr.bf16.mxu0 %v639
    %880 = vmatpush1.bf16.msra.mxu0 %v638
    %881 = vmatprep.subr.bf16.mxu0 %v633
    %882 = vmatpush1.bf16.msra.mxu0 %v632
    %883 = vmatprep.subr.bf16.mxu0 %v627
    %884 = vmatpush1.bf16.msra.mxu0 %v626
    %885 = vmatprep.subr.bf16.mxu0 %v717
    %886 = vmatpush2.bf16.msra.mxu0 %v716
    %887 = vmatprep.subr.bf16.mxu0 %v711
    %888 = vmatpush2.bf16.msra.mxu0 %v710
    %889 = vmatprep.subr.bf16.mxu0 %v705
    %890 = vmatpush2.bf16.msra.mxu0 %v704
    %891 = vmatprep.subr.bf16.mxu0 %v699
    %892 = vmatpush2.bf16.msra.mxu0 %v698
    %893 = vmatprep.subr.bf16.mxu0 %v693
    %894 = vmatpush2.bf16.msra.mxu0 %v692
    %895 = vmatprep.subr.bf16.mxu0 %v687
    %896 = vmatpush2.bf16.msra.mxu0 %v686
    %897 = vmatprep.subr.bf16.mxu0 %v681
    %898 = vmatpush2.bf16.msra.mxu0 %v680
    %899 = vmatprep.subr.bf16.mxu0 %v675
    %900 = vmatpush2.bf16.msra.mxu0 %v674
    %901 = vmatprep.mubr.bf16.mxu0 %v237
    %902 = vmatmul.mubr.bf16.gmra.mxu0 %v236
    %v903 = vpop.f32.mrf.mxu0
    %v904 = vadd.f32 0.0, %v903
    %v905 = vpop.f32.mrf.mxu0
    %v906 = vadd.f32 0.0, %v905
    %v907 = vpop.f32.mrf.mxu0
    %v908 = vadd.f32 0.0, %v907
    %v909 = vpop.f32.mrf.mxu0
    %v910 = vadd.f32 0.0, %v909
    %911 = vmatprep.mubr.bf16.mxu0 %v239
    %912 = vmatmul.mubr.bf16.gmra.mxu0 %v238
    %v913 = vpop.f32.mrf.mxu0
    %v914 = vadd.f32 0.0, %v913
    %v915 = vpop.f32.mrf.mxu0
    %v916 = vadd.f32 0.0, %v915
    %v917 = vpop.f32.mrf.mxu0
    %v918 = vadd.f32 0.0, %v917
    %v919 = vpop.f32.mrf.mxu0
    %v920 = vadd.f32 0.0, %v919
    %921 = vdwg.mxu0
    %922 = vmatprep.subr.bf16.mxu0 %v671
    %923 = vmatpush1.bf16.msra.mxu0 %v670
    %924 = vmatprep.subr.bf16.mxu0 %v665
    %925 = vmatpush1.bf16.msra.mxu0 %v664
    %926 = vmatprep.subr.bf16.mxu0 %v659
    %927 = vmatpush1.bf16.msra.mxu0 %v658
    %928 = vmatprep.subr.bf16.mxu0 %v653
    %929 = vmatpush1.bf16.msra.mxu0 %v652
    %930 = vmatprep.subr.bf16.mxu0 %v647
    %931 = vmatpush1.bf16.msra.mxu0 %v646
    %932 = vmatprep.subr.bf16.mxu0 %v641
    %933 = vmatpush1.bf16.msra.mxu0 %v640
    %934 = vmatprep.subr.bf16.mxu0 %v635
    %935 = vmatpush1.bf16.msra.mxu0 %v634
    %936 = vmatprep.subr.bf16.mxu0 %v629
    %937 = vmatpush1.bf16.msra.mxu0 %v628
    %938 = vmatprep.subr.bf16.mxu0 %v719
    %939 = vmatpush2.bf16.msra.mxu0 %v718
    %940 = vmatprep.subr.bf16.mxu0 %v713
    %941 = vmatpush2.bf16.msra.mxu0 %v712
    %942 = vmatprep.subr.bf16.mxu0 %v707
    %943 = vmatpush2.bf16.msra.mxu0 %v706
    %944 = vmatprep.subr.bf16.mxu0 %v701
    %945 = vmatpush2.bf16.msra.mxu0 %v700
    %946 = vmatprep.subr.bf16.mxu0 %v695
    %947 = vmatpush2.bf16.msra.mxu0 %v694
    %948 = vmatprep.subr.bf16.mxu0 %v689
    %949 = vmatpush2.bf16.msra.mxu0 %v688
    %950 = vmatprep.subr.bf16.mxu0 %v683
    %951 = vmatpush2.bf16.msra.mxu0 %v682
    %952 = vmatprep.subr.bf16.mxu0 %v677
    %953 = vmatpush2.bf16.msra.mxu0 %v676
    %954 = vmatprep.mubr.bf16.mxu0 %v237
    %955 = vmatmul.mubr.bf16.gmra.mxu0 %v236
    %v956 = vpop.f32.mrf.mxu0
    %v957 = vadd.f32 0.0, %v956
    %v958 = vpop.f32.mrf.mxu0
    %v959 = vadd.f32 0.0, %v958
    %v960 = vpop.f32.mrf.mxu0
    %v961 = vadd.f32 0.0, %v960
    %v962 = vpop.f32.mrf.mxu0
    %v963 = vadd.f32 0.0, %v962
    %964 = vmatprep.mubr.bf16.mxu0 %v239
    %965 = vmatmul.mubr.bf16.gmra.mxu0 %v238
    %v966 = vpop.f32.mrf.mxu0
    %v967 = vadd.f32 0.0, %v966
    %v968 = vpop.f32.mrf.mxu0
    %v969 = vadd.f32 0.0, %v968
    %v970 = vpop.f32.mrf.mxu0
    %v971 = vadd.f32 0.0, %v970
    %v972 = vpop.f32.mrf.mxu0
    %v973 = vadd.f32 0.0, %v972
    %974 = vdwg.mxu0
    %v975 = vpack.c.bf16 %v855, %v851
    %v976 = vpack.c.bf16 %v857, %v853
    %v977 = vpack.c.bf16 %v908, %v904
    %v978 = vpack.c.bf16 %v910, %v906
    %v979 = vpack.c.bf16 %v961, %v957
    %v980 = vpack.c.bf16 %v963, %v959
    %v981 = vpack.c.bf16 %v865, %v861
    %v982 = vpack.c.bf16 %v867, %v863
    %v983 = vpack.c.bf16 %v918, %v914
    %v984 = vpack.c.bf16 %v920, %v916
    %v985 = vpack.c.bf16 %v971, %v967
    %v986 = vpack.c.bf16 %v973, %v969
    %v987 = vlaneseq
    %v988 = vshrl.u32 %v987, 7
    %v989 = vadd.s32 %v988, 8
    %v990 = vlaneseq
    %v991 = vand.u32 %v990, 127
    %vm992 = vcmp.gt.s32.totalorder %v991, %v988
    %vm993 = vcmp.gt.s32.totalorder %v991, %v989
    %994 = vmatprep.subr.bf16.mxu0 0
    %995 = vmatpush1.bf16.xpose.msra.mxu0 0
    %996 = vmatprep.subr.bf16.mxu0 0
    %997 = vmatpush1.bf16.xpose.msra.mxu0 0
    %998 = vmatprep.subr.bf16.mxu0 0
    %999 = vmatpush1.bf16.xpose.msra.mxu0 0
    %1000 = vmatprep.subr.bf16.mxu0 0
    %1001 = vmatpush1.bf16.xpose.msra.mxu0 0
    %1002 = vmatprep.subr.bf16.mxu0 0
    %1003 = vmatpush1.bf16.xpose.msra.mxu0 0
    %1004 = vmatprep.subr.bf16.mxu0 0
    %1005 = vmatpush1.bf16.xpose.msra.mxu0 0
    %1006 = vmatprep.subr.bf16.mxu0 0
    %1007 = vmatpush1.bf16.xpose.msra.mxu0 0
    %1008 = vmatprep.subr.bf16.mxu0 0
    %1009 = vmatpush1.bf16.xpose.msra.mxu0 %v977
    %1010 = vmatprep.subr.bf16.mxu0 0
    %1011 = vmatpush2.bf16.xpose.msra.mxu0 0
    %1012 = vmatprep.subr.bf16.mxu0 0
    %1013 = vmatpush2.bf16.xpose.msra.mxu0 0
    %1014 = vmatprep.subr.bf16.mxu0 0
    %1015 = vmatpush2.bf16.xpose.msra.mxu0 0
    %1016 = vmatprep.subr.bf16.mxu0 0
    %1017 = vmatpush2.bf16.xpose.msra.mxu0 0
    %1018 = vmatprep.subr.bf16.mxu0 0
    %1019 = vmatpush2.bf16.xpose.msra.mxu0 0
    %1020 = vmatprep.subr.bf16.mxu0 0
    %1021 = vmatpush2.bf16.xpose.msra.mxu0 0
    %1022 = vmatprep.subr.bf16.mxu0 0
    %1023 = vmatpush2.bf16.xpose.msra.mxu0 0
    %1024 = vmatprep.subr.bf16.mxu0 0
    %1025 = vmatpush2.bf16.xpose.msra.mxu0 0
    %1026 = vmatprep.mubr.bf16.mxu0 0
    %1027 = vmatmul.mubr.bf16.gmra.mxu0 %v975
    %v1028 = vpop.f32.mrf.mxu0
    %v1029 = vadd.f32 0.0, %v1028
    %v1030 = vpop.f32.mrf.mxu0
    %v1031 = vpop.f32.mrf.mxu0
    %v1032 = vadd.f32 0.0, %v1031
    %v1033 = vpop.f32.mrf.mxu0
    %1034 = vdwg.mxu0
    %v1035 = vsel %vm992, -inf, %v1029
    %v1036 = vsel %vm993, -inf, %v1032
    %vm1037 = vcmask 130048
    %v1038 = vsel %vm1037, %v1035, -inf
    %1039 = vmax.xlane.f32.xlu0 %v1038
    %v1040 = vpop.xlane.xlu0 %1039
    %v1041 = vsel %vm1037, %v1036, -inf
    %1042 = vmax.xlane.f32.xlu0 %v1041
    %v1043 = vpop.xlane.xlu0 %1042
    %v1044 = vsub.f32 %v1035, %v1040
    %v1045 = vsub.f32 %v1036, %v1043
    %v1046 = vmul.f32 %v1044, 1.442695
    %v1047 = vpow.pop %v1046
    %v1048 = vmul.f32 %v1045, 1.442695
    %v1049 = vpow.pop %v1048
    %v1050 = vsel %vm1037, %v1047, 0.0
    %1051 = vadd.xlane.f32.xlu0 %v1050
    %v1052 = vpop.xlane.xlu0 %1051
    %v1053 = vsel %vm1037, %v1049, 0.0
    %1054 = vadd.xlane.f32.xlu0 %v1053
    %v1055 = vpop.xlane.xlu0 %1054
    %v1056 = vrcp.pop %v1052
    %v1057 = vrcp.pop %v1055
    %v1058 = vmul.f32 %v1047, %v1056
    %v1059 = vmul.f32 %v1049, %v1057
    %v1060 = vpack.c.bf16 %v1059, %v1058
    %v1062 = vsel %vm1037, %v1060, 0
    %1064 = vmatprep.subr.bf16.mxu0 0
    %1065 = vmatpush1.bf16.msra.mxu0 0
    %1066 = vmatprep.subr.bf16.mxu0 0
    %1067 = vmatpush1.bf16.msra.mxu0 0
    %1068 = vmatprep.subr.bf16.mxu0 0
    %1069 = vmatpush1.bf16.msra.mxu0 0
    %1070 = vmatprep.subr.bf16.mxu0 0
    %1071 = vmatpush1.bf16.msra.mxu0 0
    %1072 = vmatprep.subr.bf16.mxu0 0
    %1073 = vmatpush1.bf16.msra.mxu0 0
    %1074 = vmatprep.subr.bf16.mxu0 0
    %1075 = vmatpush1.bf16.msra.mxu0 0
    %1076 = vmatprep.subr.bf16.mxu0 0
    %1077 = vmatpush1.bf16.msra.mxu0 0
    %1078 = vmatprep.subr.bf16.mxu0 0
    %1079 = vmatpush1.bf16.msra.mxu0 %v979
    %1080 = vmatprep.subr.bf16.mxu0 0
    %1081 = vmatpush2.bf16.msra.mxu0 0
    %1082 = vmatprep.subr.bf16.mxu0 0
    %1083 = vmatpush2.bf16.msra.mxu0 0
    %1084 = vmatprep.subr.bf16.mxu0 0
    %1085 = vmatpush2.bf16.msra.mxu0 0
    %1086 = vmatprep.subr.bf16.mxu0 0
    %1087 = vmatpush2.bf16.msra.mxu0 0
    %1088 = vmatprep.subr.bf16.mxu0 0
    %1089 = vmatpush2.bf16.msra.mxu0 0
    %1090 = vmatprep.subr.bf16.mxu0 0
    %1091 = vmatpush2.bf16.msra.mxu0 0
    %1092 = vmatprep.subr.bf16.mxu0 0
    %1093 = vmatpush2.bf16.msra.mxu0 0
    %1094 = vmatprep.subr.bf16.mxu0 0
    %1095 = vmatpush2.bf16.msra.mxu0 0
    %1096 = vmatprep.mubr.bf16.mxu0 0
    %1097 = vmatmul.mubr.bf16.gmra.mxu0 %v1062
    %v1098 = vpop.f32.mrf.mxu0
    %v1099 = vadd.f32 0.0, %v1098
    %v1100 = vpop.f32.mrf.mxu0
    %v1101 = vpop.f32.mrf.mxu0
    %v1102 = vadd.f32 0.0, %v1101
    %v1103 = vpop.f32.mrf.mxu0
    %1104 = vdwg.mxu0
    %v1105 = vpack.c.bf16 %v1102, %v1099
    %v1107 = vunpack.c.l.b16 %v1105
    %v1108 = vunpack.c.h.b16 %v1105
    %v1109 = vpack.c.b16 %v1107, %v1107
    %v1110 = vpack.c.b16 %v1108, %v1108
    %1113 = vst [vmem:[#allocation2] sm:$0xf] %v1109
    %1114 = vst [vmem:[#allocation2 + $0x8] sm:$0xf] %v1110
    %1115 = vmatprep.subr.bf16.mxu0 0
    %1116 = vmatpush1.bf16.xpose.msra.mxu0 0
    %1117 = vmatprep.subr.bf16.mxu0 0
    %1118 = vmatpush1.bf16.xpose.msra.mxu0 0
    %1119 = vmatprep.subr.bf16.mxu0 0
    %1120 = vmatpush1.bf16.xpose.msra.mxu0 0
    %1121 = vmatprep.subr.bf16.mxu0 0
    %1122 = vmatpush1.bf16.xpose.msra.mxu0 0
    %1123 = vmatprep.subr.bf16.mxu0 0
    %1124 = vmatpush1.bf16.xpose.msra.mxu0 0
    %1125 = vmatprep.subr.bf16.mxu0 0
    %1126 = vmatpush1.bf16.xpose.msra.mxu0 0
    %1127 = vmatprep.subr.bf16.mxu0 0
    %1128 = vmatpush1.bf16.xpose.msra.mxu0 0
    %1129 = vmatprep.subr.bf16.mxu0 0
    %1130 = vmatpush1.bf16.xpose.msra.mxu0 %v978
    %1131 = vmatprep.subr.bf16.mxu0 0
    %1132 = vmatpush2.bf16.xpose.msra.mxu0 0
    %1133 = vmatprep.subr.bf16.mxu0 0
    %1134 = vmatpush2.bf16.xpose.msra.mxu0 0
    %1135 = vmatprep.subr.bf16.mxu0 0
    %1136 = vmatpush2.bf16.xpose.msra.mxu0 0
    %1137 = vmatprep.subr.bf16.mxu0 0
    %1138 = vmatpush2.bf16.xpose.msra.mxu0 0
    %1139 = vmatprep.subr.bf16.mxu0 0
    %1140 = vmatpush2.bf16.xpose.msra.mxu0 0
    %1141 = vmatprep.subr.bf16.mxu0 0
    %1142 = vmatpush2.bf16.xpose.msra.mxu0 0
    %1143 = vmatprep.subr.bf16.mxu0 0
    %1144 = vmatpush2.bf16.xpose.msra.mxu0 0
    %1145 = vmatprep.subr.bf16.mxu0 0
    %1146 = vmatpush2.bf16.xpose.msra.mxu0 0
    %1147 = vmatprep.mubr.bf16.mxu0 0
    %1148 = vmatmul.mubr.bf16.gmra.mxu0 %v976
    %v1149 = vpop.f32.mrf.mxu0
    %v1150 = vadd.f32 0.0, %v1149
    %v1151 = vpop.f32.mrf.mxu0
    %v1152 = vpop.f32.mrf.mxu0
    %v1153 = vadd.f32 0.0, %v1152
    %v1154 = vpop.f32.mrf.mxu0
    %1155 = vdwg.mxu0
    %v1156 = vsel %vm992, -inf, %v1150
    %v1157 = vsel %vm993, -inf, %v1153
    %v1158 = vsel %vm1037, %v1156, -inf
    %1159 = vmax.xlane.f32.xlu0 %v1158
    %v1160 = vpop.xlane.xlu0 %1159
    %v1161 = vsel %vm1037, %v1157, -inf
    %1162 = vmax.xlane.f32.xlu0 %v1161
    %v1163 = vpop.xlane.xlu0 %1162
    %v1164 = vsub.f32 %v1156, %v1160
    %v1165 = vsub.f32 %v1157, %v1163
    %v1166 = vmul.f32 %v1164, 1.442695
    %v1167 = vpow.pop %v1166
    %v1168 = vmul.f32 %v1165, 1.442695
    %v1169 = vpow.pop %v1168
    %v1170 = vsel %vm1037, %v1167, 0.0
    %1171 = vadd.xlane.f32.xlu0 %v1170
    %v1172 = vpop.xlane.xlu0 %1171
    %v1173 = vsel %vm1037, %v1169, 0.0
    %1174 = vadd.xlane.f32.xlu0 %v1173
    %v1175 = vpop.xlane.xlu0 %1174
    %v1176 = vrcp.pop %v1172
    %v1177 = vrcp.pop %v1175
    %v1178 = vmul.f32 %v1167, %v1176
    %v1179 = vmul.f32 %v1169, %v1177
    %v1180 = vpack.c.bf16 %v1179, %v1178
    %v1182 = vsel %vm1037, %v1180, 0
    %1184 = vmatprep.subr.bf16.mxu0 0
    %1185 = vmatpush1.bf16.msra.mxu0 0
    %1186 = vmatprep.subr.bf16.mxu0 0
    %1187 = vmatpush1.bf16.msra.mxu0 0
    %1188 = vmatprep.subr.bf16.mxu0 0
    %1189 = vmatpush1.bf16.msra.mxu0 0
    %1190 = vmatprep.subr.bf16.mxu0 0
    %1191 = vmatpush1.bf16.msra.mxu0 0
    %1192 = vmatprep.subr.bf16.mxu0 0
    %1193 = vmatpush1.bf16.msra.mxu0 0
    %1194 = vmatprep.subr.bf16.mxu0 0
    %1195 = vmatpush1.bf16.msra.mxu0 0
    %1196 = vmatprep.subr.bf16.mxu0 0
    %1197 = vmatpush1.bf16.msra.mxu0 0
    %1198 = vmatprep.subr.bf16.mxu0 0
    %1199 = vmatpush1.bf16.msra.mxu0 %v980
    %1200 = vmatprep.subr.bf16.mxu0 0
    %1201 = vmatpush2.bf16.msra.mxu0 0
    %1202 = vmatprep.subr.bf16.mxu0 0
    %1203 = vmatpush2.bf16.msra.mxu0 0
    %1204 = vmatprep.subr.bf16.mxu0 0
    %1205 = vmatpush2.bf16.msra.mxu0 0
    %1206 = vmatprep.subr.bf16.mxu0 0
    %1207 = vmatpush2.bf16.msra.mxu0 0
    %1208 = vmatprep.subr.bf16.mxu0 0
    %1209 = vmatpush2.bf16.msra.mxu0 0
    %1210 = vmatprep.subr.bf16.mxu0 0
    %1211 = vmatpush2.bf16.msra.mxu0 0
    %1212 = vmatprep.subr.bf16.mxu0 0
    %1213 = vmatpush2.bf16.msra.mxu0 0
    %1214 = vmatprep.subr.bf16.mxu0 0
    %1215 = vmatpush2.bf16.msra.mxu0 0
    %1216 = vmatprep.mubr.bf16.mxu0 0
    %1217 = vmatmul.mubr.bf16.gmra.mxu0 %v1182
    %v1218 = vpop.f32.mrf.mxu0
    %v1219 = vadd.f32 0.0, %v1218
    %v1220 = vpop.f32.mrf.mxu0
    %v1221 = vpop.f32.mrf.mxu0
    %v1222 = vadd.f32 0.0, %v1221
    %v1223 = vpop.f32.mrf.mxu0
    %1224 = vdwg.mxu0
    %v1225 = vpack.c.bf16 %v1222, %v1219
    %v1227 = vunpack.c.l.b16 %v1225
    %v1228 = vunpack.c.h.b16 %v1225
    %v1229 = vpack.c.b16 %v1227, %v1227
    %v1230 = vpack.c.b16 %v1228, %v1228
    %1233 = vst [vmem:[#allocation2 + $0x4] sm:$0xf] %v1229
    %1234 = vst [vmem:[#allocation2 + $0xc] sm:$0xf] %v1230
    %1235 = vmatprep.subr.bf16.mxu0 0
    %1236 = vmatpush1.bf16.xpose.msra.mxu0 0
    %1237 = vmatprep.subr.bf16.mxu0 0
    %1238 = vmatpush1.bf16.xpose.msra.mxu0 0
    %1239 = vmatprep.subr.bf16.mxu0 0
    %1240 = vmatpush1.bf16.xpose.msra.mxu0 0
    %1241 = vmatprep.subr.bf16.mxu0 0
    %1242 = vmatpush1.bf16.xpose.msra.mxu0 0
    %1243 = vmatprep.subr.bf16.mxu0 0
    %1244 = vmatpush1.bf16.xpose.msra.mxu0 0
    %1245 = vmatprep.subr.bf16.mxu0 0
    %1246 = vmatpush1.bf16.xpose.msra.mxu0 0
    %1247 = vmatprep.subr.bf16.mxu0 0
    %1248 = vmatpush1.bf16.xpose.msra.mxu0 0
    %1249 = vmatprep.subr.bf16.mxu0 0
    %1250 = vmatpush1.bf16.xpose.msra.mxu0 %v983
    %1251 = vmatprep.subr.bf16.mxu0 0
    %1252 = vmatpush2.bf16.xpose.msra.mxu0 0
    %1253 = vmatprep.subr.bf16.mxu0 0
    %1254 = vmatpush2.bf16.xpose.msra.mxu0 0
    %1255 = vmatprep.subr.bf16.mxu0 0
    %1256 = vmatpush2.bf16.xpose.msra.mxu0 0
    %1257 = vmatprep.subr.bf16.mxu0 0
    %1258 = vmatpush2.bf16.xpose.msra.mxu0 0
    %1259 = vmatprep.subr.bf16.mxu0 0
    %1260 = vmatpush2.bf16.xpose.msra.mxu0 0
    %1261 = vmatprep.subr.bf16.mxu0 0
    %1262 = vmatpush2.bf16.xpose.msra.mxu0 0
    %1263 = vmatprep.subr.bf16.mxu0 0
    %1264 = vmatpush2.bf16.xpose.msra.mxu0 0
    %1265 = vmatprep.subr.bf16.mxu0 0
    %1266 = vmatpush2.bf16.xpose.msra.mxu0 0
    %1267 = vmatprep.mubr.bf16.mxu0 0
    %1268 = vmatmul.mubr.bf16.gmra.mxu0 %v981
    %v1269 = vpop.f32.mrf.mxu0
    %v1270 = vadd.f32 0.0, %v1269
    %v1271 = vpop.f32.mrf.mxu0
    %v1272 = vpop.f32.mrf.mxu0
    %v1273 = vadd.f32 0.0, %v1272
    %v1274 = vpop.f32.mrf.mxu0
    %1275 = vdwg.mxu0
    %v1276 = vsel %vm992, -inf, %v1270
    %v1277 = vsel %vm993, -inf, %v1273
    %v1278 = vsel %vm1037, %v1276, -inf
    %1279 = vmax.xlane.f32.xlu0 %v1278
    %v1280 = vpop.xlane.xlu0 %1279
    %v1281 = vsel %vm1037, %v1277, -inf
    %1282 = vmax.xlane.f32.xlu0 %v1281
    %v1283 = vpop.xlane.xlu0 %1282
    %v1284 = vsub.f32 %v1276, %v1280
    %v1285 = vsub.f32 %v1277, %v1283
    %v1286 = vmul.f32 %v1284, 1.442695
    %v1287 = vpow.pop %v1286
    %v1288 = vmul.f32 %v1285, 1.442695
    %v1289 = vpow.pop %v1288
    %v1290 = vsel %vm1037, %v1287, 0.0
    %1291 = vadd.xlane.f32.xlu0 %v1290
    %v1292 = vpop.xlane.xlu0 %1291
    %v1293 = vsel %vm1037, %v1289, 0.0
    %1294 = vadd.xlane.f32.xlu0 %v1293
    %v1295 = vpop.xlane.xlu0 %1294
    %v1296 = vrcp.pop %v1292
    %v1297 = vrcp.pop %v1295
    %v1298 = vmul.f32 %v1287, %v1296
    %v1299 = vmul.f32 %v1289, %v1297
    %v1300 = vpack.c.bf16 %v1299, %v1298
    %v1302 = vsel %vm1037, %v1300, 0
    %1304 = vmatprep.subr.bf16.mxu0 0
    %1305 = vmatpush1.bf16.msra.mxu0 0
    %1306 = vmatprep.subr.bf16.mxu0 0
    %1307 = vmatpush1.bf16.msra.mxu0 0
    %1308 = vmatprep.subr.bf16.mxu0 0
    %1309 = vmatpush1.bf16.msra.mxu0 0
    %1310 = vmatprep.subr.bf16.mxu0 0
    %1311 = vmatpush1.bf16.msra.mxu0 0
    %1312 = vmatprep.subr.bf16.mxu0 0
    %1313 = vmatpush1.bf16.msra.mxu0 0
    %1314 = vmatprep.subr.bf16.mxu0 0
    %1315 = vmatpush1.bf16.msra.mxu0 0
    %1316 = vmatprep.subr.bf16.mxu0 0
    %1317 = vmatpush1.bf16.msra.mxu0 0
    %1318 = vmatprep.subr.bf16.mxu0 0
    %1319 = vmatpush1.bf16.msra.mxu0 %v985
    %1320 = vmatprep.subr.bf16.mxu0 0
    %1321 = vmatpush2.bf16.msra.mxu0 0
    %1322 = vmatprep.subr.bf16.mxu0 0
    %1323 = vmatpush2.bf16.msra.mxu0 0
    %1324 = vmatprep.subr.bf16.mxu0 0
    %1325 = vmatpush2.bf16.msra.mxu0 0
    %1326 = vmatprep.subr.bf16.mxu0 0
    %1327 = vmatpush2.bf16.msra.mxu0 0
    %1328 = vmatprep.subr.bf16.mxu0 0
    %1329 = vmatpush2.bf16.msra.mxu0 0
    %1330 = vmatprep.subr.bf16.mxu0 0
    %1331 = vmatpush2.bf16.msra.mxu0 0
    %1332 = vmatprep.subr.bf16.mxu0 0
    %1333 = vmatpush2.bf16.msra.mxu0 0
    %1334 = vmatprep.subr.bf16.mxu0 0
    %1335 = vmatpush2.bf16.msra.mxu0 0
    %1336 = vmatprep.mubr.bf16.mxu0 0
    %1337 = vmatmul.mubr.bf16.gmra.mxu0 %v1302
    %v1338 = vpop.f32.mrf.mxu0
    %v1339 = vadd.f32 0.0, %v1338
    %v1340 = vpop.f32.mrf.mxu0
    %v1341 = vpop.f32.mrf.mxu0
    %v1342 = vadd.f32 0.0, %v1341
    %v1343 = vpop.f32.mrf.mxu0
    %1344 = vdwg.mxu0
    %v1345 = vpack.c.bf16 %v1342, %v1339
    %v1347 = vunpack.c.l.b16 %v1345
    %v1348 = vunpack.c.h.b16 %v1345
    %v1349 = vpack.c.b16 %v1347, %v1347
    %v1350 = vpack.c.b16 %v1348, %v1348
    %1353 = vst [vmem:[#allocation2 + $0x10] sm:$0xf] %v1349
    %1354 = vst [vmem:[#allocation2 + $0x18] sm:$0xf] %v1350
    %1355 = vmatprep.subr.bf16.mxu0 0
    %1356 = vmatpush1.bf16.xpose.msra.mxu0 0
    %1357 = vmatprep.subr.bf16.mxu0 0
    %1358 = vmatpush1.bf16.xpose.msra.mxu0 0
    %1359 = vmatprep.subr.bf16.mxu0 0
    %1360 = vmatpush1.bf16.xpose.msra.mxu0 0
    %1361 = vmatprep.subr.bf16.mxu0 0
    %1362 = vmatpush1.bf16.xpose.msra.mxu0 0
    %1363 = vmatprep.subr.bf16.mxu0 0
    %1364 = vmatpush1.bf16.xpose.msra.mxu0 0
    %1365 = vmatprep.subr.bf16.mxu0 0
    %1366 = vmatpush1.bf16.xpose.msra.mxu0 0
    %1367 = vmatprep.subr.bf16.mxu0 0
    %1368 = vmatpush1.bf16.xpose.msra.mxu0 0
    %1369 = vmatprep.subr.bf16.mxu0 0
    %1370 = vmatpush1.bf16.xpose.msra.mxu0 %v984
    %1371 = vmatprep.subr.bf16.mxu0 0
    %1372 = vmatpush2.bf16.xpose.msra.mxu0 0
    %1373 = vmatprep.subr.bf16.mxu0 0
    %1374 = vmatpush2.bf16.xpose.msra.mxu0 0
    %1375 = vmatprep.subr.bf16.mxu0 0
    %1376 = vmatpush2.bf16.xpose.msra.mxu0 0
    %1377 = vmatprep.subr.bf16.mxu0 0
    %1378 = vmatpush2.bf16.xpose.msra.mxu0 0
    %1379 = vmatprep.subr.bf16.mxu0 0
    %1380 = vmatpush2.bf16.xpose.msra.mxu0 0
    %1381 = vmatprep.subr.bf16.mxu0 0
    %1382 = vmatpush2.bf16.xpose.msra.mxu0 0
    %1383 = vmatprep.subr.bf16.mxu0 0
    %1384 = vmatpush2.bf16.xpose.msra.mxu0 0
    %1385 = vmatprep.subr.bf16.mxu0 0
    %1386 = vmatpush2.bf16.xpose.msra.mxu0 0
    %1387 = vmatprep.mubr.bf16.mxu0 0
    %1388 = vmatmul.mubr.bf16.gmra.mxu0 %v982
    %v1389 = vpop.f32.mrf.mxu0
    %v1390 = vadd.f32 0.0, %v1389
    %v1391 = vpop.f32.mrf.mxu0
    %v1392 = vpop.f32.mrf.mxu0
    %v1393 = vadd.f32 0.0, %v1392
    %v1394 = vpop.f32.mrf.mxu0
    %1395 = vdwg.mxu0
    %v1396 = vsel %vm992, -inf, %v1390
    %v1397 = vsel %vm993, -inf, %v1393
    %v1398 = vsel %vm1037, %v1396, -inf
    %1399 = vmax.xlane.f32.xlu0 %v1398
    %v1400 = vpop.xlane.xlu0 %1399
    %v1401 = vsel %vm1037, %v1397, -inf
    %1402 = vmax.xlane.f32.xlu0 %v1401
    %v1403 = vpop.xlane.xlu0 %1402
    %v1404 = vsub.f32 %v1396, %v1400
    %v1405 = vsub.f32 %v1397, %v1403
    %v1406 = vmul.f32 %v1404, 1.442695
    %v1407 = vpow.pop %v1406
    %v1408 = vmul.f32 %v1405, 1.442695
    %v1409 = vpow.pop %v1408
    %v1410 = vsel %vm1037, %v1407, 0.0
    %1411 = vadd.xlane.f32.xlu0 %v1410
    %v1412 = vpop.xlane.xlu0 %1411
    %v1413 = vsel %vm1037, %v1409, 0.0
    %1414 = vadd.xlane.f32.xlu0 %v1413
    %v1415 = vpop.xlane.xlu0 %1414
    %v1416 = vrcp.pop %v1412
    %v1417 = vrcp.pop %v1415
    %v1418 = vmul.f32 %v1407, %v1416
    %v1419 = vmul.f32 %v1409, %v1417
    %v1420 = vpack.c.bf16 %v1419, %v1418
    %v1422 = vsel %vm1037, %v1420, 0
    %1424 = vmatprep.subr.bf16.mxu0 0
    %1425 = vmatpush1.bf16.msra.mxu0 0
    %1426 = vmatprep.subr.bf16.mxu0 0
    %1427 = vmatpush1.bf16.msra.mxu0 0
    %1428 = vmatprep.subr.bf16.mxu0 0
    %1429 = vmatpush1.bf16.msra.mxu0 0
    %1430 = vmatprep.subr.bf16.mxu0 0
    %1431 = vmatpush1.bf16.msra.mxu0 0
    %1432 = vmatprep.subr.bf16.mxu0 0
    %1433 = vmatpush1.bf16.msra.mxu0 0
    %1434 = vmatprep.subr.bf16.mxu0 0
    %1435 = vmatpush1.bf16.msra.mxu0 0
    %1436 = vmatprep.subr.bf16.mxu0 0
    %1437 = vmatpush1.bf16.msra.mxu0 0
    %1438 = vmatprep.subr.bf16.mxu0 0
    %1439 = vmatpush1.bf16.msra.mxu0 %v986
    %1440 = vmatprep.subr.bf16.mxu0 0
    %1441 = vmatpush2.bf16.msra.mxu0 0
    %1442 = vmatprep.subr.bf16.mxu0 0
    %1443 = vmatpush2.bf16.msra.mxu0 0
    %1444 = vmatprep.subr.bf16.mxu0 0
    %1445 = vmatpush2.bf16.msra.mxu0 0
    %1446 = vmatprep.subr.bf16.mxu0 0
    %1447 = vmatpush2.bf16.msra.mxu0 0
    %1448 = vmatprep.subr.bf16.mxu0 0
    %1449 = vmatpush2.bf16.msra.mxu0 0
    %1450 = vmatprep.subr.bf16.mxu0 0
    %1451 = vmatpush2.bf16.msra.mxu0 0
    %1452 = vmatprep.subr.bf16.mxu0 0
    %1453 = vmatpush2.bf16.msra.mxu0 0
    %1454 = vmatprep.subr.bf16.mxu0 0
    %1455 = vmatpush2.bf16.msra.mxu0 0
    %1456 = vmatprep.mubr.bf16.mxu0 0
    %1457 = vmatmul.mubr.bf16.gmra.mxu0 %v1422
    %v1458 = vpop.f32.mrf.mxu0
    %v1459 = vadd.f32 0.0, %v1458
    %v1460 = vpop.f32.mrf.mxu0
    %v1461 = vpop.f32.mrf.mxu0
    %v1462 = vadd.f32 0.0, %v1461
    %v1463 = vpop.f32.mrf.mxu0
    %1464 = vdwg.mxu0
    %v1465 = vpack.c.bf16 %v1462, %v1459
    %v1467 = vunpack.c.l.b16 %v1465
    %v1468 = vunpack.c.h.b16 %v1465
    %v1469 = vpack.c.b16 %v1467, %v1467
    %v1470 = vpack.c.b16 %v1468, %v1468
    %1473 = vst [vmem:[#allocation2 + $0x14] sm:$0xf] %v1469
    %1474 = vst [vmem:[#allocation2 + $0x1c] sm:$0xf] %v1470
    %v1475 = vld [vmem:[#allocation2] sm:$0xff]
    %v1476 = vld [vmem:[#allocation2 + $0x8] sm:$0xff]
    %v1477 = vld [vmem:[#allocation2 + $0x10] sm:$0xff]
    %v1478 = vld [vmem:[#allocation2 + $0x18] sm:$0xff]
    %v1479 = vld [vmem:[#allocation8] sm:$0xff]
    %v1480 = vld [vmem:[#allocation8 + $0x8] sm:$0xff]
    %v1481 = vld [vmem:[#allocation8 + $0x10] sm:$0xff]
    %v1482 = vld [vmem:[#allocation8 + $0x18] sm:$0xff]
    %v1483 = vld [vmem:[#allocation8 + $0x20] sm:$0xff]
    %v1484 = vld [vmem:[#allocation8 + $0x28] sm:$0xff]
    %v1485 = vld [vmem:[#allocation8 + $0x30] sm:$0xff]
    %v1486 = vld [vmem:[#allocation8 + $0x38] sm:$0xff]
    %v1487 = vld [vmem:[#allocation8 + $0x40] sm:$0xff]
    %v1488 = vld [vmem:[#allocation8 + $0x48] sm:$0xff]
    %v1489 = vld [vmem:[#allocation8 + $0x50] sm:$0xff]
    %v1490 = vld [vmem:[#allocation8 + $0x58] sm:$0xff]
    %v1491 = vld [vmem:[#allocation8 + $0x60] sm:$0xff]
    %v1492 = vld [vmem:[#allocation8 + $0x68] sm:$0xff]
    %v1493 = vld [vmem:[#allocation8 + $0x70] sm:$0xff]
    %v1494 = vld [vmem:[#allocation8 + $0x78] sm:$0xff]
    %v1495 = vld [vmem:[#allocation8 + $0x80] sm:$0xff]
    %v1496 = vld [vmem:[#allocation8 + $0x88] sm:$0xff]
    %v1497 = vld [vmem:[#allocation8 + $0x90] sm:$0xff]
    %v1498 = vld [vmem:[#allocation8 + $0x98] sm:$0xff]
    %v1499 = vld [vmem:[#allocation8 + $0xa0] sm:$0xff]
    %v1500 = vld [vmem:[#allocation8 + $0xa8] sm:$0xff]
    %v1501 = vld [vmem:[#allocation8 + $0xb0] sm:$0xff]
    %v1502 = vld [vmem:[#allocation8 + $0xb8] sm:$0xff]
    %v1503 = vld [vmem:[#allocation8 + $0xc0] sm:$0xff]
    %v1504 = vld [vmem:[#allocation8 + $0xc8] sm:$0xff]
    %v1505 = vld [vmem:[#allocation8 + $0xd0] sm:$0xff]
    %v1506 = vld [vmem:[#allocation8 + $0xd8] sm:$0xff]
    %v1507 = vld [vmem:[#allocation8 + $0xe0] sm:$0xff]
    %v1508 = vld [vmem:[#allocation8 + $0xe8] sm:$0xff]
    %v1509 = vld [vmem:[#allocation8 + $0xf0] sm:$0xff]
    %v1510 = vld [vmem:[#allocation8 + $0xf8] sm:$0xff]
    %v1511 = vld [vmem:[#allocation9] sm:$0x3]
    %v1513 = vlaneseq
    %v1514 = vshrl.u32 %v1513, 7
    %v1515 = vsub.s32 0, %v1514
    %v1516 = vrot.slane %v1511, %v1515
    %v1517 = vlaneseq
    %v1518 = vshrl.u32 %v1517, 7
    %v1519 = vsub.s32 1, %v1518
    %v1520 = vrot.slane %v1511, %v1519
    %v1527 = vunpack.c.l.b16 %v1475
    %v1528 = vunpack.c.h.b16 %v1475
    %v1529 = vunpack.c.l.b16 %v1476
    %v1530 = vunpack.c.h.b16 %v1476
    %v1531 = vunpack.c.l.b16 %v1477
    %v1532 = vunpack.c.h.b16 %v1477
    %v1533 = vunpack.c.l.b16 %v1478
    %v1534 = vunpack.c.h.b16 %v1478
    %v1535 = vpack.c.b16 %v1529, %v1527
    %v1536 = vpack.c.b16 %v1530, %v1528
    %v1537 = vpack.c.b16 %v1533, %v1531
    %v1538 = vpack.c.b16 %v1534, %v1532
    %v1575 = vunpack.c.l.b16 %v1479
    %v1576 = vunpack.c.h.b16 %v1479
    %v1577 = vunpack.c.l.b16 %v1480
    %v1578 = vunpack.c.h.b16 %v1480
    %v1579 = vunpack.c.l.b16 %v1481
    %v1580 = vunpack.c.h.b16 %v1481
    %v1581 = vunpack.c.l.b16 %v1482
    %v1582 = vunpack.c.h.b16 %v1482
    %v1583 = vunpack.c.l.b16 %v1483
    %v1584 = vunpack.c.h.b16 %v1483
    %v1585 = vunpack.c.l.b16 %v1484
    %v1586 = vunpack.c.h.b16 %v1484
    %v1587 = vunpack.c.l.b16 %v1485
    %v1588 = vunpack.c.h.b16 %v1485
    %v1589 = vunpack.c.l.b16 %v1486
    %v1590 = vunpack.c.h.b16 %v1486
    %v1591 = vunpack.c.l.b16 %v1487
    %v1592 = vunpack.c.h.b16 %v1487
    %v1593 = vunpack.c.l.b16 %v1488
    %v1594 = vunpack.c.h.b16 %v1488
    %v1595 = vunpack.c.l.b16 %v1489
    %v1596 = vunpack.c.h.b16 %v1489
    %v1597 = vunpack.c.l.b16 %v1490
    %v1598 = vunpack.c.h.b16 %v1490
    %v1599 = vunpack.c.l.b16 %v1491
    %v1600 = vunpack.c.h.b16 %v1491
    %v1601 = vunpack.c.l.b16 %v1492
    %v1602 = vunpack.c.h.b16 %v1492
    %v1603 = vunpack.c.l.b16 %v1493
    %v1604 = vunpack.c.h.b16 %v1493
    %v1605 = vunpack.c.l.b16 %v1494
    %v1606 = vunpack.c.h.b16 %v1494
    %v1607 = vunpack.c.l.b16 %v1495
    %v1608 = vunpack.c.h.b16 %v1495
    %v1609 = vunpack.c.l.b16 %v1496
    %v1610 = vunpack.c.h.b16 %v1496
    %v1611 = vunpack.c.l.b16 %v1497
    %v1612 = vunpack.c.h.b16 %v1497
    %v1613 = vunpack.c.l.b16 %v1498
    %v1614 = vunpack.c.h.b16 %v1498
    %v1615 = vunpack.c.l.b16 %v1499
    %v1616 = vunpack.c.h.b16 %v1499
    %v1617 = vunpack.c.l.b16 %v1500
    %v1618 = vunpack.c.h.b16 %v1500
    %v1619 = vunpack.c.l.b16 %v1501
    %v1620 = vunpack.c.h.b16 %v1501
    %v1621 = vunpack.c.l.b16 %v1502
    %v1622 = vunpack.c.h.b16 %v1502
    %v1623 = vunpack.c.l.b16 %v1503
    %v1624 = vunpack.c.h.b16 %v1503
    %v1625 = vunpack.c.l.b16 %v1504
    %v1626 = vunpack.c.h.b16 %v1504
    %v1627 = vunpack.c.l.b16 %v1505
    %v1628 = vunpack.c.h.b16 %v1505
    %v1629 = vunpack.c.l.b16 %v1506
    %v1630 = vunpack.c.h.b16 %v1506
    %v1631 = vunpack.c.l.b16 %v1507
    %v1632 = vunpack.c.h.b16 %v1507
    %v1633 = vunpack.c.l.b16 %v1508
    %v1634 = vunpack.c.h.b16 %v1508
    %v1635 = vunpack.c.l.b16 %v1509
    %v1636 = vunpack.c.h.b16 %v1509
    %v1637 = vunpack.c.l.b16 %v1510
    %v1638 = vunpack.c.h.b16 %v1510
    %v1639 = vpack.c.b16 %v1577, %v1575
    %v1640 = vpack.c.b16 %v1578, %v1576
    %v1641 = vpack.c.b16 %v1581, %v1579
    %v1642 = vpack.c.b16 %v1582, %v1580
    %v1643 = vpack.c.b16 %v1585, %v1583
    %v1644 = vpack.c.b16 %v1586, %v1584
    %v1645 = vpack.c.b16 %v1589, %v1587
    %v1646 = vpack.c.b16 %v1590, %v1588
    %v1647 = vpack.c.b16 %v1593, %v1591
    %v1648 = vpack.c.b16 %v1594, %v1592
    %v1649 = vpack.c.b16 %v1597, %v1595
    %v1650 = vpack.c.b16 %v1598, %v1596
    %v1651 = vpack.c.b16 %v1601, %v1599
    %v1652 = vpack.c.b16 %v1602, %v1600
    %v1653 = vpack.c.b16 %v1605, %v1603
    %v1654 = vpack.c.b16 %v1606, %v1604
    %v1655 = vpack.c.b16 %v1609, %v1607
    %v1656 = vpack.c.b16 %v1610, %v1608
    %v1657 = vpack.c.b16 %v1613, %v1611
    %v1658 = vpack.c.b16 %v1614, %v1612
    %v1659 = vpack.c.b16 %v1617, %v1615
    %v1660 = vpack.c.b16 %v1618, %v1616
    %v1661 = vpack.c.b16 %v1621, %v1619
    %v1662 = vpack.c.b16 %v1622, %v1620
    %v1663 = vpack.c.b16 %v1625, %v1623
    %v1664 = vpack.c.b16 %v1626, %v1624
    %v1665 = vpack.c.b16 %v1629, %v1627
    %v1666 = vpack.c.b16 %v1630, %v1628
    %v1667 = vpack.c.b16 %v1633, %v1631
    %v1668 = vpack.c.b16 %v1634, %v1632
    %v1669 = vpack.c.b16 %v1637, %v1635
    %v1670 = vpack.c.b16 %v1638, %v1636
    %1703 = vmatprep.subr.bf16.mxu0 %v1654
    %1704 = vmatpush1.bf16.msra.mxu0 %v1653
    %1705 = vmatprep.subr.bf16.mxu0 %v1652
    %1706 = vmatpush1.bf16.msra.mxu0 %v1651
    %1707 = vmatprep.subr.bf16.mxu0 %v1650
    %1708 = vmatpush1.bf16.msra.mxu0 %v1649
    %1709 = vmatprep.subr.bf16.mxu0 %v1648
    %1710 = vmatpush1.bf16.msra.mxu0 %v1647
    %1711 = vmatprep.subr.bf16.mxu0 %v1646
    %1712 = vmatpush1.bf16.msra.mxu0 %v1645
    %1713 = vmatprep.subr.bf16.mxu0 %v1644
    %1714 = vmatpush1.bf16.msra.mxu0 %v1643
    %1715 = vmatprep.subr.bf16.mxu0 %v1642
    %1716 = vmatpush1.bf16.msra.mxu0 %v1641
    %1717 = vmatprep.subr.bf16.mxu0 %v1640
    %1718 = vmatpush1.bf16.msra.mxu0 %v1639
    %1719 = vmatprep.subr.bf16.mxu0 %v1670
    %1720 = vmatpush2.bf16.msra.mxu0 %v1669
    %1721 = vmatprep.subr.bf16.mxu0 %v1668
    %1722 = vmatpush2.bf16.msra.mxu0 %v1667
    %1723 = vmatprep.subr.bf16.mxu0 %v1666
    %1724 = vmatpush2.bf16.msra.mxu0 %v1665
    %1725 = vmatprep.subr.bf16.mxu0 %v1664
    %1726 = vmatpush2.bf16.msra.mxu0 %v1663
    %1727 = vmatprep.subr.bf16.mxu0 %v1662
    %1728 = vmatpush2.bf16.msra.mxu0 %v1661
    %1729 = vmatprep.subr.bf16.mxu0 %v1660
    %1730 = vmatpush2.bf16.msra.mxu0 %v1659
    %1731 = vmatprep.subr.bf16.mxu0 %v1658
    %1732 = vmatpush2.bf16.msra.mxu0 %v1657
    %1733 = vmatprep.subr.bf16.mxu0 %v1656
    %1734 = vmatpush2.bf16.msra.mxu0 %v1655
    %1735 = vmatprep.mubr.bf16.mxu0 %v1536
    %1736 = vmatmul.mubr.bf16.gmra.mxu0 %v1535
    %v1737 = vpop.f32.mrf.mxu0
    %v1738 = vadd.f32 %v1516, %v1737
    %v1739 = vpop.f32.mrf.mxu0
    %v1740 = vadd.f32 %v1520, %v1739
    %v1741 = vpop.f32.mrf.mxu0
    %v1742 = vadd.f32 %v1516, %v1741
    %v1743 = vpop.f32.mrf.mxu0
    %v1744 = vadd.f32 %v1520, %v1743
    %1745 = vmatprep.mubr.bf16.mxu0 %v1538
    %1746 = vmatmul.mubr.bf16.gmra.mxu0 %v1537
    %v1747 = vpop.f32.mrf.mxu0
    %v1748 = vadd.f32 %v1516, %v1747
    %v1749 = vpop.f32.mrf.mxu0
    %v1750 = vadd.f32 %v1520, %v1749
    %v1751 = vpop.f32.mrf.mxu0
    %v1752 = vadd.f32 %v1516, %v1751
    %v1753 = vpop.f32.mrf.mxu0
    %v1754 = vadd.f32 %v1520, %v1753
    %1755 = vdwg.mxu0
    %v1756 = vadd.f32 %v123, %v1738
    %v1757 = vadd.f32 %v124, %v1740
    %v1758 = vadd.f32 %v125, %v1742
    %v1759 = vadd.f32 %v126, %v1744
    %v1760 = vadd.f32 %v127, %v1748
    %v1761 = vadd.f32 %v128, %v1750
    %v1762 = vadd.f32 %v129, %v1752
    %v1763 = vadd.f32 %v130, %v1754
    %v1764 = vld [vmem:[%s10] sm:$0x3]
    %v1765 = vld [vmem:[%s11] sm:$0x3]
    %v1766 = vadd.f32 %v1756, %v1757
    %1767 = vadd.xlane.f32.xlu0 %v1766
    %v1768 = vpop.xlane.xlu0 %1767
    %v1769 = vadd.f32 %v1758, %v1759
    %1770 = vadd.xlane.f32.xlu0 %v1769
    %v1771 = vpop.xlane.xlu0 %1770
    %v1772 = vadd.f32 %v1760, %v1761
    %1773 = vadd.xlane.f32.xlu0 %v1772
    %v1774 = vpop.xlane.xlu0 %1773
    %v1775 = vadd.f32 %v1762, %v1763
    %1776 = vadd.xlane.f32.xlu0 %v1775
    %v1777 = vpop.xlane.xlu0 %1776
    %v1778 = vmul.f32 %v1768, %v145
    %v1779 = vmul.f32 %v1771, %v145
    %v1780 = vmul.f32 %v1774, %v145
    %v1781 = vmul.f32 %v1777, %v145
    %v1782 = vsub.f32 %v1756, %v1778
    %v1783 = vsub.f32 %v1757, %v1778
    %v1784 = vsub.f32 %v1758, %v1779
    %v1785 = vsub.f32 %v1759, %v1779
    %v1786 = vsub.f32 %v1760, %v1780
    %v1787 = vsub.f32 %v1761, %v1780
    %v1788 = vsub.f32 %v1762, %v1781
    %v1789 = vsub.f32 %v1763, %v1781
    %v1790 = vmul.f32 %v1782, %v1782
    %v1791 = vmul.f32 %v1783, %v1783
    %v1792 = vmul.f32 %v1784, %v1784
    %v1793 = vmul.f32 %v1785, %v1785
    %v1794 = vmul.f32 %v1786, %v1786
    %v1795 = vmul.f32 %v1787, %v1787
    %v1796 = vmul.f32 %v1788, %v1788
    %v1797 = vmul.f32 %v1789, %v1789
    %v1798 = vadd.f32 %v1790, %v1791
    %1799 = vadd.xlane.f32.xlu0 %v1798
    %v1800 = vpop.xlane.xlu0 %1799
    %v1801 = vadd.f32 %v1792, %v1793
    %1802 = vadd.xlane.f32.xlu0 %v1801
    %v1803 = vpop.xlane.xlu0 %1802
    %v1804 = vadd.f32 %v1794, %v1795
    %1805 = vadd.xlane.f32.xlu0 %v1804
    %v1806 = vpop.xlane.xlu0 %1805
    %v1807 = vadd.f32 %v1796, %v1797
    %1808 = vadd.xlane.f32.xlu0 %v1807
    %v1809 = vpop.xlane.xlu0 %1808
    %v1810 = vmul.f32 %v1800, %v145
    %v1811 = vmul.f32 %v1803, %v145
    %v1812 = vmul.f32 %v1806, %v145
    %v1813 = vmul.f32 %v1809, %v145
    %v1814 = vadd.f32 %v1810, 1e-05
    %v1815 = vadd.f32 %v1811, 1e-05
    %v1816 = vadd.f32 %v1812, 1e-05
    %v1817 = vadd.f32 %v1813, 1e-05
    %v1818 = vrsqrt.pop %v1814
    %v1819 = vrsqrt.pop %v1815
    %v1820 = vrsqrt.pop %v1816
    %v1821 = vrsqrt.pop %v1817
    %v1822 = vmul.f32 %v1782, %v1818
    %v1823 = vmul.f32 %v1783, %v1818
    %v1824 = vmul.f32 %v1784, %v1819
    %v1825 = vmul.f32 %v1785, %v1819
    %v1826 = vmul.f32 %v1786, %v1820
    %v1827 = vmul.f32 %v1787, %v1820
    %v1828 = vmul.f32 %v1788, %v1821
    %v1829 = vmul.f32 %v1789, %v1821
    %v1831 = vlaneseq
    %v1832 = vshrl.u32 %v1831, 7
    %v1833 = vsub.s32 0, %v1832
    %v1834 = vrot.slane %v1764, %v1833
    %v1835 = vlaneseq
    %v1836 = vshrl.u32 %v1835, 7
    %v1837 = vsub.s32 1, %v1836
    %v1838 = vrot.slane %v1764, %v1837
    %v1841 = vmul.f32 %v1822, %v1834
    %v1842 = vmul.f32 %v1823, %v1838
    %v1843 = vmul.f32 %v1824, %v1834
    %v1844 = vmul.f32 %v1825, %v1838
    %v1845 = vmul.f32 %v1826, %v1834
    %v1846 = vmul.f32 %v1827, %v1838
    %v1847 = vmul.f32 %v1828, %v1834
    %v1848 = vmul.f32 %v1829, %v1838
    %v1850 = vlaneseq
    %v1851 = vshrl.u32 %v1850, 7
    %v1852 = vsub.s32 0, %v1851
    %v1853 = vrot.slane %v1765, %v1852
    %v1854 = vlaneseq
    %v1855 = vshrl.u32 %v1854, 7
    %v1856 = vsub.s32 1, %v1855
    %v1857 = vrot.slane %v1765, %v1856
    %v1860 = vadd.f32 %v1841, %v1853
    %v1861 = vadd.f32 %v1842, %v1857
    %v1862 = vadd.f32 %v1843, %v1853
    %v1863 = vadd.f32 %v1844, %v1857
    %v1864 = vadd.f32 %v1845, %v1853
    %v1865 = vadd.f32 %v1846, %v1857
    %v1866 = vadd.f32 %v1847, %v1853
    %v1867 = vadd.f32 %v1848, %v1857
    %v1868 = vpack.c.bf16 %v1862, %v1860
    %v1869 = vpack.c.bf16 %v1863, %v1861
    %v1870 = vpack.c.bf16 %v1866, %v1864
    %v1871 = vpack.c.bf16 %v1867, %v1865
    %v1872 = vld [vmem:[#allocation11] sm:$0xff]
    %v1873 = vld [vmem:[#allocation11 + $0x8] sm:$0xff]
    %v1874 = vld [vmem:[#allocation11 + $0x10] sm:$0xff]
    %v1875 = vld [vmem:[#allocation11 + $0x18] sm:$0xff]
    %v1876 = vld [vmem:[#allocation11 + $0x20] sm:$0xff]
    %v1877 = vld [vmem:[#allocation11 + $0x28] sm:$0xff]
    %v1878 = vld [vmem:[#allocation11 + $0x30] sm:$0xff]
    %v1879 = vld [vmem:[#allocation11 + $0x38] sm:$0xff]
    %v1880 = vld [vmem:[#allocation11 + $0x40] sm:$0xff]
    %v1881 = vld [vmem:[#allocation11 + $0x48] sm:$0xff]
    %v1882 = vld [vmem:[#allocation11 + $0x50] sm:$0xff]
    %v1883 = vld [vmem:[#allocation11 + $0x58] sm:$0xff]
    %v1884 = vld [vmem:[#allocation11 + $0x60] sm:$0xff]
    %v1885 = vld [vmem:[#allocation11 + $0x68] sm:$0xff]
    %v1886 = vld [vmem:[#allocation11 + $0x70] sm:$0xff]
    %v1887 = vld [vmem:[#allocation11 + $0x78] sm:$0xff]
    %v1888 = vld [vmem:[#allocation11 + $0x80] sm:$0xff]
    %v1889 = vld [vmem:[#allocation11 + $0x88] sm:$0xff]
    %v1890 = vld [vmem:[#allocation11 + $0x90] sm:$0xff]
    %v1891 = vld [vmem:[#allocation11 + $0x98] sm:$0xff]
    %v1892 = vld [vmem:[#allocation11 + $0xa0] sm:$0xff]
    %v1893 = vld [vmem:[#allocation11 + $0xa8] sm:$0xff]
    %v1894 = vld [vmem:[#allocation11 + $0xb0] sm:$0xff]
    %v1895 = vld [vmem:[#allocation11 + $0xb8] sm:$0xff]
    %v1896 = vld [vmem:[#allocation11 + $0xc0] sm:$0xff]
    %v1897 = vld [vmem:[#allocation11 + $0xc8] sm:$0xff]
    %v1898 = vld [vmem:[#allocation11 + $0xd0] sm:$0xff]
    %v1899 = vld [vmem:[#allocation11 + $0xd8] sm:$0xff]
    %v1900 = vld [vmem:[#allocation11 + $0xe0] sm:$0xff]
    %v1901 = vld [vmem:[#allocation11 + $0xe8] sm:$0xff]
    %v1902 = vld [vmem:[#allocation11 + $0xf0] sm:$0xff]
    %v1903 = vld [vmem:[#allocation11 + $0xf8] sm:$0xff]
    %v1904 = vld [vmem:[#allocation11 + $0x100] sm:$0xff]
    %v1905 = vld [vmem:[#allocation11 + $0x108] sm:$0xff]
    %v1906 = vld [vmem:[#allocation11 + $0x110] sm:$0xff]
    %v1907 = vld [vmem:[#allocation11 + $0x118] sm:$0xff]
    %v1908 = vld [vmem:[#allocation11 + $0x120] sm:$0xff]
    %v1909 = vld [vmem:[#allocation11 + $0x128] sm:$0xff]
    %v1910 = vld [vmem:[#allocation11 + $0x130] sm:$0xff]
    %v1911 = vld [vmem:[#allocation11 + $0x138] sm:$0xff]
    %v1912 = vld [vmem:[#allocation11 + $0x140] sm:$0xff]
    %v1913 = vld [vmem:[#allocation11 + $0x148] sm:$0xff]
    %v1914 = vld [vmem:[#allocation11 + $0x150] sm:$0xff]
    %v1915 = vld [vmem:[#allocation11 + $0x158] sm:$0xff]
    %v1916 = vld [vmem:[#allocation11 + $0x160] sm:$0xff]
    %v1917 = vld [vmem:[#allocation11 + $0x168] sm:$0xff]
    %v1918 = vld [vmem:[#allocation11 + $0x170] sm:$0xff]
    %v1919 = vld [vmem:[#allocation11 + $0x178] sm:$0xff]
    %v1920 = vld [vmem:[#allocation11 + $0x180] sm:$0xff]
    %v1921 = vld [vmem:[#allocation11 + $0x188] sm:$0xff]
    %v1922 = vld [vmem:[#allocation11 + $0x190] sm:$0xff]
    %v1923 = vld [vmem:[#allocation11 + $0x198] sm:$0xff]
    %v1924 = vld [vmem:[#allocation11 + $0x1a0] sm:$0xff]
    %v1925 = vld [vmem:[#allocation11 + $0x1a8] sm:$0xff]
    %v1926 = vld [vmem:[#allocation11 + $0x1b0] sm:$0xff]
    %v1927 = vld [vmem:[#allocation11 + $0x1b8] sm:$0xff]
    %v1928 = vld [vmem:[#allocation11 + $0x1c0] sm:$0xff]
    %v1929 = vld [vmem:[#allocation11 + $0x1c8] sm:$0xff]
    %v1930 = vld [vmem:[#allocation11 + $0x1d0] sm:$0xff]
    %v1931 = vld [vmem:[#allocation11 + $0x1d8] sm:$0xff]
    %v1932 = vld [vmem:[#allocation11 + $0x1e0] sm:$0xff]
    %v1933 = vld [vmem:[#allocation11 + $0x1e8] sm:$0xff]
    %v1934 = vld [vmem:[#allocation11 + $0x1f0] sm:$0xff]
    %v1935 = vld [vmem:[#allocation11 + $0x1f8] sm:$0xff]
    %v1936 = vld [vmem:[#allocation11 + $0x200] sm:$0xff]
    %v1937 = vld [vmem:[#allocation11 + $0x208] sm:$0xff]
    %v1938 = vld [vmem:[#allocation11 + $0x210] sm:$0xff]
    %v1939 = vld [vmem:[#allocation11 + $0x218] sm:$0xff]
    %v1940 = vld [vmem:[#allocation11 + $0x220] sm:$0xff]
    %v1941 = vld [vmem:[#allocation11 + $0x228] sm:$0xff]
    %v1942 = vld [vmem:[#allocation11 + $0x230] sm:$0xff]
    %v1943 = vld [vmem:[#allocation11 + $0x238] sm:$0xff]
    %v1944 = vld [vmem:[#allocation11 + $0x240] sm:$0xff]
    %v1945 = vld [vmem:[#allocation11 + $0x248] sm:$0xff]
    %v1946 = vld [vmem:[#allocation11 + $0x250] sm:$0xff]
    %v1947 = vld [vmem:[#allocation11 + $0x258] sm:$0xff]
    %v1948 = vld [vmem:[#allocation11 + $0x260] sm:$0xff]
    %v1949 = vld [vmem:[#allocation11 + $0x268] sm:$0xff]
    %v1950 = vld [vmem:[#allocation11 + $0x270] sm:$0xff]
    %v1951 = vld [vmem:[#allocation11 + $0x278] sm:$0xff]
    %v1952 = vld [vmem:[#allocation11 + $0x280] sm:$0xff]
    %v1953 = vld [vmem:[#allocation11 + $0x288] sm:$0xff]
    %v1954 = vld [vmem:[#allocation11 + $0x290] sm:$0xff]
    %v1955 = vld [vmem:[#allocation11 + $0x298] sm:$0xff]
    %v1956 = vld [vmem:[#allocation11 + $0x2a0] sm:$0xff]
    %v1957 = vld [vmem:[#allocation11 + $0x2a8] sm:$0xff]
    %v1958 = vld [vmem:[#allocation11 + $0x2b0] sm:$0xff]
    %v1959 = vld [vmem:[#allocation11 + $0x2b8] sm:$0xff]
    %v1960 = vld [vmem:[#allocation11 + $0x2c0] sm:$0xff]
    %v1961 = vld [vmem:[#allocation11 + $0x2c8] sm:$0xff]
    %v1962 = vld [vmem:[#allocation11 + $0x2d0] sm:$0xff]
    %v1963 = vld [vmem:[#allocation11 + $0x2d8] sm:$0xff]
    %v1964 = vld [vmem:[#allocation11 + $0x2e0] sm:$0xff]
    %v1965 = vld [vmem:[#allocation11 + $0x2e8] sm:$0xff]
    %v1966 = vld [vmem:[#allocation11 + $0x2f0] sm:$0xff]
    %v1967 = vld [vmem:[#allocation11 + $0x2f8] sm:$0xff]
    %v1968 = vld [vmem:[#allocation11 + $0x300] sm:$0xff]
    %v1969 = vld [vmem:[#allocation11 + $0x308] sm:$0xff]
    %v1970 = vld [vmem:[#allocation11 + $0x310] sm:$0xff]
    %v1971 = vld [vmem:[#allocation11 + $0x318] sm:$0xff]
    %v1972 = vld [vmem:[#allocation11 + $0x320] sm:$0xff]
    %v1973 = vld [vmem:[#allocation11 + $0x328] sm:$0xff]
    %v1974 = vld [vmem:[#allocation11 + $0x330] sm:$0xff]
    %v1975 = vld [vmem:[#allocation11 + $0x338] sm:$0xff]
    %v1976 = vld [vmem:[#allocation11 + $0x340] sm:$0xff]
    %v1977 = vld [vmem:[#allocation11 + $0x348] sm:$0xff]
    %v1978 = vld [vmem:[#allocation11 + $0x350] sm:$0xff]
    %v1979 = vld [vmem:[#allocation11 + $0x358] sm:$0xff]
    %v1980 = vld [vmem:[#allocation11 + $0x360] sm:$0xff]
    %v1981 = vld [vmem:[#allocation11 + $0x368] sm:$0xff]
    %v1982 = vld [vmem:[#allocation11 + $0x370] sm:$0xff]
    %v1983 = vld [vmem:[#allocation11 + $0x378] sm:$0xff]
    %v1984 = vld [vmem:[#allocation11 + $0x380] sm:$0xff]
    %v1985 = vld [vmem:[#allocation11 + $0x388] sm:$0xff]
    %v1986 = vld [vmem:[#allocation11 + $0x390] sm:$0xff]
    %v1987 = vld [vmem:[#allocation11 + $0x398] sm:$0xff]
    %v1988 = vld [vmem:[#allocation11 + $0x3a0] sm:$0xff]
    %v1989 = vld [vmem:[#allocation11 + $0x3a8] sm:$0xff]
    %v1990 = vld [vmem:[#allocation11 + $0x3b0] sm:$0xff]
    %v1991 = vld [vmem:[#allocation11 + $0x3b8] sm:$0xff]
    %v1992 = vld [vmem:[#allocation11 + $0x3c0] sm:$0xff]
    %v1993 = vld [vmem:[#allocation11 + $0x3c8] sm:$0xff]
    %v1994 = vld [vmem:[#allocation11 + $0x3d0] sm:$0xff]
    %v1995 = vld [vmem:[#allocation11 + $0x3d8] sm:$0xff]
    %v1996 = vld [vmem:[#allocation11 + $0x3e0] sm:$0xff]
    %v1997 = vld [vmem:[#allocation11 + $0x3e8] sm:$0xff]
    %v1998 = vld [vmem:[#allocation11 + $0x3f0] sm:$0xff]
    %v1999 = vld [vmem:[#allocation11 + $0x3f8] sm:$0xff]
    %v2000 = vld [vmem:[%s5] sm:$0xff]
    %v2002 = vlaneseq
    %v2003 = vshrl.u32 %v2002, 7
    %v2004 = vsub.s32 0, %v2003
    %v2005 = vrot.slane %v2000, %v2004
    %v2006 = vlaneseq
    %v2007 = vshrl.u32 %v2006, 7
    %v2008 = vsub.s32 1, %v2007
    %v2009 = vrot.slane %v2000, %v2008
    %v2010 = vlaneseq
    %v2011 = vshrl.u32 %v2010, 7
    %v2012 = vsub.s32 2, %v2011
    %v2013 = vrot.slane %v2000, %v2012
    %v2014 = vlaneseq
    %v2015 = vshrl.u32 %v2014, 7
    %v2016 = vsub.s32 3, %v2015
    %v2017 = vrot.slane %v2000, %v2016
    %v2018 = vlaneseq
    %v2019 = vshrl.u32 %v2018, 7
    %v2020 = vsub.s32 4, %v2019
    %v2021 = vrot.slane %v2000, %v2020
    %v2022 = vlaneseq
    %v2023 = vshrl.u32 %v2022, 7
    %v2024 = vsub.s32 5, %v2023
    %v2025 = vrot.slane %v2000, %v2024
    %v2026 = vlaneseq
    %v2027 = vshrl.u32 %v2026, 7
    %v2028 = vsub.s32 6, %v2027
    %v2029 = vrot.slane %v2000, %v2028
    %v2030 = vlaneseq
    %v2031 = vshrl.u32 %v2030, 7
    %v2032 = vsub.s32 7, %v2031
    %v2033 = vrot.slane %v2000, %v2032
    %v2170 = vunpack.c.l.b16 %v1872
    %v2171 = vunpack.c.h.b16 %v1872
    %v2172 = vunpack.c.l.b16 %v1873
    %v2173 = vunpack.c.h.b16 %v1873
    %v2174 = vunpack.c.l.b16 %v1874
    %v2175 = vunpack.c.h.b16 %v1874
    %v2176 = vunpack.c.l.b16 %v1875
    %v2177 = vunpack.c.h.b16 %v1875
    %v2178 = vunpack.c.l.b16 %v1876
    %v2179 = vunpack.c.h.b16 %v1876
    %v2180 = vunpack.c.l.b16 %v1877
    %v2181 = vunpack.c.h.b16 %v1877
    %v2182 = vunpack.c.l.b16 %v1878
    %v2183 = vunpack.c.h.b16 %v1878
    %v2184 = vunpack.c.l.b16 %v1879
    %v2185 = vunpack.c.h.b16 %v1879
    %v2186 = vunpack.c.l.b16 %v1880
    %v2187 = vunpack.c.h.b16 %v1880
    %v2188 = vunpack.c.l.b16 %v1881
    %v2189 = vunpack.c.h.b16 %v1881
    %v2190 = vunpack.c.l.b16 %v1882
    %v2191 = vunpack.c.h.b16 %v1882
    %v2192 = vunpack.c.l.b16 %v1883
    %v2193 = vunpack.c.h.b16 %v1883
    %v2194 = vunpack.c.l.b16 %v1884
    %v2195 = vunpack.c.h.b16 %v1884
    %v2196 = vunpack.c.l.b16 %v1885
    %v2197 = vunpack.c.h.b16 %v1885
    %v2198 = vunpack.c.l.b16 %v1886
    %v2199 = vunpack.c.h.b16 %v1886
    %v2200 = vunpack.c.l.b16 %v1887
    %v2201 = vunpack.c.h.b16 %v1887
    %v2202 = vunpack.c.l.b16 %v1888
    %v2203 = vunpack.c.h.b16 %v1888
    %v2204 = vunpack.c.l.b16 %v1889
    %v2205 = vunpack.c.h.b16 %v1889
    %v2206 = vunpack.c.l.b16 %v1890
    %v2207 = vunpack.c.h.b16 %v1890
    %v2208 = vunpack.c.l.b16 %v1891
    %v2209 = vunpack.c.h.b16 %v1891
    %v2210 = vunpack.c.l.b16 %v1892
    %v2211 = vunpack.c.h.b16 %v1892
    %v2212 = vunpack.c.l.b16 %v1893
    %v2213 = vunpack.c.h.b16 %v1893
    %v2214 = vunpack.c.l.b16 %v1894
    %v2215 = vunpack.c.h.b16 %v1894
    %v2216 = vunpack.c.l.b16 %v1895
    %v2217 = vunpack.c.h.b16 %v1895
    %v2218 = vunpack.c.l.b16 %v1896
    %v2219 = vunpack.c.h.b16 %v1896
    %v2220 = vunpack.c.l.b16 %v1897
    %v2221 = vunpack.c.h.b16 %v1897
    %v2222 = vunpack.c.l.b16 %v1898
    %v2223 = vunpack.c.h.b16 %v1898
    %v2224 = vunpack.c.l.b16 %v1899
    %v2225 = vunpack.c.h.b16 %v1899
    %v2226 = vunpack.c.l.b16 %v1900
    %v2227 = vunpack.c.h.b16 %v1900
    %v2228 = vunpack.c.l.b16 %v1901
    %v2229 = vunpack.c.h.b16 %v1901
    %v2230 = vunpack.c.l.b16 %v1902
    %v2231 = vunpack.c.h.b16 %v1902
    %v2232 = vunpack.c.l.b16 %v1903
    %v2233 = vunpack.c.h.b16 %v1903
    %v2234 = vunpack.c.l.b16 %v1904
    %v2235 = vunpack.c.h.b16 %v1904
    %v2236 = vunpack.c.l.b16 %v1905
    %v2237 = vunpack.c.h.b16 %v1905
    %v2238 = vunpack.c.l.b16 %v1906
    %v2239 = vunpack.c.h.b16 %v1906
    %v2240 = vunpack.c.l.b16 %v1907
    %v2241 = vunpack.c.h.b16 %v1907
    %v2242 = vunpack.c.l.b16 %v1908
    %v2243 = vunpack.c.h.b16 %v1908
    %v2244 = vunpack.c.l.b16 %v1909
    %v2245 = vunpack.c.h.b16 %v1909
    %v2246 = vunpack.c.l.b16 %v1910
    %v2247 = vunpack.c.h.b16 %v1910
    %v2248 = vunpack.c.l.b16 %v1911
    %v2249 = vunpack.c.h.b16 %v1911
    %v2250 = vunpack.c.l.b16 %v1912
    %v2251 = vunpack.c.h.b16 %v1912
    %v2252 = vunpack.c.l.b16 %v1913
    %v2253 = vunpack.c.h.b16 %v1913
    %v2254 = vunpack.c.l.b16 %v1914
    %v2255 = vunpack.c.h.b16 %v1914
    %v2256 = vunpack.c.l.b16 %v1915
    %v2257 = vunpack.c.h.b16 %v1915
    %v2258 = vunpack.c.l.b16 %v1916
    %v2259 = vunpack.c.h.b16 %v1916
    %v2260 = vunpack.c.l.b16 %v1917
    %v2261 = vunpack.c.h.b16 %v1917
    %v2262 = vunpack.c.l.b16 %v1918
    %v2263 = vunpack.c.h.b16 %v1918
    %v2264 = vunpack.c.l.b16 %v1919
    %v2265 = vunpack.c.h.b16 %v1919
    %v2266 = vunpack.c.l.b16 %v1920
    %v2267 = vunpack.c.h.b16 %v1920
    %v2268 = vunpack.c.l.b16 %v1921
    %v2269 = vunpack.c.h.b16 %v1921
    %v2270 = vunpack.c.l.b16 %v1922
    %v2271 = vunpack.c.h.b16 %v1922
    %v2272 = vunpack.c.l.b16 %v1923
    %v2273 = vunpack.c.h.b16 %v1923
    %v2274 = vunpack.c.l.b16 %v1924
    %v2275 = vunpack.c.h.b16 %v1924
    %v2276 = vunpack.c.l.b16 %v1925
    %v2277 = vunpack.c.h.b16 %v1925
    %v2278 = vunpack.c.l.b16 %v1926
    %v2279 = vunpack.c.h.b16 %v1926
    %v2280 = vunpack.c.l.b16 %v1927
    %v2281 = vunpack.c.h.b16 %v1927
    %v2282 = vunpack.c.l.b16 %v1928
    %v2283 = vunpack.c.h.b16 %v1928
    %v2284 = vunpack.c.l.b16 %v1929
    %v2285 = vunpack.c.h.b16 %v1929
    %v2286 = vunpack.c.l.b16 %v1930
    %v2287 = vunpack.c.h.b16 %v1930
    %v2288 = vunpack.c.l.b16 %v1931
    %v2289 = vunpack.c.h.b16 %v1931
    %v2290 = vunpack.c.l.b16 %v1932
    %v2291 = vunpack.c.h.b16 %v1932
    %v2292 = vunpack.c.l.b16 %v1933
    %v2293 = vunpack.c.h.b16 %v1933
    %v2294 = vunpack.c.l.b16 %v1934
    %v2295 = vunpack.c.h.b16 %v1934
    %v2296 = vunpack.c.l.b16 %v1935
    %v2297 = vunpack.c.h.b16 %v1935
    %v2298 = vunpack.c.l.b16 %v1936
    %v2299 = vunpack.c.h.b16 %v1936
    %v2300 = vunpack.c.l.b16 %v1937
    %v2301 = vunpack.c.h.b16 %v1937
    %v2302 = vunpack.c.l.b16 %v1938
    %v2303 = vunpack.c.h.b16 %v1938
    %v2304 = vunpack.c.l.b16 %v1939
    %v2305 = vunpack.c.h.b16 %v1939
    %v2306 = vunpack.c.l.b16 %v1940
    %v2307 = vunpack.c.h.b16 %v1940
    %v2308 = vunpack.c.l.b16 %v1941
    %v2309 = vunpack.c.h.b16 %v1941
    %v2310 = vunpack.c.l.b16 %v1942
    %v2311 = vunpack.c.h.b16 %v1942
    %v2312 = vunpack.c.l.b16 %v1943
    %v2313 = vunpack.c.h.b16 %v1943
    %v2314 = vunpack.c.l.b16 %v1944
    %v2315 = vunpack.c.h.b16 %v1944
    %v2316 = vunpack.c.l.b16 %v1945
    %v2317 = vunpack.c.h.b16 %v1945
    %v2318 = vunpack.c.l.b16 %v1946
    %v2319 = vunpack.c.h.b16 %v1946
    %v2320 = vunpack.c.l.b16 %v1947
    %v2321 = vunpack.c.h.b16 %v1947
    %v2322 = vunpack.c.l.b16 %v1948
    %v2323 = vunpack.c.h.b16 %v1948
    %v2324 = vunpack.c.l.b16 %v1949
    %v2325 = vunpack.c.h.b16 %v1949
    %v2326 = vunpack.c.l.b16 %v1950
    %v2327 = vunpack.c.h.b16 %v1950
    %v2328 = vunpack.c.l.b16 %v1951
    %v2329 = vunpack.c.h.b16 %v1951
    %v2330 = vunpack.c.l.b16 %v1952
    %v2331 = vunpack.c.h.b16 %v1952
    %v2332 = vunpack.c.l.b16 %v1953
    %v2333 = vunpack.c.h.b16 %v1953
    %v2334 = vunpack.c.l.b16 %v1954
    %v2335 = vunpack.c.h.b16 %v1954
    %v2336 = vunpack.c.l.b16 %v1955
    %v2337 = vunpack.c.h.b16 %v1955
    %v2338 = vunpack.c.l.b16 %v1956
    %v2339 = vunpack.c.h.b16 %v1956
    %v2340 = vunpack.c.l.b16 %v1957
    %v2341 = vunpack.c.h.b16 %v1957
    %v2342 = vunpack.c.l.b16 %v1958
    %v2343 = vunpack.c.h.b16 %v1958
    %v2344 = vunpack.c.l.b16 %v1959
    %v2345 = vunpack.c.h.b16 %v1959
    %v2346 = vunpack.c.l.b16 %v1960
    %v2347 = vunpack.c.h.b16 %v1960
    %v2348 = vunpack.c.l.b16 %v1961
    %v2349 = vunpack.c.h.b16 %v1961
    %v2350 = vunpack.c.l.b16 %v1962
    %v2351 = vunpack.c.h.b16 %v1962
    %v2352 = vunpack.c.l.b16 %v1963
    %v2353 = vunpack.c.h.b16 %v1963
    %v2354 = vunpack.c.l.b16 %v1964
    %v2355 = vunpack.c.h.b16 %v1964
    %v2356 = vunpack.c.l.b16 %v1965
    %v2357 = vunpack.c.h.b16 %v1965
    %v2358 = vunpack.c.l.b16 %v1966
    %v2359 = vunpack.c.h.b16 %v1966
    %v2360 = vunpack.c.l.b16 %v1967
    %v2361 = vunpack.c.h.b16 %v1967
    %v2362 = vunpack.c.l.b16 %v1968
    %v2363 = vunpack.c.h.b16 %v1968
    %v2364 = vunpack.c.l.b16 %v1969
    %v2365 = vunpack.c.h.b16 %v1969
    %v2366 = vunpack.c.l.b16 %v1970
    %v2367 = vunpack.c.h.b16 %v1970
    %v2368 = vunpack.c.l.b16 %v1971
    %v2369 = vunpack.c.h.b16 %v1971
    %v2370 = vunpack.c.l.b16 %v1972
    %v2371 = vunpack.c.h.b16 %v1972
    %v2372 = vunpack.c.l.b16 %v1973
    %v2373 = vunpack.c.h.b16 %v1973
    %v2374 = vunpack.c.l.b16 %v1974
    %v2375 = vunpack.c.h.b16 %v1974
    %v2376 = vunpack.c.l.b16 %v1975
    %v2377 = vunpack.c.h.b16 %v1975
    %v2378 = vunpack.c.l.b16 %v1976
    %v2379 = vunpack.c.h.b16 %v1976
    %v2380 = vunpack.c.l.b16 %v1977
    %v2381 = vunpack.c.h.b16 %v1977
    %v2382 = vunpack.c.l.b16 %v1978
    %v2383 = vunpack.c.h.b16 %v1978
    %v2384 = vunpack.c.l.b16 %v1979
    %v2385 = vunpack.c.h.b16 %v1979
    %v2386 = vunpack.c.l.b16 %v1980
    %v2387 = vunpack.c.h.b16 %v1980
    %v2388 = vunpack.c.l.b16 %v1981
    %v2389 = vunpack.c.h.b16 %v1981
    %v2390 = vunpack.c.l.b16 %v1982
    %v2391 = vunpack.c.h.b16 %v1982
    %v2392 = vunpack.c.l.b16 %v1983
    %v2393 = vunpack.c.h.b16 %v1983
    %v2394 = vunpack.c.l.b16 %v1984
    %v2395 = vunpack.c.h.b16 %v1984
    %v2396 = vunpack.c.l.b16 %v1985
    %v2397 = vunpack.c.h.b16 %v1985
    %v2398 = vunpack.c.l.b16 %v1986
    %v2399 = vunpack.c.h.b16 %v1986
    %v2400 = vunpack.c.l.b16 %v1987
    %v2401 = vunpack.c.h.b16 %v1987
    %v2402 = vunpack.c.l.b16 %v1988
    %v2403 = vunpack.c.h.b16 %v1988
    %v2404 = vunpack.c.l.b16 %v1989
    %v2405 = vunpack.c.h.b16 %v1989
    %v2406 = vunpack.c.l.b16 %v1990
    %v2407 = vunpack.c.h.b16 %v1990
    %v2408 = vunpack.c.l.b16 %v1991
    %v2409 = vunpack.c.h.b16 %v1991
    %v2410 = vunpack.c.l.b16 %v1992
    %v2411 = vunpack.c.h.b16 %v1992
    %v2412 = vunpack.c.l.b16 %v1993
    %v2413 = vunpack.c.h.b16 %v1993
    %v2414 = vunpack.c.l.b16 %v1994
    %v2415 = vunpack.c.h.b16 %v1994
    %v2416 = vunpack.c.l.b16 %v1995
    %v2417 = vunpack.c.h.b16 %v1995
    %v2418 = vunpack.c.l.b16 %v1996
    %v2419 = vunpack.c.h.b16 %v1996
    %v2420 = vunpack.c.l.b16 %v1997
    %v2421 = vunpack.c.h.b16 %v1997
    %v2422 = vunpack.c.l.b16 %v1998
    %v2423 = vunpack.c.h.b16 %v1998
    %v2424 = vunpack.c.l.b16 %v1999
    %v2425 = vunpack.c.h.b16 %v1999
    %v2426 = vpack.c.b16 %v2178, %v2170
    %v2427 = vpack.c.b16 %v2179, %v2171
    %v2428 = vpack.c.b16 %v2180, %v2172
    %v2429 = vpack.c.b16 %v2181, %v2173
    %v2430 = vpack.c.b16 %v2182, %v2174
    %v2431 = vpack.c.b16 %v2183, %v2175
    %v2432 = vpack.c.b16 %v2184, %v2176
    %v2433 = vpack.c.b16 %v2185, %v2177
    %v2434 = vpack.c.b16 %v2194, %v2186
    %v2435 = vpack.c.b16 %v2195, %v2187
    %v2436 = vpack.c.b16 %v2196, %v2188
    %v2437 = vpack.c.b16 %v2197, %v2189
    %v2438 = vpack.c.b16 %v2198, %v2190
    %v2439 = vpack.c.b16 %v2199, %v2191
    %v2440 = vpack.c.b16 %v2200, %v2192
    %v2441 = vpack.c.b16 %v2201, %v2193
    %v2442 = vpack.c.b16 %v2210, %v2202
    %v2443 = vpack.c.b16 %v2211, %v2203
    %v2444 = vpack.c.b16 %v2212, %v2204
    %v2445 = vpack.c.b16 %v2213, %v2205
    %v2446 = vpack.c.b16 %v2214, %v2206
    %v2447 = vpack.c.b16 %v2215, %v2207
    %v2448 = vpack.c.b16 %v2216, %v2208
    %v2449 = vpack.c.b16 %v2217, %v2209
    %v2450 = vpack.c.b16 %v2226, %v2218
    %v2451 = vpack.c.b16 %v2227, %v2219
    %v2452 = vpack.c.b16 %v2228, %v2220
    %v2453 = vpack.c.b16 %v2229, %v2221
    %v2454 = vpack.c.b16 %v2230, %v2222
    %v2455 = vpack.c.b16 %v2231, %v2223
    %v2456 = vpack.c.b16 %v2232, %v2224
    %v2457 = vpack.c.b16 %v2233, %v2225
    %v2458 = vpack.c.b16 %v2242, %v2234
    %v2459 = vpack.c.b16 %v2243, %v2235
    %v2460 = vpack.c.b16 %v2244, %v2236
    %v2461 = vpack.c.b16 %v2245, %v2237
    %v2462 = vpack.c.b16 %v2246, %v2238
    %v2463 = vpack.c.b16 %v2247, %v2239
    %v2464 = vpack.c.b16 %v2248, %v2240
    %v2465 = vpack.c.b16 %v2249, %v2241
    %v2466 = vpack.c.b16 %v2258, %v2250
    %v2467 = vpack.c.b16 %v2259, %v2251
    %v2468 = vpack.c.b16 %v2260, %v2252
    %v2469 = vpack.c.b16 %v2261, %v2253
    %v2470 = vpack.c.b16 %v2262, %v2254
    %v2471 = vpack.c.b16 %v2263, %v2255
    %v2472 = vpack.c.b16 %v2264, %v2256
    %v2473 = vpack.c.b16 %v2265, %v2257
    %v2474 = vpack.c.b16 %v2274, %v2266
    %v2475 = vpack.c.b16 %v2275, %v2267
    %v2476 = vpack.c.b16 %v2276, %v2268
    %v2477 = vpack.c.b16 %v2277, %v2269
    %v2478 = vpack.c.b16 %v2278, %v2270
    %v2479 = vpack.c.b16 %v2279, %v2271
    %v2480 = vpack.c.b16 %v2280, %v2272
    %v2481 = vpack.c.b16 %v2281, %v2273
    %v2482 = vpack.c.b16 %v2290, %v2282
    %v2483 = vpack.c.b16 %v2291, %v2283
    %v2484 = vpack.c.b16 %v2292, %v2284
    %v2485 = vpack.c.b16 %v2293, %v2285
    %v2486 = vpack.c.b16 %v2294, %v2286
    %v2487 = vpack.c.b16 %v2295, %v2287
    %v2488 = vpack.c.b16 %v2296, %v2288
    %v2489 = vpack.c.b16 %v2297, %v2289
    %v2490 = vpack.c.b16 %v2306, %v2298
    %v2491 = vpack.c.b16 %v2307, %v2299
    %v2492 = vpack.c.b16 %v2308, %v2300
    %v2493 = vpack.c.b16 %v2309, %v2301
    %v2494 = vpack.c.b16 %v2310, %v2302
    %v2495 = vpack.c.b16 %v2311, %v2303
    %v2496 = vpack.c.b16 %v2312, %v2304
    %v2497 = vpack.c.b16 %v2313, %v2305
    %v2498 = vpack.c.b16 %v2322, %v2314
    %v2499 = vpack.c.b16 %v2323, %v2315
    %v2500 = vpack.c.b16 %v2324, %v2316
    %v2501 = vpack.c.b16 %v2325, %v2317
    %v2502 = vpack.c.b16 %v2326, %v2318
    %v2503 = vpack.c.b16 %v2327, %v2319
    %v2504 = vpack.c.b16 %v2328, %v2320
    %v2505 = vpack.c.b16 %v2329, %v2321
    %v2506 = vpack.c.b16 %v2338, %v2330
    %v2507 = vpack.c.b16 %v2339, %v2331
    %v2508 = vpack.c.b16 %v2340, %v2332
    %v2509 = vpack.c.b16 %v2341, %v2333
    %v2510 = vpack.c.b16 %v2342, %v2334
    %v2511 = vpack.c.b16 %v2343, %v2335
    %v2512 = vpack.c.b16 %v2344, %v2336
    %v2513 = vpack.c.b16 %v2345, %v2337
    %v2514 = vpack.c.b16 %v2354, %v2346
    %v2515 = vpack.c.b16 %v2355, %v2347
    %v2516 = vpack.c.b16 %v2356, %v2348
    %v2517 = vpack.c.b16 %v2357, %v2349
    %v2518 = vpack.c.b16 %v2358, %v2350
    %v2519 = vpack.c.b16 %v2359, %v2351
    %v2520 = vpack.c.b16 %v2360, %v2352
    %v2521 = vpack.c.b16 %v2361, %v2353
    %v2522 = vpack.c.b16 %v2370, %v2362
    %v2523 = vpack.c.b16 %v2371, %v2363
    %v2524 = vpack.c.b16 %v2372, %v2364
    %v2525 = vpack.c.b16 %v2373, %v2365
    %v2526 = vpack.c.b16 %v2374, %v2366
    %v2527 = vpack.c.b16 %v2375, %v2367
    %v2528 = vpack.c.b16 %v2376, %v2368
    %v2529 = vpack.c.b16 %v2377, %v2369
    %v2530 = vpack.c.b16 %v2386, %v2378
    %v2531 = vpack.c.b16 %v2387, %v2379
    %v2532 = vpack.c.b16 %v2388, %v2380
    %v2533 = vpack.c.b16 %v2389, %v2381
    %v2534 = vpack.c.b16 %v2390, %v2382
    %v2535 = vpack.c.b16 %v2391, %v2383
    %v2536 = vpack.c.b16 %v2392, %v2384
    %v2537 = vpack.c.b16 %v2393, %v2385
    %v2538 = vpack.c.b16 %v2402, %v2394
    %v2539 = vpack.c.b16 %v2403, %v2395
    %v2540 = vpack.c.b16 %v2404, %v2396
    %v2541 = vpack.c.b16 %v2405, %v2397
    %v2542 = vpack.c.b16 %v2406, %v2398
    %v2543 = vpack.c.b16 %v2407, %v2399
    %v2544 = vpack.c.b16 %v2408, %v2400
    %v2545 = vpack.c.b16 %v2409, %v2401
    %v2546 = vpack.c.b16 %v2418, %v2410
    %v2547 = vpack.c.b16 %v2419, %v2411
    %v2548 = vpack.c.b16 %v2420, %v2412
    %v2549 = vpack.c.b16 %v2421, %v2413
    %v2550 = vpack.c.b16 %v2422, %v2414
    %v2551 = vpack.c.b16 %v2423, %v2415
    %v2552 = vpack.c.b16 %v2424, %v2416
    %v2553 = vpack.c.b16 %v2425, %v2417
    %2682 = vmatprep.subr.bf16.mxu0 %v2483
    %2683 = vmatpush1.bf16.msra.mxu0 %v2482
    %2684 = vmatprep.subr.bf16.mxu0 %v2475
    %2685 = vmatpush1.bf16.msra.mxu0 %v2474
    %2686 = vmatprep.subr.bf16.mxu0 %v2467
    %2687 = vmatpush1.bf16.msra.mxu0 %v2466
    %2688 = vmatprep.subr.bf16.mxu0 %v2459
    %2689 = vmatpush1.bf16.msra.mxu0 %v2458
    %2690 = vmatprep.subr.bf16.mxu0 %v2451
    %2691 = vmatpush1.bf16.msra.mxu0 %v2450
    %2692 = vmatprep.subr.bf16.mxu0 %v2443
    %2693 = vmatpush1.bf16.msra.mxu0 %v2442
    %2694 = vmatprep.subr.bf16.mxu0 %v2435
    %2695 = vmatpush1.bf16.msra.mxu0 %v2434
    %2696 = vmatprep.subr.bf16.mxu0 %v2427
    %2697 = vmatpush1.bf16.msra.mxu0 %v2426
    %2698 = vmatprep.subr.bf16.mxu0 %v2547
    %2699 = vmatpush2.bf16.msra.mxu0 %v2546
    %2700 = vmatprep.subr.bf16.mxu0 %v2539
    %2701 = vmatpush2.bf16.msra.mxu0 %v2538
    %2702 = vmatprep.subr.bf16.mxu0 %v2531
    %2703 = vmatpush2.bf16.msra.mxu0 %v2530
    %2704 = vmatprep.subr.bf16.mxu0 %v2523
    %2705 = vmatpush2.bf16.msra.mxu0 %v2522
    %2706 = vmatprep.subr.bf16.mxu0 %v2515
    %2707 = vmatpush2.bf16.msra.mxu0 %v2514
    %2708 = vmatprep.subr.bf16.mxu0 %v2507
    %2709 = vmatpush2.bf16.msra.mxu0 %v2506
    %2710 = vmatprep.subr.bf16.mxu0 %v2499
    %2711 = vmatpush2.bf16.msra.mxu0 %v2498
    %2712 = vmatprep.subr.bf16.mxu0 %v2491
    %2713 = vmatpush2.bf16.msra.mxu0 %v2490
    %2714 = vmatprep.mubr.bf16.mxu0 %v1869
    %2715 = vmatmul.mubr.bf16.gmra.mxu0 %v1868
    %v2716 = vpop.f32.mrf.mxu0
    %v2717 = vadd.f32 %v2005, %v2716
    %v2718 = vpop.f32.mrf.mxu0
    %v2719 = vadd.f32 %v2009, %v2718
    %v2720 = vpop.f32.mrf.mxu0
    %v2721 = vadd.f32 %v2005, %v2720
    %v2722 = vpop.f32.mrf.mxu0
    %v2723 = vadd.f32 %v2009, %v2722
    %2724 = vmatprep.mubr.bf16.mxu0 %v1871
    %2725 = vmatmul.mubr.bf16.gmra.mxu0 %v1870
    %v2726 = vpop.f32.mrf.mxu0
    %v2727 = vadd.f32 %v2005, %v2726
    %v2728 = vpop.f32.mrf.mxu0
    %v2729 = vadd.f32 %v2009, %v2728
    %v2730 = vpop.f32.mrf.mxu0
    %v2731 = vadd.f32 %v2005, %v2730
    %v2732 = vpop.f32.mrf.mxu0
    %v2733 = vadd.f32 %v2009, %v2732
    %2734 = vdwg.mxu0
    %2735 = vmatprep.subr.bf16.mxu0 %v2485
    %2736 = vmatpush1.bf16.msra.mxu0 %v2484
    %2737 = vmatprep.subr.bf16.mxu0 %v2477
    %2738 = vmatpush1.bf16.msra.mxu0 %v2476
    %2739 = vmatprep.subr.bf16.mxu0 %v2469
    %2740 = vmatpush1.bf16.msra.mxu0 %v2468
    %2741 = vmatprep.subr.bf16.mxu0 %v2461
    %2742 = vmatpush1.bf16.msra.mxu0 %v2460
    %2743 = vmatprep.subr.bf16.mxu0 %v2453
    %2744 = vmatpush1.bf16.msra.mxu0 %v2452
    %2745 = vmatprep.subr.bf16.mxu0 %v2445
    %2746 = vmatpush1.bf16.msra.mxu0 %v2444
    %2747 = vmatprep.subr.bf16.mxu0 %v2437
    %2748 = vmatpush1.bf16.msra.mxu0 %v2436
    %2749 = vmatprep.subr.bf16.mxu0 %v2429
    %2750 = vmatpush1.bf16.msra.mxu0 %v2428
    %2751 = vmatprep.subr.bf16.mxu0 %v2549
    %2752 = vmatpush2.bf16.msra.mxu0 %v2548
    %2753 = vmatprep.subr.bf16.mxu0 %v2541
    %2754 = vmatpush2.bf16.msra.mxu0 %v2540
    %2755 = vmatprep.subr.bf16.mxu0 %v2533
    %2756 = vmatpush2.bf16.msra.mxu0 %v2532
    %2757 = vmatprep.subr.bf16.mxu0 %v2525
    %2758 = vmatpush2.bf16.msra.mxu0 %v2524
    %2759 = vmatprep.subr.bf16.mxu0 %v2517
    %2760 = vmatpush2.bf16.msra.mxu0 %v2516
    %2761 = vmatprep.subr.bf16.mxu0 %v2509
    %2762 = vmatpush2.bf16.msra.mxu0 %v2508
    %2763 = vmatprep.subr.bf16.mxu0 %v2501
    %2764 = vmatpush2.bf16.msra.mxu0 %v2500
    %2765 = vmatprep.subr.bf16.mxu0 %v2493
    %2766 = vmatpush2.bf16.msra.mxu0 %v2492
    %2767 = vmatprep.mubr.bf16.mxu0 %v1869
    %2768 = vmatmul.mubr.bf16.gmra.mxu0 %v1868
    %v2769 = vpop.f32.mrf.mxu0
    %v2770 = vadd.f32 %v2013, %v2769
    %v2771 = vpop.f32.mrf.mxu0
    %v2772 = vadd.f32 %v2017, %v2771
    %v2773 = vpop.f32.mrf.mxu0
    %v2774 = vadd.f32 %v2013, %v2773
    %v2775 = vpop.f32.mrf.mxu0
    %v2776 = vadd.f32 %v2017, %v2775
    %2777 = vmatprep.mubr.bf16.mxu0 %v1871
    %2778 = vmatmul.mubr.bf16.gmra.mxu0 %v1870
    %v2779 = vpop.f32.mrf.mxu0
    %v2780 = vadd.f32 %v2013, %v2779
    %v2781 = vpop.f32.mrf.mxu0
    %v2782 = vadd.f32 %v2017, %v2781
    %v2783 = vpop.f32.mrf.mxu0
    %v2784 = vadd.f32 %v2013, %v2783
    %v2785 = vpop.f32.mrf.mxu0
    %v2786 = vadd.f32 %v2017, %v2785
    %2787 = vdwg.mxu0
    %2788 = vmatprep.subr.bf16.mxu0 %v2487
    %2789 = vmatpush1.bf16.msra.mxu0 %v2486
    %2790 = vmatprep.subr.bf16.mxu0 %v2479
    %2791 = vmatpush1.bf16.msra.mxu0 %v2478
    %2792 = vmatprep.subr.bf16.mxu0 %v2471
    %2793 = vmatpush1.bf16.msra.mxu0 %v2470
    %2794 = vmatprep.subr.bf16.mxu0 %v2463
    %2795 = vmatpush1.bf16.msra.mxu0 %v2462
    %2796 = vmatprep.subr.bf16.mxu0 %v2455
    %2797 = vmatpush1.bf16.msra.mxu0 %v2454
    %2798 = vmatprep.subr.bf16.mxu0 %v2447
    %2799 = vmatpush1.bf16.msra.mxu0 %v2446
    %2800 = vmatprep.subr.bf16.mxu0 %v2439
    %2801 = vmatpush1.bf16.msra.mxu0 %v2438
    %2802 = vmatprep.subr.bf16.mxu0 %v2431
    %2803 = vmatpush1.bf16.msra.mxu0 %v2430
    %2804 = vmatprep.subr.bf16.mxu0 %v2551
    %2805 = vmatpush2.bf16.msra.mxu0 %v2550
    %2806 = vmatprep.subr.bf16.mxu0 %v2543
    %2807 = vmatpush2.bf16.msra.mxu0 %v2542
    %2808 = vmatprep.subr.bf16.mxu0 %v2535
    %2809 = vmatpush2.bf16.msra.mxu0 %v2534
    %2810 = vmatprep.subr.bf16.mxu0 %v2527
    %2811 = vmatpush2.bf16.msra.mxu0 %v2526
    %2812 = vmatprep.subr.bf16.mxu0 %v2519
    %2813 = vmatpush2.bf16.msra.mxu0 %v2518
    %2814 = vmatprep.subr.bf16.mxu0 %v2511
    %2815 = vmatpush2.bf16.msra.mxu0 %v2510
    %2816 = vmatprep.subr.bf16.mxu0 %v2503
    %2817 = vmatpush2.bf16.msra.mxu0 %v2502
    %2818 = vmatprep.subr.bf16.mxu0 %v2495
    %2819 = vmatpush2.bf16.msra.mxu0 %v2494
    %2820 = vmatprep.mubr.bf16.mxu0 %v1869
    %2821 = vmatmul.mubr.bf16.gmra.mxu0 %v1868
    %v2822 = vpop.f32.mrf.mxu0
    %v2823 = vadd.f32 %v2021, %v2822
    %v2824 = vpop.f32.mrf.mxu0
    %v2825 = vadd.f32 %v2025, %v2824
    %v2826 = vpop.f32.mrf.mxu0
    %v2827 = vadd.f32 %v2021, %v2826
    %v2828 = vpop.f32.mrf.mxu0
    %v2829 = vadd.f32 %v2025, %v2828
    %2830 = vmatprep.mubr.bf16.mxu0 %v1871
    %2831 = vmatmul.mubr.bf16.gmra.mxu0 %v1870
    %v2832 = vpop.f32.mrf.mxu0
    %v2833 = vadd.f32 %v2021, %v2832
    %v2834 = vpop.f32.mrf.mxu0
    %v2835 = vadd.f32 %v2025, %v2834
    %v2836 = vpop.f32.mrf.mxu0
    %v2837 = vadd.f32 %v2021, %v2836
    %v2838 = vpop.f32.mrf.mxu0
    %v2839 = vadd.f32 %v2025, %v2838
    %2840 = vdwg.mxu0
    %2841 = vmatprep.subr.bf16.mxu0 %v2489
    %2842 = vmatpush1.bf16.msra.mxu0 %v2488
    %2843 = vmatprep.subr.bf16.mxu0 %v2481
    %2844 = vmatpush1.bf16.msra.mxu0 %v2480
    %2845 = vmatprep.subr.bf16.mxu0 %v2473
    %2846 = vmatpush1.bf16.msra.mxu0 %v2472
    %2847 = vmatprep.subr.bf16.mxu0 %v2465
    %2848 = vmatpush1.bf16.msra.mxu0 %v2464
    %2849 = vmatprep.subr.bf16.mxu0 %v2457
    %2850 = vmatpush1.bf16.msra.mxu0 %v2456
    %2851 = vmatprep.subr.bf16.mxu0 %v2449
    %2852 = vmatpush1.bf16.msra.mxu0 %v2448
    %2853 = vmatprep.subr.bf16.mxu0 %v2441
    %2854 = vmatpush1.bf16.msra.mxu0 %v2440
    %2855 = vmatprep.subr.bf16.mxu0 %v2433
    %2856 = vmatpush1.bf16.msra.mxu0 %v2432
    %2857 = vmatprep.subr.bf16.mxu0 %v2553
    %2858 = vmatpush2.bf16.msra.mxu0 %v2552
    %2859 = vmatprep.subr.bf16.mxu0 %v2545
    %2860 = vmatpush2.bf16.msra.mxu0 %v2544
    %2861 = vmatprep.subr.bf16.mxu0 %v2537
    %2862 = vmatpush2.bf16.msra.mxu0 %v2536
    %2863 = vmatprep.subr.bf16.mxu0 %v2529
    %2864 = vmatpush2.bf16.msra.mxu0 %v2528
    %2865 = vmatprep.subr.bf16.mxu0 %v2521
    %2866 = vmatpush2.bf16.msra.mxu0 %v2520
    %2867 = vmatprep.subr.bf16.mxu0 %v2513
    %2868 = vmatpush2.bf16.msra.mxu0 %v2512
    %2869 = vmatprep.subr.bf16.mxu0 %v2505
    %2870 = vmatpush2.bf16.msra.mxu0 %v2504
    %2871 = vmatprep.subr.bf16.mxu0 %v2497
    %2872 = vmatpush2.bf16.msra.mxu0 %v2496
    %2873 = vmatprep.mubr.bf16.mxu0 %v1869
    %2874 = vmatmul.mubr.bf16.gmra.mxu0 %v1868
    %v2875 = vpop.f32.mrf.mxu0
    %v2876 = vadd.f32 %v2029, %v2875
    %v2877 = vpop.f32.mrf.mxu0
    %v2878 = vadd.f32 %v2033, %v2877
    %v2879 = vpop.f32.mrf.mxu0
    %v2880 = vadd.f32 %v2029, %v2879
    %v2881 = vpop.f32.mrf.mxu0
    %v2882 = vadd.f32 %v2033, %v2881
    %2883 = vmatprep.mubr.bf16.mxu0 %v1871
    %2884 = vmatmul.mubr.bf16.gmra.mxu0 %v1870
    %v2885 = vpop.f32.mrf.mxu0
    %v2886 = vadd.f32 %v2029, %v2885
    %v2887 = vpop.f32.mrf.mxu0
    %v2888 = vadd.f32 %v2033, %v2887
    %v2889 = vpop.f32.mrf.mxu0
    %v2890 = vadd.f32 %v2029, %v2889
    %v2891 = vpop.f32.mrf.mxu0
    %v2892 = vadd.f32 %v2033, %v2891
    %2893 = vdwg.mxu0
    %v2894 = vmul.f32 %v2717, %v2717
    %v2895 = vmul.f32 %v2719, %v2719
    %v2896 = vmul.f32 %v2770, %v2770
    %v2897 = vmul.f32 %v2772, %v2772
    %v2898 = vmul.f32 %v2823, %v2823
    %v2899 = vmul.f32 %v2825, %v2825
    %v2900 = vmul.f32 %v2876, %v2876
    %v2901 = vmul.f32 %v2878, %v2878
    %v2902 = vmul.f32 %v2721, %v2721
    %v2903 = vmul.f32 %v2723, %v2723
    %v2904 = vmul.f32 %v2774, %v2774
    %v2905 = vmul.f32 %v2776, %v2776
    %v2906 = vmul.f32 %v2827, %v2827
    %v2907 = vmul.f32 %v2829, %v2829
    %v2908 = vmul.f32 %v2880, %v2880
    %v2909 = vmul.f32 %v2882, %v2882
    %v2910 = vmul.f32 %v2727, %v2727
    %v2911 = vmul.f32 %v2729, %v2729
    %v2912 = vmul.f32 %v2780, %v2780
    %v2913 = vmul.f32 %v2782, %v2782
    %v2914 = vmul.f32 %v2833, %v2833
    %v2915 = vmul.f32 %v2835, %v2835
    %v2916 = vmul.f32 %v2886, %v2886
    %v2917 = vmul.f32 %v2888, %v2888
    %v2918 = vmul.f32 %v2731, %v2731
    %v2919 = vmul.f32 %v2733, %v2733
    %v2920 = vmul.f32 %v2784, %v2784
    %v2921 = vmul.f32 %v2786, %v2786
    %v2922 = vmul.f32 %v2837, %v2837
    %v2923 = vmul.f32 %v2839, %v2839
    %v2924 = vmul.f32 %v2890, %v2890
    %v2925 = vmul.f32 %v2892, %v2892
    %v2926 = vmul.f32 %v2894, %v2717
    %v2927 = vmul.f32 %v2895, %v2719
    %v2928 = vmul.f32 %v2896, %v2770
    %v2929 = vmul.f32 %v2897, %v2772
    %v2930 = vmul.f32 %v2898, %v2823
    %v2931 = vmul.f32 %v2899, %v2825
    %v2932 = vmul.f32 %v2900, %v2876
    %v2933 = vmul.f32 %v2901, %v2878
    %v2934 = vmul.f32 %v2902, %v2721
    %v2935 = vmul.f32 %v2903, %v2723
    %v2936 = vmul.f32 %v2904, %v2774
    %v2937 = vmul.f32 %v2905, %v2776
    %v2938 = vmul.f32 %v2906, %v2827
    %v2939 = vmul.f32 %v2907, %v2829
    %v2940 = vmul.f32 %v2908, %v2880
    %v2941 = vmul.f32 %v2909, %v2882
    %v2942 = vmul.f32 %v2910, %v2727
    %v2943 = vmul.f32 %v2911, %v2729
    %v2944 = vmul.f32 %v2912, %v2780
    %v2945 = vmul.f32 %v2913, %v2782
    %v2946 = vmul.f32 %v2914, %v2833
    %v2947 = vmul.f32 %v2915, %v2835
    %v2948 = vmul.f32 %v2916, %v2886
    %v2949 = vmul.f32 %v2917, %v2888
    %v2950 = vmul.f32 %v2918, %v2731
    %v2951 = vmul.f32 %v2919, %v2733
    %v2952 = vmul.f32 %v2920, %v2784
    %v2953 = vmul.f32 %v2921, %v2786
    %v2954 = vmul.f32 %v2922, %v2837
    %v2955 = vmul.f32 %v2923, %v2839
    %v2956 = vmul.f32 %v2924, %v2890
    %v2957 = vmul.f32 %v2925, %v2892
    %v2958 = vmul.f32 %v2717, 0.5
    %v2959 = vmul.f32 %v2719, 0.5
    %v2960 = vmul.f32 %v2770, 0.5
    %v2961 = vmul.f32 %v2772, 0.5
    %v2962 = vmul.f32 %v2823, 0.5
    %v2963 = vmul.f32 %v2825, 0.5
    %v2964 = vmul.f32 %v2876, 0.5
    %v2965 = vmul.f32 %v2878, 0.5
    %v2966 = vmul.f32 %v2721, 0.5
    %v2967 = vmul.f32 %v2723, 0.5
    %v2968 = vmul.f32 %v2774, 0.5
    %v2969 = vmul.f32 %v2776, 0.5
    %v2970 = vmul.f32 %v2827, 0.5
    %v2971 = vmul.f32 %v2829, 0.5
    %v2972 = vmul.f32 %v2880, 0.5
    %v2973 = vmul.f32 %v2882, 0.5
    %v2974 = vmul.f32 %v2727, 0.5
    %v2975 = vmul.f32 %v2729, 0.5
    %v2976 = vmul.f32 %v2780, 0.5
    %v2977 = vmul.f32 %v2782, 0.5
    %v2978 = vmul.f32 %v2833, 0.5
    %v2979 = vmul.f32 %v2835, 0.5
    %v2980 = vmul.f32 %v2886, 0.5
    %v2981 = vmul.f32 %v2888, 0.5
    %v2982 = vmul.f32 %v2731, 0.5
    %v2983 = vmul.f32 %v2733, 0.5
    %v2984 = vmul.f32 %v2784, 0.5
    %v2985 = vmul.f32 %v2786, 0.5
    %v2986 = vmul.f32 %v2837, 0.5
    %v2987 = vmul.f32 %v2839, 0.5
    %v2988 = vmul.f32 %v2890, 0.5
    %v2989 = vmul.f32 %v2892, 0.5
    %v2990 = vmul.f32 %v2926, 0.048
    %v2991 = vmul.f32 %v2927, 0.048
    %v2992 = vmul.f32 %v2928, 0.048
    %v2993 = vmul.f32 %v2929, 0.048
    %v2994 = vmul.f32 %v2930, 0.048
    %v2995 = vmul.f32 %v2931, 0.048
    %v2996 = vmul.f32 %v2932, 0.048
    %v2997 = vmul.f32 %v2933, 0.048
    %v2998 = vmul.f32 %v2934, 0.048
    %v2999 = vmul.f32 %v2935, 0.048
    %v3000 = vmul.f32 %v2936, 0.048
    %v3001 = vmul.f32 %v2937, 0.048
    %v3002 = vmul.f32 %v2938, 0.048
    %v3003 = vmul.f32 %v2939, 0.048
    %v3004 = vmul.f32 %v2940, 0.048
    %v3005 = vmul.f32 %v2941, 0.048
    %v3006 = vmul.f32 %v2942, 0.048
    %v3007 = vmul.f32 %v2943, 0.048
    %v3008 = vmul.f32 %v2944, 0.048
    %v3009 = vmul.f32 %v2945, 0.048
    %v3010 = vmul.f32 %v2946, 0.048
    %v3011 = vmul.f32 %v2947, 0.048
    %v3012 = vmul.f32 %v2948, 0.048
    %v3013 = vmul.f32 %v2949, 0.048
    %v3014 = vmul.f32 %v2950, 0.048
    %v3015 = vmul.f32 %v2951, 0.048
    %v3016 = vmul.f32 %v2952, 0.048
    %v3017 = vmul.f32 %v2953, 0.048
    %v3018 = vmul.f32 %v2954, 0.048
    %v3019 = vmul.f32 %v2955, 0.048
    %v3020 = vmul.f32 %v2956, 0.048
    %v3021 = vmul.f32 %v2957, 0.048
    %v3022 = vadd.f32 %v2717, %v2990
    %v3023 = vadd.f32 %v2719, %v2991
    %v3024 = vadd.f32 %v2770, %v2992
    %v3025 = vadd.f32 %v2772, %v2993
    %v3026 = vadd.f32 %v2823, %v2994
    %v3027 = vadd.f32 %v2825, %v2995
    %v3028 = vadd.f32 %v2876, %v2996
    %v3029 = vadd.f32 %v2878, %v2997
    %v3030 = vadd.f32 %v2721, %v2998
    %v3031 = vadd.f32 %v2723, %v2999
    %v3032 = vadd.f32 %v2774, %v3000
    %v3033 = vadd.f32 %v2776, %v3001
    %v3034 = vadd.f32 %v2827, %v3002
    %v3035 = vadd.f32 %v2829, %v3003
    %v3036 = vadd.f32 %v2880, %v3004
    %v3037 = vadd.f32 %v2882, %v3005
    %v3038 = vadd.f32 %v2727, %v3006
    %v3039 = vadd.f32 %v2729, %v3007
    %v3040 = vadd.f32 %v2780, %v3008
    %v3041 = vadd.f32 %v2782, %v3009
    %v3042 = vadd.f32 %v2833, %v3010
    %v3043 = vadd.f32 %v2835, %v3011
    %v3044 = vadd.f32 %v2886, %v3012
    %v3045 = vadd.f32 %v2888, %v3013
    %v3046 = vadd.f32 %v2731, %v3014
    %v3047 = vadd.f32 %v2733, %v3015
    %v3048 = vadd.f32 %v2784, %v3016
    %v3049 = vadd.f32 %v2786, %v3017
    %v3050 = vadd.f32 %v2837, %v3018
    %v3051 = vadd.f32 %v2839, %v3019
    %v3052 = vadd.f32 %v2890, %v3020
    %v3053 = vadd.f32 %v2892, %v3021
    %v3054 = vmul.f32 %v3022, 0.7978846
    %v3055 = vmul.f32 %v3023, 0.7978846
    %v3056 = vmul.f32 %v3024, 0.7978846
    %v3057 = vmul.f32 %v3025, 0.7978846
    %v3058 = vmul.f32 %v3026, 0.7978846
    %v3059 = vmul.f32 %v3027, 0.7978846
    %v3060 = vmul.f32 %v3028, 0.7978846
    %v3061 = vmul.f32 %v3029, 0.7978846
    %v3062 = vmul.f32 %v3030, 0.7978846
    %v3063 = vmul.f32 %v3031, 0.7978846
    %v3064 = vmul.f32 %v3032, 0.7978846
    %v3065 = vmul.f32 %v3033, 0.7978846
    %v3066 = vmul.f32 %v3034, 0.7978846
    %v3067 = vmul.f32 %v3035, 0.7978846
    %v3068 = vmul.f32 %v3036, 0.7978846
    %v3069 = vmul.f32 %v3037, 0.7978846
    %v3070 = vmul.f32 %v3038, 0.7978846
    %v3071 = vmul.f32 %v3039, 0.7978846
    %v3072 = vmul.f32 %v3040, 0.7978846
    %v3073 = vmul.f32 %v3041, 0.7978846
    %v3074 = vmul.f32 %v3042, 0.7978846
    %v3075 = vmul.f32 %v3043, 0.7978846
    %v3076 = vmul.f32 %v3044, 0.7978846
    %v3077 = vmul.f32 %v3045, 0.7978846
    %v3078 = vmul.f32 %v3046, 0.7978846
    %v3079 = vmul.f32 %v3047, 0.7978846
    %v3080 = vmul.f32 %v3048, 0.7978846
    %v3081 = vmul.f32 %v3049, 0.7978846
    %v3082 = vmul.f32 %v3050, 0.7978846
    %v3083 = vmul.f32 %v3051, 0.7978846
    %v3084 = vmul.f32 %v3052, 0.7978846
    %v3085 = vmul.f32 %v3053, 0.7978846
    %v3086 = vtanh.pop %v3054
    %v3087 = vtanh.pop %v3055
    %v3088 = vtanh.pop %v3056
    %v3089 = vtanh.pop %v3057
    %v3090 = vtanh.pop %v3058
    %v3091 = vtanh.pop %v3059
    %v3092 = vtanh.pop %v3060
    %v3093 = vtanh.pop %v3061
    %v3094 = vtanh.pop %v3062
    %v3095 = vtanh.pop %v3063
    %v3096 = vtanh.pop %v3064
    %v3097 = vtanh.pop %v3065
    %v3098 = vtanh.pop %v3066
    %v3099 = vtanh.pop %v3067
    %v3100 = vtanh.pop %v3068
    %v3101 = vtanh.pop %v3069
    %v3102 = vtanh.pop %v3070
    %v3103 = vtanh.pop %v3071
    %v3104 = vtanh.pop %v3072
    %v3105 = vtanh.pop %v3073
    %v3106 = vtanh.pop %v3074
    %v3107 = vtanh.pop %v3075
    %v3108 = vtanh.pop %v3076
    %v3109 = vtanh.pop %v3077
    %v3110 = vtanh.pop %v3078
    %v3111 = vtanh.pop %v3079
    %v3112 = vtanh.pop %v3080
    %v3113 = vtanh.pop %v3081
    %v3114 = vtanh.pop %v3082
    %v3115 = vtanh.pop %v3083
    %v3116 = vtanh.pop %v3084
    %v3117 = vtanh.pop %v3085
    %v3118 = vadd.f32 %v3086, 1.0
    %v3119 = vadd.f32 %v3087, 1.0
    %v3120 = vadd.f32 %v3088, 1.0
    %v3121 = vadd.f32 %v3089, 1.0
    %v3122 = vadd.f32 %v3090, 1.0
    %v3123 = vadd.f32 %v3091, 1.0
    %v3124 = vadd.f32 %v3092, 1.0
    %v3125 = vadd.f32 %v3093, 1.0
    %v3126 = vadd.f32 %v3094, 1.0
    %v3127 = vadd.f32 %v3095, 1.0
    %v3128 = vadd.f32 %v3096, 1.0
    %v3129 = vadd.f32 %v3097, 1.0
    %v3130 = vadd.f32 %v3098, 1.0
    %v3131 = vadd.f32 %v3099, 1.0
    %v3132 = vadd.f32 %v3100, 1.0
    %v3133 = vadd.f32 %v3101, 1.0
    %v3134 = vadd.f32 %v3102, 1.0
    %v3135 = vadd.f32 %v3103, 1.0
    %v3136 = vadd.f32 %v3104, 1.0
    %v3137 = vadd.f32 %v3105, 1.0
    %v3138 = vadd.f32 %v3106, 1.0
    %v3139 = vadd.f32 %v3107, 1.0
    %v3140 = vadd.f32 %v3108, 1.0
    %v3141 = vadd.f32 %v3109, 1.0
    %v3142 = vadd.f32 %v3110, 1.0
    %v3143 = vadd.f32 %v3111, 1.0
    %v3144 = vadd.f32 %v3112, 1.0
    %v3145 = vadd.f32 %v3113, 1.0
    %v3146 = vadd.f32 %v3114, 1.0
    %v3147 = vadd.f32 %v3115, 1.0
    %v3148 = vadd.f32 %v3116, 1.0
    %v3149 = vadd.f32 %v3117, 1.0
    %v3150 = vmul.f32 %v2958, %v3118
    %v3151 = vmul.f32 %v2959, %v3119
    %v3152 = vmul.f32 %v2960, %v3120
    %v3153 = vmul.f32 %v2961, %v3121
    %v3154 = vmul.f32 %v2962, %v3122
    %v3155 = vmul.f32 %v2963, %v3123
    %v3156 = vmul.f32 %v2964, %v3124
    %v3157 = vmul.f32 %v2965, %v3125
    %v3158 = vmul.f32 %v2966, %v3126
    %v3159 = vmul.f32 %v2967, %v3127
    %v3160 = vmul.f32 %v2968, %v3128
    %v3161 = vmul.f32 %v2969, %v3129
    %v3162 = vmul.f32 %v2970, %v3130
    %v3163 = vmul.f32 %v2971, %v3131
    %v3164 = vmul.f32 %v2972, %v3132
    %v3165 = vmul.f32 %v2973, %v3133
    %v3166 = vmul.f32 %v2974, %v3134
    %v3167 = vmul.f32 %v2975, %v3135
    %v3168 = vmul.f32 %v2976, %v3136
    %v3169 = vmul.f32 %v2977, %v3137
    %v3170 = vmul.f32 %v2978, %v3138
    %v3171 = vmul.f32 %v2979, %v3139
    %v3172 = vmul.f32 %v2980, %v3140
    %v3173 = vmul.f32 %v2981, %v3141
    %v3174 = vmul.f32 %v2982, %v3142
    %v3175 = vmul.f32 %v2983, %v3143
    %v3176 = vmul.f32 %v2984, %v3144
    %v3177 = vmul.f32 %v2985, %v3145
    %v3178 = vmul.f32 %v2986, %v3146
    %v3179 = vmul.f32 %v2987, %v3147
    %v3180 = vmul.f32 %v2988, %v3148
    %v3181 = vmul.f32 %v2989, %v3149
    %v3182 = vpack.c.bf16 %v3158, %v3150
    %v3183 = vpack.c.bf16 %v3159, %v3151
    %v3184 = vpack.c.bf16 %v3160, %v3152
    %v3185 = vpack.c.bf16 %v3161, %v3153
    %v3186 = vpack.c.bf16 %v3162, %v3154
    %v3187 = vpack.c.bf16 %v3163, %v3155
    %v3188 = vpack.c.bf16 %v3164, %v3156
    %v3189 = vpack.c.bf16 %v3165, %v3157
    %v3190 = vpack.c.bf16 %v3174, %v3166
    %v3191 = vpack.c.bf16 %v3175, %v3167
    %v3192 = vpack.c.bf16 %v3176, %v3168
    %v3193 = vpack.c.bf16 %v3177, %v3169
    %v3194 = vpack.c.bf16 %v3178, %v3170
    %v3195 = vpack.c.bf16 %v3179, %v3171
    %v3196 = vpack.c.bf16 %v3180, %v3172
    %v3197 = vpack.c.bf16 %v3181, %v3173
    %v3198 = vld [vmem:[#allocation12] sm:$0xff]
    %v3199 = vld [vmem:[#allocation12 + $0x8] sm:$0xff]
    %v3200 = vld [vmem:[#allocation12 + $0x10] sm:$0xff]
    %v3201 = vld [vmem:[#allocation12 + $0x18] sm:$0xff]
    %v3202 = vld [vmem:[#allocation12 + $0x20] sm:$0xff]
    %v3203 = vld [vmem:[#allocation12 + $0x28] sm:$0xff]
    %v3204 = vld [vmem:[#allocation12 + $0x30] sm:$0xff]
    %v3205 = vld [vmem:[#allocation12 + $0x38] sm:$0xff]
    %v3206 = vld [vmem:[#allocation12 + $0x40] sm:$0xff]
    %v3207 = vld [vmem:[#allocation12 + $0x48] sm:$0xff]
    %v3208 = vld [vmem:[#allocation12 + $0x50] sm:$0xff]
    %v3209 = vld [vmem:[#allocation12 + $0x58] sm:$0xff]
    %v3210 = vld [vmem:[#allocation12 + $0x60] sm:$0xff]
    %v3211 = vld [vmem:[#allocation12 + $0x68] sm:$0xff]
    %v3212 = vld [vmem:[#allocation12 + $0x70] sm:$0xff]
    %v3213 = vld [vmem:[#allocation12 + $0x78] sm:$0xff]
    %v3214 = vld [vmem:[#allocation12 + $0x80] sm:$0xff]
    %v3215 = vld [vmem:[#allocation12 + $0x88] sm:$0xff]
    %v3216 = vld [vmem:[#allocation12 + $0x90] sm:$0xff]
    %v3217 = vld [vmem:[#allocation12 + $0x98] sm:$0xff]
    %v3218 = vld [vmem:[#allocation12 + $0xa0] sm:$0xff]
    %v3219 = vld [vmem:[#allocation12 + $0xa8] sm:$0xff]
    %v3220 = vld [vmem:[#allocation12 + $0xb0] sm:$0xff]
    %v3221 = vld [vmem:[#allocation12 + $0xb8] sm:$0xff]
    %v3222 = vld [vmem:[#allocation12 + $0xc0] sm:$0xff]
    %v3223 = vld [vmem:[#allocation12 + $0xc8] sm:$0xff]
    %v3224 = vld [vmem:[#allocation12 + $0xd0] sm:$0xff]
    %v3225 = vld [vmem:[#allocation12 + $0xd8] sm:$0xff]
    %v3226 = vld [vmem:[#allocation12 + $0xe0] sm:$0xff]
    %v3227 = vld [vmem:[#allocation12 + $0xe8] sm:$0xff]
    %v3228 = vld [vmem:[#allocation12 + $0xf0] sm:$0xff]
    %v3229 = vld [vmem:[#allocation12 + $0xf8] sm:$0xff]
    %v3230 = vld [vmem:[#allocation12 + $0x100] sm:$0xff]
    %v3231 = vld [vmem:[#allocation12 + $0x108] sm:$0xff]
    %v3232 = vld [vmem:[#allocation12 + $0x110] sm:$0xff]
    %v3233 = vld [vmem:[#allocation12 + $0x118] sm:$0xff]
    %v3234 = vld [vmem:[#allocation12 + $0x120] sm:$0xff]
    %v3235 = vld [vmem:[#allocation12 + $0x128] sm:$0xff]
    %v3236 = vld [vmem:[#allocation12 + $0x130] sm:$0xff]
    %v3237 = vld [vmem:[#allocation12 + $0x138] sm:$0xff]
    %v3238 = vld [vmem:[#allocation12 + $0x140] sm:$0xff]
    %v3239 = vld [vmem:[#allocation12 + $0x148] sm:$0xff]
    %v3240 = vld [vmem:[#allocation12 + $0x150] sm:$0xff]
    %v3241 = vld [vmem:[#allocation12 + $0x158] sm:$0xff]
    %v3242 = vld [vmem:[#allocation12 + $0x160] sm:$0xff]
    %v3243 = vld [vmem:[#allocation12 + $0x168] sm:$0xff]
    %v3244 = vld [vmem:[#allocation12 + $0x170] sm:$0xff]
    %v3245 = vld [vmem:[#allocation12 + $0x178] sm:$0xff]
    %v3246 = vld [vmem:[#allocation12 + $0x180] sm:$0xff]
    %v3247 = vld [vmem:[#allocation12 + $0x188] sm:$0xff]
    %v3248 = vld [vmem:[#allocation12 + $0x190] sm:$0xff]
    %v3249 = vld [vmem:[#allocation12 + $0x198] sm:$0xff]
    %v3250 = vld [vmem:[#allocation12 + $0x1a0] sm:$0xff]
    %v3251 = vld [vmem:[#allocation12 + $0x1a8] sm:$0xff]
    %v3252 = vld [vmem:[#allocation12 + $0x1b0] sm:$0xff]
    %v3253 = vld [vmem:[#allocation12 + $0x1b8] sm:$0xff]
    %v3254 = vld [vmem:[#allocation12 + $0x1c0] sm:$0xff]
    %v3255 = vld [vmem:[#allocation12 + $0x1c8] sm:$0xff]
    %v3256 = vld [vmem:[#allocation12 + $0x1d0] sm:$0xff]
    %v3257 = vld [vmem:[#allocation12 + $0x1d8] sm:$0xff]
    %v3258 = vld [vmem:[#allocation12 + $0x1e0] sm:$0xff]
    %v3259 = vld [vmem:[#allocation12 + $0x1e8] sm:$0xff]
    %v3260 = vld [vmem:[#allocation12 + $0x1f0] sm:$0xff]
    %v3261 = vld [vmem:[#allocation12 + $0x1f8] sm:$0xff]
    %v3262 = vld [vmem:[#allocation12 + $0x200] sm:$0xff]
    %v3263 = vld [vmem:[#allocation12 + $0x208] sm:$0xff]
    %v3264 = vld [vmem:[#allocation12 + $0x210] sm:$0xff]
    %v3265 = vld [vmem:[#allocation12 + $0x218] sm:$0xff]
    %v3266 = vld [vmem:[#allocation12 + $0x220] sm:$0xff]
    %v3267 = vld [vmem:[#allocation12 + $0x228] sm:$0xff]
    %v3268 = vld [vmem:[#allocation12 + $0x230] sm:$0xff]
    %v3269 = vld [vmem:[#allocation12 + $0x238] sm:$0xff]
    %v3270 = vld [vmem:[#allocation12 + $0x240] sm:$0xff]
    %v3271 = vld [vmem:[#allocation12 + $0x248] sm:$0xff]
    %v3272 = vld [vmem:[#allocation12 + $0x250] sm:$0xff]
    %v3273 = vld [vmem:[#allocation12 + $0x258] sm:$0xff]
    %v3274 = vld [vmem:[#allocation12 + $0x260] sm:$0xff]
    %v3275 = vld [vmem:[#allocation12 + $0x268] sm:$0xff]
    %v3276 = vld [vmem:[#allocation12 + $0x270] sm:$0xff]
    %v3277 = vld [vmem:[#allocation12 + $0x278] sm:$0xff]
    %v3278 = vld [vmem:[#allocation12 + $0x280] sm:$0xff]
    %v3279 = vld [vmem:[#allocation12 + $0x288] sm:$0xff]
    %v3280 = vld [vmem:[#allocation12 + $0x290] sm:$0xff]
    %v3281 = vld [vmem:[#allocation12 + $0x298] sm:$0xff]
    %v3282 = vld [vmem:[#allocation12 + $0x2a0] sm:$0xff]
    %v3283 = vld [vmem:[#allocation12 + $0x2a8] sm:$0xff]
    %v3284 = vld [vmem:[#allocation12 + $0x2b0] sm:$0xff]
    %v3285 = vld [vmem:[#allocation12 + $0x2b8] sm:$0xff]
    %v3286 = vld [vmem:[#allocation12 + $0x2c0] sm:$0xff]
    %v3287 = vld [vmem:[#allocation12 + $0x2c8] sm:$0xff]
    %v3288 = vld [vmem:[#allocation12 + $0x2d0] sm:$0xff]
    %v3289 = vld [vmem:[#allocation12 + $0x2d8] sm:$0xff]
    %v3290 = vld [vmem:[#allocation12 + $0x2e0] sm:$0xff]
    %v3291 = vld [vmem:[#allocation12 + $0x2e8] sm:$0xff]
    %v3292 = vld [vmem:[#allocation12 + $0x2f0] sm:$0xff]
    %v3293 = vld [vmem:[#allocation12 + $0x2f8] sm:$0xff]
    %v3294 = vld [vmem:[#allocation12 + $0x300] sm:$0xff]
    %v3295 = vld [vmem:[#allocation12 + $0x308] sm:$0xff]
    %v3296 = vld [vmem:[#allocation12 + $0x310] sm:$0xff]
    %v3297 = vld [vmem:[#allocation12 + $0x318] sm:$0xff]
    %v3298 = vld [vmem:[#allocation12 + $0x320] sm:$0xff]
    %v3299 = vld [vmem:[#allocation12 + $0x328] sm:$0xff]
    %v3300 = vld [vmem:[#allocation12 + $0x330] sm:$0xff]
    %v3301 = vld [vmem:[#allocation12 + $0x338] sm:$0xff]
    %v3302 = vld [vmem:[#allocation12 + $0x340] sm:$0xff]
    %v3303 = vld [vmem:[#allocation12 + $0x348] sm:$0xff]
    %v3304 = vld [vmem:[#allocation12 + $0x350] sm:$0xff]
    %v3305 = vld [vmem:[#allocation12 + $0x358] sm:$0xff]
    %v3306 = vld [vmem:[#allocation12 + $0x360] sm:$0xff]
    %v3307 = vld [vmem:[#allocation12 + $0x368] sm:$0xff]
    %v3308 = vld [vmem:[#allocation12 + $0x370] sm:$0xff]
    %v3309 = vld [vmem:[#allocation12 + $0x378] sm:$0xff]
    %v3310 = vld [vmem:[#allocation12 + $0x380] sm:$0xff]
    %v3311 = vld [vmem:[#allocation12 + $0x388] sm:$0xff]
    %v3312 = vld [vmem:[#allocation12 + $0x390] sm:$0xff]
    %v3313 = vld [vmem:[#allocation12 + $0x398] sm:$0xff]
    %v3314 = vld [vmem:[#allocation12 + $0x3a0] sm:$0xff]
    %v3315 = vld [vmem:[#allocation12 + $0x3a8] sm:$0xff]
    %v3316 = vld [vmem:[#allocation12 + $0x3b0] sm:$0xff]
    %v3317 = vld [vmem:[#allocation12 + $0x3b8] sm:$0xff]
    %v3318 = vld [vmem:[#allocation12 + $0x3c0] sm:$0xff]
    %v3319 = vld [vmem:[#allocation12 + $0x3c8] sm:$0xff]
    %v3320 = vld [vmem:[#allocation12 + $0x3d0] sm:$0xff]
    %v3321 = vld [vmem:[#allocation12 + $0x3d8] sm:$0xff]
    %v3322 = vld [vmem:[#allocation12 + $0x3e0] sm:$0xff]
    %v3323 = vld [vmem:[#allocation12 + $0x3e8] sm:$0xff]
    %v3324 = vld [vmem:[#allocation12 + $0x3f0] sm:$0xff]
    %v3325 = vld [vmem:[#allocation12 + $0x3f8] sm:$0xff]
    %v3326 = vld [vmem:[%s7] sm:$0x3]
    %v3328 = vlaneseq
    %v3329 = vshrl.u32 %v3328, 7
    %v3330 = vsub.s32 0, %v3329
    %v3331 = vrot.slane %v3326, %v3330
    %v3332 = vlaneseq
    %v3333 = vshrl.u32 %v3332, 7
    %v3334 = vsub.s32 1, %v3333
    %v3335 = vrot.slane %v3326, %v3334
    %v3466 = vunpack.c.l.b16 %v3198
    %v3467 = vunpack.c.h.b16 %v3198
    %v3468 = vunpack.c.l.b16 %v3199
    %v3469 = vunpack.c.h.b16 %v3199
    %v3470 = vunpack.c.l.b16 %v3200
    %v3471 = vunpack.c.h.b16 %v3200
    %v3472 = vunpack.c.l.b16 %v3201
    %v3473 = vunpack.c.h.b16 %v3201
    %v3474 = vunpack.c.l.b16 %v3202
    %v3475 = vunpack.c.h.b16 %v3202
    %v3476 = vunpack.c.l.b16 %v3203
    %v3477 = vunpack.c.h.b16 %v3203
    %v3478 = vunpack.c.l.b16 %v3204
    %v3479 = vunpack.c.h.b16 %v3204
    %v3480 = vunpack.c.l.b16 %v3205
    %v3481 = vunpack.c.h.b16 %v3205
    %v3482 = vunpack.c.l.b16 %v3206
    %v3483 = vunpack.c.h.b16 %v3206
    %v3484 = vunpack.c.l.b16 %v3207
    %v3485 = vunpack.c.h.b16 %v3207
    %v3486 = vunpack.c.l.b16 %v3208
    %v3487 = vunpack.c.h.b16 %v3208
    %v3488 = vunpack.c.l.b16 %v3209
    %v3489 = vunpack.c.h.b16 %v3209
    %v3490 = vunpack.c.l.b16 %v3210
    %v3491 = vunpack.c.h.b16 %v3210
    %v3492 = vunpack.c.l.b16 %v3211
    %v3493 = vunpack.c.h.b16 %v3211
    %v3494 = vunpack.c.l.b16 %v3212
    %v3495 = vunpack.c.h.b16 %v3212
    %v3496 = vunpack.c.l.b16 %v3213
    %v3497 = vunpack.c.h.b16 %v3213
    %v3498 = vunpack.c.l.b16 %v3214
    %v3499 = vunpack.c.h.b16 %v3214
    %v3500 = vunpack.c.l.b16 %v3215
    %v3501 = vunpack.c.h.b16 %v3215
    %v3502 = vunpack.c.l.b16 %v3216
    %v3503 = vunpack.c.h.b16 %v3216
    %v3504 = vunpack.c.l.b16 %v3217
    %v3505 = vunpack.c.h.b16 %v3217
    %v3506 = vunpack.c.l.b16 %v3218
    %v3507 = vunpack.c.h.b16 %v3218
    %v3508 = vunpack.c.l.b16 %v3219
    %v3509 = vunpack.c.h.b16 %v3219
    %v3510 = vunpack.c.l.b16 %v3220
    %v3511 = vunpack.c.h.b16 %v3220
    %v3512 = vunpack.c.l.b16 %v3221
    %v3513 = vunpack.c.h.b16 %v3221
    %v3514 = vunpack.c.l.b16 %v3222
    %v3515 = vunpack.c.h.b16 %v3222
    %v3516 = vunpack.c.l.b16 %v3223
    %v3517 = vunpack.c.h.b16 %v3223
    %v3518 = vunpack.c.l.b16 %v3224
    %v3519 = vunpack.c.h.b16 %v3224
    %v3520 = vunpack.c.l.b16 %v3225
    %v3521 = vunpack.c.h.b16 %v3225
    %v3522 = vunpack.c.l.b16 %v3226
    %v3523 = vunpack.c.h.b16 %v3226
    %v3524 = vunpack.c.l.b16 %v3227
    %v3525 = vunpack.c.h.b16 %v3227
    %v3526 = vunpack.c.l.b16 %v3228
    %v3527 = vunpack.c.h.b16 %v3228
    %v3528 = vunpack.c.l.b16 %v3229
    %v3529 = vunpack.c.h.b16 %v3229
    %v3530 = vunpack.c.l.b16 %v3230
    %v3531 = vunpack.c.h.b16 %v3230
    %v3532 = vunpack.c.l.b16 %v3231
    %v3533 = vunpack.c.h.b16 %v3231
    %v3534 = vunpack.c.l.b16 %v3232
    %v3535 = vunpack.c.h.b16 %v3232
    %v3536 = vunpack.c.l.b16 %v3233
    %v3537 = vunpack.c.h.b16 %v3233
    %v3538 = vunpack.c.l.b16 %v3234
    %v3539 = vunpack.c.h.b16 %v3234
    %v3540 = vunpack.c.l.b16 %v3235
    %v3541 = vunpack.c.h.b16 %v3235
    %v3542 = vunpack.c.l.b16 %v3236
    %v3543 = vunpack.c.h.b16 %v3236
    %v3544 = vunpack.c.l.b16 %v3237
    %v3545 = vunpack.c.h.b16 %v3237
    %v3546 = vunpack.c.l.b16 %v3238
    %v3547 = vunpack.c.h.b16 %v3238
    %v3548 = vunpack.c.l.b16 %v3239
    %v3549 = vunpack.c.h.b16 %v3239
    %v3550 = vunpack.c.l.b16 %v3240
    %v3551 = vunpack.c.h.b16 %v3240
    %v3552 = vunpack.c.l.b16 %v3241
    %v3553 = vunpack.c.h.b16 %v3241
    %v3554 = vunpack.c.l.b16 %v3242
    %v3555 = vunpack.c.h.b16 %v3242
    %v3556 = vunpack.c.l.b16 %v3243
    %v3557 = vunpack.c.h.b16 %v3243
    %v3558 = vunpack.c.l.b16 %v3244
    %v3559 = vunpack.c.h.b16 %v3244
    %v3560 = vunpack.c.l.b16 %v3245
    %v3561 = vunpack.c.h.b16 %v3245
    %v3562 = vunpack.c.l.b16 %v3246
    %v3563 = vunpack.c.h.b16 %v3246
    %v3564 = vunpack.c.l.b16 %v3247
    %v3565 = vunpack.c.h.b16 %v3247
    %v3566 = vunpack.c.l.b16 %v3248
    %v3567 = vunpack.c.h.b16 %v3248
    %v3568 = vunpack.c.l.b16 %v3249
    %v3569 = vunpack.c.h.b16 %v3249
    %v3570 = vunpack.c.l.b16 %v3250
    %v3571 = vunpack.c.h.b16 %v3250
    %v3572 = vunpack.c.l.b16 %v3251
    %v3573 = vunpack.c.h.b16 %v3251
    %v3574 = vunpack.c.l.b16 %v3252
    %v3575 = vunpack.c.h.b16 %v3252
    %v3576 = vunpack.c.l.b16 %v3253
    %v3577 = vunpack.c.h.b16 %v3253
    %v3578 = vunpack.c.l.b16 %v3254
    %v3579 = vunpack.c.h.b16 %v3254
    %v3580 = vunpack.c.l.b16 %v3255
    %v3581 = vunpack.c.h.b16 %v3255
    %v3582 = vunpack.c.l.b16 %v3256
    %v3583 = vunpack.c.h.b16 %v3256
    %v3584 = vunpack.c.l.b16 %v3257
    %v3585 = vunpack.c.h.b16 %v3257
    %v3586 = vunpack.c.l.b16 %v3258
    %v3587 = vunpack.c.h.b16 %v3258
    %v3588 = vunpack.c.l.b16 %v3259
    %v3589 = vunpack.c.h.b16 %v3259
    %v3590 = vunpack.c.l.b16 %v3260
    %v3591 = vunpack.c.h.b16 %v3260
    %v3592 = vunpack.c.l.b16 %v3261
    %v3593 = vunpack.c.h.b16 %v3261
    %v3594 = vunpack.c.l.b16 %v3262
    %v3595 = vunpack.c.h.b16 %v3262
    %v3596 = vunpack.c.l.b16 %v3263
    %v3597 = vunpack.c.h.b16 %v3263
    %v3598 = vunpack.c.l.b16 %v3264
    %v3599 = vunpack.c.h.b16 %v3264
    %v3600 = vunpack.c.l.b16 %v3265
    %v3601 = vunpack.c.h.b16 %v3265
    %v3602 = vunpack.c.l.b16 %v3266
    %v3603 = vunpack.c.h.b16 %v3266
    %v3604 = vunpack.c.l.b16 %v3267
    %v3605 = vunpack.c.h.b16 %v3267
    %v3606 = vunpack.c.l.b16 %v3268
    %v3607 = vunpack.c.h.b16 %v3268
    %v3608 = vunpack.c.l.b16 %v3269
    %v3609 = vunpack.c.h.b16 %v3269
    %v3610 = vunpack.c.l.b16 %v3270
    %v3611 = vunpack.c.h.b16 %v3270
    %v3612 = vunpack.c.l.b16 %v3271
    %v3613 = vunpack.c.h.b16 %v3271
    %v3614 = vunpack.c.l.b16 %v3272
    %v3615 = vunpack.c.h.b16 %v3272
    %v3616 = vunpack.c.l.b16 %v3273
    %v3617 = vunpack.c.h.b16 %v3273
    %v3618 = vunpack.c.l.b16 %v3274
    %v3619 = vunpack.c.h.b16 %v3274
    %v3620 = vunpack.c.l.b16 %v3275
    %v3621 = vunpack.c.h.b16 %v3275
    %v3622 = vunpack.c.l.b16 %v3276
    %v3623 = vunpack.c.h.b16 %v3276
    %v3624 = vunpack.c.l.b16 %v3277
    %v3625 = vunpack.c.h.b16 %v3277
    %v3626 = vunpack.c.l.b16 %v3278
    %v3627 = vunpack.c.h.b16 %v3278
    %v3628 = vunpack.c.l.b16 %v3279
    %v3629 = vunpack.c.h.b16 %v3279
    %v3630 = vunpack.c.l.b16 %v3280
    %v3631 = vunpack.c.h.b16 %v3280
    %v3632 = vunpack.c.l.b16 %v3281
    %v3633 = vunpack.c.h.b16 %v3281
    %v3634 = vunpack.c.l.b16 %v3282
    %v3635 = vunpack.c.h.b16 %v3282
    %v3636 = vunpack.c.l.b16 %v3283
    %v3637 = vunpack.c.h.b16 %v3283
    %v3638 = vunpack.c.l.b16 %v3284
    %v3639 = vunpack.c.h.b16 %v3284
    %v3640 = vunpack.c.l.b16 %v3285
    %v3641 = vunpack.c.h.b16 %v3285
    %v3642 = vunpack.c.l.b16 %v3286
    %v3643 = vunpack.c.h.b16 %v3286
    %v3644 = vunpack.c.l.b16 %v3287
    %v3645 = vunpack.c.h.b16 %v3287
    %v3646 = vunpack.c.l.b16 %v3288
    %v3647 = vunpack.c.h.b16 %v3288
    %v3648 = vunpack.c.l.b16 %v3289
    %v3649 = vunpack.c.h.b16 %v3289
    %v3650 = vunpack.c.l.b16 %v3290
    %v3651 = vunpack.c.h.b16 %v3290
    %v3652 = vunpack.c.l.b16 %v3291
    %v3653 = vunpack.c.h.b16 %v3291
    %v3654 = vunpack.c.l.b16 %v3292
    %v3655 = vunpack.c.h.b16 %v3292
    %v3656 = vunpack.c.l.b16 %v3293
    %v3657 = vunpack.c.h.b16 %v3293
    %v3658 = vunpack.c.l.b16 %v3294
    %v3659 = vunpack.c.h.b16 %v3294
    %v3660 = vunpack.c.l.b16 %v3295
    %v3661 = vunpack.c.h.b16 %v3295
    %v3662 = vunpack.c.l.b16 %v3296
    %v3663 = vunpack.c.h.b16 %v3296
    %v3664 = vunpack.c.l.b16 %v3297
    %v3665 = vunpack.c.h.b16 %v3297
    %v3666 = vunpack.c.l.b16 %v3298
    %v3667 = vunpack.c.h.b16 %v3298
    %v3668 = vunpack.c.l.b16 %v3299
    %v3669 = vunpack.c.h.b16 %v3299
    %v3670 = vunpack.c.l.b16 %v3300
    %v3671 = vunpack.c.h.b16 %v3300
    %v3672 = vunpack.c.l.b16 %v3301
    %v3673 = vunpack.c.h.b16 %v3301
    %v3674 = vunpack.c.l.b16 %v3302
    %v3675 = vunpack.c.h.b16 %v3302
    %v3676 = vunpack.c.l.b16 %v3303
    %v3677 = vunpack.c.h.b16 %v3303
    %v3678 = vunpack.c.l.b16 %v3304
    %v3679 = vunpack.c.h.b16 %v3304
    %v3680 = vunpack.c.l.b16 %v3305
    %v3681 = vunpack.c.h.b16 %v3305
    %v3682 = vunpack.c.l.b16 %v3306
    %v3683 = vunpack.c.h.b16 %v3306
    %v3684 = vunpack.c.l.b16 %v3307
    %v3685 = vunpack.c.h.b16 %v3307
    %v3686 = vunpack.c.l.b16 %v3308
    %v3687 = vunpack.c.h.b16 %v3308
    %v3688 = vunpack.c.l.b16 %v3309
    %v3689 = vunpack.c.h.b16 %v3309
    %v3690 = vunpack.c.l.b16 %v3310
    %v3691 = vunpack.c.h.b16 %v3310
    %v3692 = vunpack.c.l.b16 %v3311
    %v3693 = vunpack.c.h.b16 %v3311
    %v3694 = vunpack.c.l.b16 %v3312
    %v3695 = vunpack.c.h.b16 %v3312
    %v3696 = vunpack.c.l.b16 %v3313
    %v3697 = vunpack.c.h.b16 %v3313
    %v3698 = vunpack.c.l.b16 %v3314
    %v3699 = vunpack.c.h.b16 %v3314
    %v3700 = vunpack.c.l.b16 %v3315
    %v3701 = vunpack.c.h.b16 %v3315
    %v3702 = vunpack.c.l.b16 %v3316
    %v3703 = vunpack.c.h.b16 %v3316
    %v3704 = vunpack.c.l.b16 %v3317
    %v3705 = vunpack.c.h.b16 %v3317
    %v3706 = vunpack.c.l.b16 %v3318
    %v3707 = vunpack.c.h.b16 %v3318
    %v3708 = vunpack.c.l.b16 %v3319
    %v3709 = vunpack.c.h.b16 %v3319
    %v3710 = vunpack.c.l.b16 %v3320
    %v3711 = vunpack.c.h.b16 %v3320
    %v3712 = vunpack.c.l.b16 %v3321
    %v3713 = vunpack.c.h.b16 %v3321
    %v3714 = vunpack.c.l.b16 %v3322
    %v3715 = vunpack.c.h.b16 %v3322
    %v3716 = vunpack.c.l.b16 %v3323
    %v3717 = vunpack.c.h.b16 %v3323
    %v3718 = vunpack.c.l.b16 %v3324
    %v3719 = vunpack.c.h.b16 %v3324
    %v3720 = vunpack.c.l.b16 %v3325
    %v3721 = vunpack.c.h.b16 %v3325
    %v3722 = vpack.c.b16 %v3468, %v3466
    %v3723 = vpack.c.b16 %v3469, %v3467
    %v3724 = vpack.c.b16 %v3472, %v3470
    %v3725 = vpack.c.b16 %v3473, %v3471
    %v3726 = vpack.c.b16 %v3476, %v3474
    %v3727 = vpack.c.b16 %v3477, %v3475
    %v3728 = vpack.c.b16 %v3480, %v3478
    %v3729 = vpack.c.b16 %v3481, %v3479
    %v3730 = vpack.c.b16 %v3484, %v3482
    %v3731 = vpack.c.b16 %v3485, %v3483
    %v3732 = vpack.c.b16 %v3488, %v3486
    %v3733 = vpack.c.b16 %v3489, %v3487
    %v3734 = vpack.c.b16 %v3492, %v3490
    %v3735 = vpack.c.b16 %v3493, %v3491
    %v3736 = vpack.c.b16 %v3496, %v3494
    %v3737 = vpack.c.b16 %v3497, %v3495
    %v3738 = vpack.c.b16 %v3500, %v3498
    %v3739 = vpack.c.b16 %v3501, %v3499
    %v3740 = vpack.c.b16 %v3504, %v3502
    %v3741 = vpack.c.b16 %v3505, %v3503
    %v3742 = vpack.c.b16 %v3508, %v3506
    %v3743 = vpack.c.b16 %v3509, %v3507
    %v3744 = vpack.c.b16 %v3512, %v3510
    %v3745 = vpack.c.b16 %v3513, %v3511
    %v3746 = vpack.c.b16 %v3516, %v3514
    %v3747 = vpack.c.b16 %v3517, %v3515
    %v3748 = vpack.c.b16 %v3520, %v3518
    %v3749 = vpack.c.b16 %v3521, %v3519
    %v3750 = vpack.c.b16 %v3524, %v3522
    %v3751 = vpack.c.b16 %v3525, %v3523
    %v3752 = vpack.c.b16 %v3528, %v3526
    %v3753 = vpack.c.b16 %v3529, %v3527
    %v3754 = vpack.c.b16 %v3532, %v3530
    %v3755 = vpack.c.b16 %v3533, %v3531
    %v3756 = vpack.c.b16 %v3536, %v3534
    %v3757 = vpack.c.b16 %v3537, %v3535
    %v3758 = vpack.c.b16 %v3540, %v3538
    %v3759 = vpack.c.b16 %v3541, %v3539
    %v3760 = vpack.c.b16 %v3544, %v3542
    %v3761 = vpack.c.b16 %v3545, %v3543
    %v3762 = vpack.c.b16 %v3548, %v3546
    %v3763 = vpack.c.b16 %v3549, %v3547
    %v3764 = vpack.c.b16 %v3552, %v3550
    %v3765 = vpack.c.b16 %v3553, %v3551
    %v3766 = vpack.c.b16 %v3556, %v3554
    %v3767 = vpack.c.b16 %v3557, %v3555
    %v3768 = vpack.c.b16 %v3560, %v3558
    %v3769 = vpack.c.b16 %v3561, %v3559
    %v3770 = vpack.c.b16 %v3564, %v3562
    %v3771 = vpack.c.b16 %v3565, %v3563
    %v3772 = vpack.c.b16 %v3568, %v3566
    %v3773 = vpack.c.b16 %v3569, %v3567
    %v3774 = vpack.c.b16 %v3572, %v3570
    %v3775 = vpack.c.b16 %v3573, %v3571
    %v3776 = vpack.c.b16 %v3576, %v3574
    %v3777 = vpack.c.b16 %v3577, %v3575
    %v3778 = vpack.c.b16 %v3580, %v3578
    %v3779 = vpack.c.b16 %v3581, %v3579
    %v3780 = vpack.c.b16 %v3584, %v3582
    %v3781 = vpack.c.b16 %v3585, %v3583
    %v3782 = vpack.c.b16 %v3588, %v3586
    %v3783 = vpack.c.b16 %v3589, %v3587
    %v3784 = vpack.c.b16 %v3592, %v3590
    %v3785 = vpack.c.b16 %v3593, %v3591
    %v3786 = vpack.c.b16 %v3596, %v3594
    %v3787 = vpack.c.b16 %v3597, %v3595
    %v3788 = vpack.c.b16 %v3600, %v3598
    %v3789 = vpack.c.b16 %v3601, %v3599
    %v3790 = vpack.c.b16 %v3604, %v3602
    %v3791 = vpack.c.b16 %v3605, %v3603
    %v3792 = vpack.c.b16 %v3608, %v3606
    %v3793 = vpack.c.b16 %v3609, %v3607
    %v3794 = vpack.c.b16 %v3612, %v3610
    %v3795 = vpack.c.b16 %v3613, %v3611
    %v3796 = vpack.c.b16 %v3616, %v3614
    %v3797 = vpack.c.b16 %v3617, %v3615
    %v3798 = vpack.c.b16 %v3620, %v3618
    %v3799 = vpack.c.b16 %v3621, %v3619
    %v3800 = vpack.c.b16 %v3624, %v3622
    %v3801 = vpack.c.b16 %v3625, %v3623
    %v3802 = vpack.c.b16 %v3628, %v3626
    %v3803 = vpack.c.b16 %v3629, %v3627
    %v3804 = vpack.c.b16 %v3632, %v3630
    %v3805 = vpack.c.b16 %v3633, %v3631
    %v3806 = vpack.c.b16 %v3636, %v3634
    %v3807 = vpack.c.b16 %v3637, %v3635
    %v3808 = vpack.c.b16 %v3640, %v3638
    %v3809 = vpack.c.b16 %v3641, %v3639
    %v3810 = vpack.c.b16 %v3644, %v3642
    %v3811 = vpack.c.b16 %v3645, %v3643
    %v3812 = vpack.c.b16 %v3648, %v3646
    %v3813 = vpack.c.b16 %v3649, %v3647
    %v3814 = vpack.c.b16 %v3652, %v3650
    %v3815 = vpack.c.b16 %v3653, %v3651
    %v3816 = vpack.c.b16 %v3656, %v3654
    %v3817 = vpack.c.b16 %v3657, %v3655
    %v3818 = vpack.c.b16 %v3660, %v3658
    %v3819 = vpack.c.b16 %v3661, %v3659
    %v3820 = vpack.c.b16 %v3664, %v3662
    %v3821 = vpack.c.b16 %v3665, %v3663
    %v3822 = vpack.c.b16 %v3668, %v3666
    %v3823 = vpack.c.b16 %v3669, %v3667
    %v3824 = vpack.c.b16 %v3672, %v3670
    %v3825 = vpack.c.b16 %v3673, %v3671
    %v3826 = vpack.c.b16 %v3676, %v3674
    %v3827 = vpack.c.b16 %v3677, %v3675
    %v3828 = vpack.c.b16 %v3680, %v3678
    %v3829 = vpack.c.b16 %v3681, %v3679
    %v3830 = vpack.c.b16 %v3684, %v3682
    %v3831 = vpack.c.b16 %v3685, %v3683
    %v3832 = vpack.c.b16 %v3688, %v3686
    %v3833 = vpack.c.b16 %v3689, %v3687
    %v3834 = vpack.c.b16 %v3692, %v3690
    %v3835 = vpack.c.b16 %v3693, %v3691
    %v3836 = vpack.c.b16 %v3696, %v3694
    %v3837 = vpack.c.b16 %v3697, %v3695
    %v3838 = vpack.c.b16 %v3700, %v3698
    %v3839 = vpack.c.b16 %v3701, %v3699
    %v3840 = vpack.c.b16 %v3704, %v3702
    %v3841 = vpack.c.b16 %v3705, %v3703
    %v3842 = vpack.c.b16 %v3708, %v3706
    %v3843 = vpack.c.b16 %v3709, %v3707
    %v3844 = vpack.c.b16 %v3712, %v3710
    %v3845 = vpack.c.b16 %v3713, %v3711
    %v3846 = vpack.c.b16 %v3716, %v3714
    %v3847 = vpack.c.b16 %v3717, %v3715
    %v3848 = vpack.c.b16 %v3720, %v3718
    %v3849 = vpack.c.b16 %v3721, %v3719
    %3978 = vmatprep.subr.bf16.mxu0 %v3737
    %3979 = vmatpush1.bf16.msra.mxu0 %v3736
    %3980 = vmatprep.subr.bf16.mxu0 %v3735
    %3981 = vmatpush1.bf16.msra.mxu0 %v3734
    %3982 = vmatprep.subr.bf16.mxu0 %v3733
    %3983 = vmatpush1.bf16.msra.mxu0 %v3732
    %3984 = vmatprep.subr.bf16.mxu0 %v3731
    %3985 = vmatpush1.bf16.msra.mxu0 %v3730
    %3986 = vmatprep.subr.bf16.mxu0 %v3729
    %3987 = vmatpush1.bf16.msra.mxu0 %v3728
    %3988 = vmatprep.subr.bf16.mxu0 %v3727
    %3989 = vmatpush1.bf16.msra.mxu0 %v3726
    %3990 = vmatprep.subr.bf16.mxu0 %v3725
    %3991 = vmatpush1.bf16.msra.mxu0 %v3724
    %3992 = vmatprep.subr.bf16.mxu0 %v3723
    %3993 = vmatpush1.bf16.msra.mxu0 %v3722
    %3994 = vmatprep.subr.bf16.mxu0 %v3753
    %3995 = vmatpush2.bf16.msra.mxu0 %v3752
    %3996 = vmatprep.subr.bf16.mxu0 %v3751
    %3997 = vmatpush2.bf16.msra.mxu0 %v3750
    %3998 = vmatprep.subr.bf16.mxu0 %v3749
    %3999 = vmatpush2.bf16.msra.mxu0 %v3748
    %4000 = vmatprep.subr.bf16.mxu0 %v3747
    %4001 = vmatpush2.bf16.msra.mxu0 %v3746
    %4002 = vmatprep.subr.bf16.mxu0 %v3745
    %4003 = vmatpush2.bf16.msra.mxu0 %v3744
    %4004 = vmatprep.subr.bf16.mxu0 %v3743
    %4005 = vmatpush2.bf16.msra.mxu0 %v3742
    %4006 = vmatprep.subr.bf16.mxu0 %v3741
    %4007 = vmatpush2.bf16.msra.mxu0 %v3740
    %4008 = vmatprep.subr.bf16.mxu0 %v3739
    %4009 = vmatpush2.bf16.msra.mxu0 %v3738
    %4010 = vmatprep.mubr.bf16.mxu0 %v3183
    %4011 = vmatmul.mubr.bf16.gmra.mxu0 %v3182
    %v4012 = vpop.f32.mrf.mxu0
    %v4013 = vadd.f32 %v3331, %v4012
    %v4014 = vpop.f32.mrf.mxu0
    %v4015 = vadd.f32 %v3335, %v4014
    %v4016 = vpop.f32.mrf.mxu0
    %v4017 = vadd.f32 %v3331, %v4016
    %v4018 = vpop.f32.mrf.mxu0
    %v4019 = vadd.f32 %v3335, %v4018
    %4020 = vmatprep.mubr.bf16.mxu0 %v3191
    %4021 = vmatmul.mubr.bf16.gmra.mxu0 %v3190
    %v4022 = vpop.f32.mrf.mxu0
    %v4023 = vadd.f32 %v3331, %v4022
    %v4024 = vpop.f32.mrf.mxu0
    %v4025 = vadd.f32 %v3335, %v4024
    %v4026 = vpop.f32.mrf.mxu0
    %v4027 = vadd.f32 %v3331, %v4026
    %v4028 = vpop.f32.mrf.mxu0
    %v4029 = vadd.f32 %v3335, %v4028
    %4030 = vdwg.mxu0
    %4031 = vmatprep.subr.bf16.mxu0 %v3769
    %4032 = vmatpush1.bf16.msra.mxu0 %v3768
    %4033 = vmatprep.subr.bf16.mxu0 %v3767
    %4034 = vmatpush1.bf16.msra.mxu0 %v3766
    %4035 = vmatprep.subr.bf16.mxu0 %v3765
    %4036 = vmatpush1.bf16.msra.mxu0 %v3764
    %4037 = vmatprep.subr.bf16.mxu0 %v3763
    %4038 = vmatpush1.bf16.msra.mxu0 %v3762
    %4039 = vmatprep.subr.bf16.mxu0 %v3761
    %4040 = vmatpush1.bf16.msra.mxu0 %v3760
    %4041 = vmatprep.subr.bf16.mxu0 %v3759
    %4042 = vmatpush1.bf16.msra.mxu0 %v3758
    %4043 = vmatprep.subr.bf16.mxu0 %v3757
    %4044 = vmatpush1.bf16.msra.mxu0 %v3756
    %4045 = vmatprep.subr.bf16.mxu0 %v3755
    %4046 = vmatpush1.bf16.msra.mxu0 %v3754
    %4047 = vmatprep.subr.bf16.mxu0 %v3785
    %4048 = vmatpush2.bf16.msra.mxu0 %v3784
    %4049 = vmatprep.subr.bf16.mxu0 %v3783
    %4050 = vmatpush2.bf16.msra.mxu0 %v3782
    %4051 = vmatprep.subr.bf16.mxu0 %v3781
    %4052 = vmatpush2.bf16.msra.mxu0 %v3780
    %4053 = vmatprep.subr.bf16.mxu0 %v3779
    %4054 = vmatpush2.bf16.msra.mxu0 %v3778
    %4055 = vmatprep.subr.bf16.mxu0 %v3777
    %4056 = vmatpush2.bf16.msra.mxu0 %v3776
    %4057 = vmatprep.subr.bf16.mxu0 %v3775
    %4058 = vmatpush2.bf16.msra.mxu0 %v3774
    %4059 = vmatprep.subr.bf16.mxu0 %v3773
    %4060 = vmatpush2.bf16.msra.mxu0 %v3772
    %4061 = vmatprep.subr.bf16.mxu0 %v3771
    %4062 = vmatpush2.bf16.msra.mxu0 %v3770
    %4063 = vmatprep.mubr.bf16.mxu0 %v3185
    %4064 = vmatmul.mubr.bf16.gmra.mxu0 %v3184
    %v4065 = vpop.f32.mrf.mxu0
    %v4066 = vadd.f32 %v4013, %v4065
    %v4067 = vpop.f32.mrf.mxu0
    %v4068 = vadd.f32 %v4015, %v4067
    %v4069 = vpop.f32.mrf.mxu0
    %v4070 = vadd.f32 %v4017, %v4069
    %v4071 = vpop.f32.mrf.mxu0
    %v4072 = vadd.f32 %v4019, %v4071
    %4073 = vmatprep.mubr.bf16.mxu0 %v3193
    %4074 = vmatmul.mubr.bf16.gmra.mxu0 %v3192
    %v4075 = vpop.f32.mrf.mxu0
    %v4076 = vadd.f32 %v4023, %v4075
    %v4077 = vpop.f32.mrf.mxu0
    %v4078 = vadd.f32 %v4025, %v4077
    %v4079 = vpop.f32.mrf.mxu0
    %v4080 = vadd.f32 %v4027, %v4079
    %v4081 = vpop.f32.mrf.mxu0
    %v4082 = vadd.f32 %v4029, %v4081
    %4083 = vdwg.mxu0
    %4084 = vmatprep.subr.bf16.mxu0 %v3801
    %4085 = vmatpush1.bf16.msra.mxu0 %v3800
    %4086 = vmatprep.subr.bf16.mxu0 %v3799
    %4087 = vmatpush1.bf16.msra.mxu0 %v3798
    %4088 = vmatprep.subr.bf16.mxu0 %v3797
    %4089 = vmatpush1.bf16.msra.mxu0 %v3796
    %4090 = vmatprep.subr.bf16.mxu0 %v3795
    %4091 = vmatpush1.bf16.msra.mxu0 %v3794
    %4092 = vmatprep.subr.bf16.mxu0 %v3793
    %4093 = vmatpush1.bf16.msra.mxu0 %v3792
    %4094 = vmatprep.subr.bf16.mxu0 %v3791
    %4095 = vmatpush1.bf16.msra.mxu0 %v3790
    %4096 = vmatprep.subr.bf16.mxu0 %v3789
    %4097 = vmatpush1.bf16.msra.mxu0 %v3788
    %4098 = vmatprep.subr.bf16.mxu0 %v3787
    %4099 = vmatpush1.bf16.msra.mxu0 %v3786
    %4100 = vmatprep.subr.bf16.mxu0 %v3817
    %4101 = vmatpush2.bf16.msra.mxu0 %v3816
    %4102 = vmatprep.subr.bf16.mxu0 %v3815
    %4103 = vmatpush2.bf16.msra.mxu0 %v3814
    %4104 = vmatprep.subr.bf16.mxu0 %v3813
    %4105 = vmatpush2.bf16.msra.mxu0 %v3812
    %4106 = vmatprep.subr.bf16.mxu0 %v3811
    %4107 = vmatpush2.bf16.msra.mxu0 %v3810
    %4108 = vmatprep.subr.bf16.mxu0 %v3809
    %4109 = vmatpush2.bf16.msra.mxu0 %v3808
    %4110 = vmatprep.subr.bf16.mxu0 %v3807
    %4111 = vmatpush2.bf16.msra.mxu0 %v3806
    %4112 = vmatprep.subr.bf16.mxu0 %v3805
    %4113 = vmatpush2.bf16.msra.mxu0 %v3804
    %4114 = vmatprep.subr.bf16.mxu0 %v3803
    %4115 = vmatpush2.bf16.msra.mxu0 %v3802
    %4116 = vmatprep.mubr.bf16.mxu0 %v3187
    %4117 = vmatmul.mubr.bf16.gmra.mxu0 %v3186
    %v4118 = vpop.f32.mrf.mxu0
    %v4119 = vadd.f32 %v4066, %v4118
    %v4120 = vpop.f32.mrf.mxu0
    %v4121 = vadd.f32 %v4068, %v4120
    %v4122 = vpop.f32.mrf.mxu0
    %v4123 = vadd.f32 %v4070, %v4122
    %v4124 = vpop.f32.mrf.mxu0
    %v4125 = vadd.f32 %v4072, %v4124
    %4126 = vmatprep.mubr.bf16.mxu0 %v3195
    %4127 = vmatmul.mubr.bf16.gmra.mxu0 %v3194
    %v4128 = vpop.f32.mrf.mxu0
    %v4129 = vadd.f32 %v4076, %v4128
    %v4130 = vpop.f32.mrf.mxu0
    %v4131 = vadd.f32 %v4078, %v4130
    %v4132 = vpop.f32.mrf.mxu0
    %v4133 = vadd.f32 %v4080, %v4132
    %v4134 = vpop.f32.mrf.mxu0
    %v4135 = vadd.f32 %v4082, %v4134
    %4136 = vdwg.mxu0
    %4137 = vmatprep.subr.bf16.mxu0 %v3833
    %4138 = vmatpush1.bf16.msra.mxu0 %v3832
    %4139 = vmatprep.subr.bf16.mxu0 %v3831
    %4140 = vmatpush1.bf16.msra.mxu0 %v3830
    %4141 = vmatprep.subr.bf16.mxu0 %v3829
    %4142 = vmatpush1.bf16.msra.mxu0 %v3828
    %4143 = vmatprep.subr.bf16.mxu0 %v3827
    %4144 = vmatpush1.bf16.msra.mxu0 %v3826
    %4145 = vmatprep.subr.bf16.mxu0 %v3825
    %4146 = vmatpush1.bf16.msra.mxu0 %v3824
    %4147 = vmatprep.subr.bf16.mxu0 %v3823
    %4148 = vmatpush1.bf16.msra.mxu0 %v3822
    %4149 = vmatprep.subr.bf16.mxu0 %v3821
    %4150 = vmatpush1.bf16.msra.mxu0 %v3820
    %4151 = vmatprep.subr.bf16.mxu0 %v3819
    %4152 = vmatpush1.bf16.msra.mxu0 %v3818
    %4153 = vmatprep.subr.bf16.mxu0 %v3849
    %4154 = vmatpush2.bf16.msra.mxu0 %v3848
    %4155 = vmatprep.subr.bf16.mxu0 %v3847
    %4156 = vmatpush2.bf16.msra.mxu0 %v3846
    %4157 = vmatprep.subr.bf16.mxu0 %v3845
    %4158 = vmatpush2.bf16.msra.mxu0 %v3844
    %4159 = vmatprep.subr.bf16.mxu0 %v3843
    %4160 = vmatpush2.bf16.msra.mxu0 %v3842
    %4161 = vmatprep.subr.bf16.mxu0 %v3841
    %4162 = vmatpush2.bf16.msra.mxu0 %v3840
    %4163 = vmatprep.subr.bf16.mxu0 %v3839
    %4164 = vmatpush2.bf16.msra.mxu0 %v3838
    %4165 = vmatprep.subr.bf16.mxu0 %v3837
    %4166 = vmatpush2.bf16.msra.mxu0 %v3836
    %4167 = vmatprep.subr.bf16.mxu0 %v3835
    %4168 = vmatpush2.bf16.msra.mxu0 %v3834
    %4169 = vmatprep.mubr.bf16.mxu0 %v3189
    %4170 = vmatmul.mubr.bf16.gmra.mxu0 %v3188
    %v4171 = vpop.f32.mrf.mxu0
    %v4172 = vadd.f32 %v4119, %v4171
    %v4173 = vpop.f32.mrf.mxu0
    %v4174 = vadd.f32 %v4121, %v4173
    %v4175 = vpop.f32.mrf.mxu0
    %v4176 = vadd.f32 %v4123, %v4175
    %v4177 = vpop.f32.mrf.mxu0
    %v4178 = vadd.f32 %v4125, %v4177
    %4179 = vmatprep.mubr.bf16.mxu0 %v3197
    %4180 = vmatmul.mubr.bf16.gmra.mxu0 %v3196
    %v4181 = vpop.f32.mrf.mxu0
    %v4182 = vadd.f32 %v4129, %v4181
    %v4183 = vpop.f32.mrf.mxu0
    %v4184 = vadd.f32 %v4131, %v4183
    %v4185 = vpop.f32.mrf.mxu0
    %v4186 = vadd.f32 %v4133, %v4185
    %v4187 = vpop.f32.mrf.mxu0
    %v4188 = vadd.f32 %v4135, %v4187
    %4189 = vdwg.mxu0
    %v4190 = vadd.f32 %v1756, %v4172
    %v4191 = vadd.f32 %v1757, %v4174
    %v4192 = vadd.f32 %v1758, %v4176
    %v4193 = vadd.f32 %v1759, %v4178
    %v4194 = vadd.f32 %v1760, %v4182
    %v4195 = vadd.f32 %v1761, %v4184
    %v4196 = vadd.f32 %v1762, %v4186
    %v4197 = vadd.f32 %v1763, %v4188
    %4198 = vst [vmem:[#allocation14] sm:$0xff] %v4190
    %4199 = vst [vmem:[#allocation14 + $0x8] sm:$0xff] %v4191
    %4200 = vst [vmem:[#allocation14 + $0x10] sm:$0xff] %v4192
    %4201 = vst [vmem:[#allocation14 + $0x18] sm:$0xff] %v4193
    %4202 = vst [vmem:[#allocation14 + $0x20] sm:$0xff] %v4194
    %4203 = vst [vmem:[#allocation14 + $0x28] sm:$0xff] %v4195
    %4204 = vst [vmem:[#allocation14 + $0x30] sm:$0xff] %v4196
    %4205 = vst [vmem:[#allocation14 + $0x38] sm:$0xff] %v4197
    // Predicated region
    $region74: #{tpu_custom_call.1} parent=1 // pred_check
      _
    $region75: #{tpu_custom_call.1} parent=1 // pred_check_branch
      %4207 = sbr.rel (0) target = $region77
    $region76: #{tpu_custom_call.1} parent=1 // pred_region
      %s4209 = ssub.s32 1024, 1024
      %4210 = vsyncadd [#allocation5], %s4209
      %s4211 = sshll.u32 [#allocation14], 4
      %s4212 = int_to_ptr.vmem [resolvable:$true] %s4211
      %4217 = dma.vmem_to_hbm [thread:$0]  %s4212, 1024, %s12, [#allocation5], 256, 256, 16
    $region77: #{tpu_custom_call.1} parent=1 // pred_fallthru
      _
    // Predicated region
    $region78: #{tpu_custom_call.1} parent=1 // pred_check
      _
    $region79: #{tpu_custom_call.1} parent=1 // pred_check_branch
      %4219 = sbr.rel (0) target = $region81
    $region80: #{tpu_custom_call.1} parent=1 // pred_region
      %4220 = dma.done [#allocation5], 1024
    $region81: #{tpu_custom_call.1} parent=1 // pred_fallthru
      _
    %4221 = vsyncpa [#allocation4], 1
    %4222 = vsyncpa [#allocation7], 1
    %4223 = vsyncpa [#allocation10], 1
    %4224 = vsyncpa [#allocation13], 1
    %4225 = vsyncpa [#allocation5], 1

</llo_original>
